<compile_context>
chip_gen: v7x
topology: tpu7x:2x2x1
jax: 0.10.0
libtpu: 0.0.40
codegen_flags: <defaults>
</compile_context>

<pallas_src>
import functools

import jax
import jax.numpy as jnp
import numpy as np
from jax import lax
from jax.experimental import pallas as pl
from jax.experimental.pallas import tpu as pltpu

LEAKY_SLOPE = 0.1
BN_EPS = 1e-5


def _round_up(x, m):
    return (x + m - 1) // m * m


# ---------------------------------------------------------------------------
# Kernel: one (batch, row-tile) grid step of the direct (tap-reduction) conv.
#   x_ref    : (F_rows, Cin)    bf16  whole flattened padded image (resident)
#   w_ref    : (k*k, Cin, Cout) bf16  BN-scale-folded weights, tap-major
#   shift_ref: (1, Cout)        f32   BN shift
#   o_ref    : (tm, Cout)       bf16  virtual output rows of this tile
#   acc_ref  : (tm, Cout)       f32   accumulator scratch
# ---------------------------------------------------------------------------
def _conv_tap_kernel(x_ref, w_ref, shift_ref, o_ref, acc_ref, *,
                     k, wp, stride, tm, n_rt, th):
    acc_ref[...] = jnp.zeros_like(acc_ref)

    if n_rt == 1:
        # Single row tile per image: every tap slice has a static start.
        for kh in range(k):
            for kw in range(k):
                d = kh * wp + kw
                idx = pl.ds(d, tm) if stride == 1 else pl.ds(d, tm, stride)
                a = x_ref[idx, :]
                acc_ref[...] += jnp.dot(a, w_ref[kh * k + kw],
                                        preferred_element_type=jnp.float32)
    else:
        # Multiple row tiles: one tile-aligned dynamic halo load, then static
        # per-tap sub-slices of the loaded value (avoids unaligned dynamic
        # sublane slicing of the packed bf16 ref).
        base = pl.multiple_of(pl.program_id(1) * (tm * stride), 16)
        xh = x_ref[pl.ds(base, th), :]
        for kh in range(k):
            for kw in range(k):
                d = kh * wp + kw
                a = lax.slice(xh, (d, 0),
                              (d + stride * (tm - 1) + 1, xh.shape[1]),
                              (stride, 1))
                acc_ref[...] += jnp.dot(a, w_ref[kh * k + kw],
                                        preferred_element_type=jnp.float32)

    y = acc_ref[...] + shift_ref[...]
    o_ref[...] = jnp.where(y >= 0, y, LEAKY_SLOPE * y).astype(o_ref.dtype)


# ---------------------------------------------------------------------------
# CNNBlock forward: conv(no bias) -> BatchNorm (folded, eval) -> LeakyReLU(0.1)
# ---------------------------------------------------------------------------
def cnn_block_forward(x_nchw, params, *, stride=1, padding=1):
    n, cin, h, w_sp = x_nchw.shape
    wts = params['w']                                  # (Cout, Cin, k, k) PyTorch
    cout, _, k, _ = wts.shape

    hp, wp = h + 2 * padding, w_sp + 2 * padding
    oh = (hp - k) // stride + 1
    ow = (wp - k) // stride + 1

    # ---- tiling over "virtual" output rows r = oh * Wp + ow ----------------
    r_valid = oh * wp                                  # valid virtual rows / image
    tm = min(512, _round_up(r_valid, 16))              # bf16 packed tiles -> x16
    n_rt = pl.cdiv(r_valid, tm)
    r_out = n_rt * tm

    d_max = (k - 1) * wp + (k - 1)                     # largest tap row shift
    th = _round_up(stride * (tm - 1) + d_max + 1, 16)  # halo rows per row tile
    rows_needed = (n_rt - 1) * tm * stride + th
    hp_ext = max(hp, pl.cdiv(rows_needed, wp))         # extra zero rows at bottom
    f_rows = hp_ext * wp

    # ---- operands (single pad; flatten is a free reshape) ------------------
    x = jnp.transpose(x_nchw, (0, 2, 3, 1)).astype(jnp.bfloat16)    # NHWC bf16
    xf = jnp.pad(x, ((0, 0),
                     (padding, padding + (hp_ext - hp)),
                     (padding, padding),
                     (0, 0))).reshape(n, f_rows, cin)

    # Fold BN: scale into the weight taps, shift added in-kernel.
    scale = params['gamma'] / jnp.sqrt(params['var'] + BN_EPS)
    shift = (params['beta'] - params['mean'] * scale).astype(jnp.float32)
    shift = shift.reshape(1, cout)
    w_taps = jnp.transpose(wts, (2, 3, 1, 0)).reshape(k * k, cin, cout)
    w_taps = (w_taps * scale[None, None, :]).astype(jnp.bfloat16)

    kernel = functools.partial(_conv_tap_kernel, k=k, wp=wp, stride=stride,
                               tm=tm, n_rt=n_rt, th=th)

    flops = 2 * n * oh * ow * k * k * cin * cout
    bytes_accessed = (xf.size * 2 + w_taps.size * 2 + shift.size * 4
                      + n * r_out * cout * 2)

    out = pl.pallas_call(
        kernel,
        out_shape=jax.ShapeDtypeStruct((n, r_out, cout), jnp.bfloat16),
        grid_spec=pltpu.PrefetchScalarGridSpec(
            num_scalar_prefetch=0,
            grid=(n, n_rt),
            in_specs=[
                # whole flattened image, resident across the row-tile axis
                pl.BlockSpec((None, f_rows, cin), lambda b, rt: (b, 0, 0)),
                pl.BlockSpec((k * k, cin, cout), lambda b, rt: (0, 0, 0)),
                pl.BlockSpec((1, cout), lambda b, rt: (0, 0)),
            ],
            out_specs=pl.BlockSpec((None, tm, cout), lambda b, rt: (b, rt, 0)),
            scratch_shapes=[pltpu.VMEM((tm, cout), jnp.float32)],
        ),
        compiler_params=pltpu.CompilerParams(
            dimension_semantics=("parallel", "parallel"),
            vmem_limit_bytes=48 * 1024 * 1024),
        cost_estimate=pl.CostEstimate(flops=flops, transcendentals=0,
                                      bytes_accessed=bytes_accessed),
    )(xf, w_taps, shift)

    # Drop padded virtual rows / columns; back to NCHW f32 (PyTorch layout).
    y = out[:, :oh * wp, :].reshape(n, oh, wp, cout)[:, :, :ow, :]
    # TODO(synk): stacked CNNBlocks should stay NHWC and only convert at model I/O.
    return jnp.transpose(y, (0, 3, 1, 2)).astype(jnp.float32)


# ---------------------------------------------------------------------------
# Pure-JAX reference (correctness check)
# ---------------------------------------------------------------------------
def reference_forward(x_nchw, params, *, stride=1, padding=1):
    x = x_nchw.astype(jnp.float32)
    y = lax.conv_general_dilated(
        x, params['w'], (stride, stride),
        [(padding, padding), (padding, padding)],
        dimension_numbers=('NCHW', 'OIHW', 'NCHW'))
    scale = params['gamma'] / jnp.sqrt(params['var'] + BN_EPS)
    shift = params['beta'] - params['mean'] * scale
    y = y * scale[None, :, None, None] + shift[None, :, None, None]
    return jnp.where(y >= 0, y, LEAKY_SLOPE * y)


if __name__ == "__main__":
    key = jax.random.PRNGKey(0)
    k_w, k_g, k_b, k_m, k_v, k_x = jax.random.split(key, 6)

    in_channels, out_channels, ksize, stride, padding = 4, 32, 3, 1, 1
    fan_in = in_channels * ksize * ksize
    params = dict(
        w=jax.random.normal(k_w, (out_channels, in_channels, ksize, ksize),
                            jnp.float32) * jnp.sqrt(2.0 / fan_in),
        gamma=1.0 + 0.1 * jax.random.normal(k_g, (out_channels,), jnp.float32),
        beta=0.1 * jax.random.normal(k_b, (out_channels,), jnp.float32),
        mean=0.1 * jax.random.normal(k_m, (out_channels,), jnp.float32),
        var=1.0 + 0.1 * jax.random.uniform(k_v, (out_channels,), jnp.float32),
    )
    x = jax.random.normal(k_x, (2, in_channels, 16, 16), jnp.float32)  # NCHW

    fwd = jax.jit(functools.partial(cnn_block_forward,
                                    stride=stride, padding=padding))
    out = jax.block_until_ready(fwd(x, params))
    assert out.shape == (2, out_channels, 16, 16), out.shape

    ref = reference_forward(x, params, stride=stride, padding=padding)
    np.testing.assert_allclose(np.asarray(out), np.asarray(ref),
                               rtol=3e-2, atol=3e-2)
    print("KERNEL_OK")
</pallas_src>

<mosaic_0001>
module attributes {stable_mosaic.version = 11 : i64} {
  func.func @_conv_tap_kernel(%arg0: i32, %arg1: i32, %arg2: memref<1x342x4xbf16, #tpu.memory_space<vmem>>, %arg3: memref<9x4x32xbf16, #tpu.memory_space<vmem>>, %arg4: memref<1x32xf32, #tpu.memory_space<vmem>>, %arg5: memref<1x288x32xbf16, #tpu.memory_space<vmem>>, %arg6: memref<288x32xf32, #tpu.memory_space<vmem>>) attributes {dimension_semantics = [#tpu.dimension_semantics<parallel>, #tpu.dimension_semantics<parallel>], iteration_bounds = array<i64: 2, 1>, scalar_prefetch = 0 : i64, scratch_operands = 1 : i64, tpu.core_type = #tpu.core_type<tc>, window_params = [{transform_indices = @transform_0, window_bounds = array<i64: 1, 342, 4>}, {pipeline_mode = #tpu.pipeline_mode<synchronous>, transform_indices = @transform_1, window_bounds = array<i64: 9, 4, 32>}, {pipeline_mode = #tpu.pipeline_mode<synchronous>, transform_indices = @transform_2, window_bounds = array<i64: 1, 32>}, {transform_indices = @transform_3, window_bounds = array<i64: 1, 288, 32>}]} {
    %cst = arith.constant 0.000000e+00 : f32
    %0 = vector.broadcast %cst : f32 to vector<288x32xf32>
    %c0 = arith.constant 0 : index
    %c0_0 = arith.constant 0 : index
    %1 = vector.load %arg6[%c0, %c0_0] : memref<288x32xf32, #tpu.memory_space<vmem>>, vector<288x32xf32>
    tpu.vector_store %arg6[%c0, %c0_0], %0 {strides = array<i32>} : memref<288x32xf32, #tpu.memory_space<vmem>>, vector<288x32xf32>,
    %c0_1 = arith.constant 0 : index
    %c0_2 = arith.constant 0 : index
    %c0_3 = arith.constant 0 : index
    %2 = vector.load %arg2[%c0_1, %c0_2, %c0_3] : memref<1x342x4xbf16, #tpu.memory_space<vmem>>, vector<1x288x4xbf16>
    %3 = vector.shape_cast %2 : vector<1x288x4xbf16> to vector<288x4xbf16>
    %c0_4 = arith.constant 0 : index
    %c0_5 = arith.constant 0 : index
    %4 = vector.load %arg6[%c0_4, %c0_5] : memref<288x32xf32, #tpu.memory_space<vmem>>, vector<288x32xf32>
    %c0_6 = arith.constant 0 : index
    %c0_7 = arith.constant 0 : index
    %c0_8 = arith.constant 0 : index
    %5 = vector.load %arg3[%c0_6, %c0_7, %c0_8] : memref<9x4x32xbf16, #tpu.memory_space<vmem>>, vector<1x4x32xbf16>
    %6 = vector.shape_cast %5 : vector<1x4x32xbf16> to vector<4x32xbf16>
    %cst_9 = arith.constant dense<0.000000e+00> : vector<288x32xf32>
    %7 = tpu.matmul %3, %6, %cst_9 {dimension_numbers = #tpu.dot_dimension_numbers<[1], [0], [0], [1], [0, 0, 1, 1], [], []>} : vector<288x4xbf16>, vector<4x32xbf16>, vector<288x32xf32> -> vector<288x32xf32>
    %8 = arith.addf %4, %7 : vector<288x32xf32>
    %c0_10 = arith.constant 0 : index
    %c0_11 = arith.constant 0 : index
    %9 = vector.load %arg6[%c0_10, %c0_11] : memref<288x32xf32, #tpu.memory_space<vmem>>, vector<288x32xf32>
    tpu.vector_store %arg6[%c0_10, %c0_11], %8 {strides = array<i32>} : memref<288x32xf32, #tpu.memory_space<vmem>>, vector<288x32xf32>,
    %c0_12 = arith.constant 0 : index
    %c1 = arith.constant 1 : index
    %c0_13 = arith.constant 0 : index
    %10 = vector.load %arg2[%c0_12, %c1, %c0_13] : memref<1x342x4xbf16, #tpu.memory_space<vmem>>, vector<1x288x4xbf16>
    %11 = vector.shape_cast %10 : vector<1x288x4xbf16> to vector<288x4xbf16>
    %c0_14 = arith.constant 0 : index
    %c0_15 = arith.constant 0 : index
    %12 = vector.load %arg6[%c0_14, %c0_15] : memref<288x32xf32, #tpu.memory_space<vmem>>, vector<288x32xf32>
    %c1_16 = arith.constant 1 : index
    %c0_17 = arith.constant 0 : index
    %c0_18 = arith.constant 0 : index
    %13 = vector.load %arg3[%c1_16, %c0_17, %c0_18] : memref<9x4x32xbf16, #tpu.memory_space<vmem>>, vector<1x4x32xbf16>
    %14 = vector.shape_cast %13 : vector<1x4x32xbf16> to vector<4x32xbf16>
    %cst_19 = arith.constant dense<0.000000e+00> : vector<288x32xf32>
    %15 = tpu.matmul %11, %14, %cst_19 {dimension_numbers = #tpu.dot_dimension_numbers<[1], [0], [0], [1], [0, 0, 1, 1], [], []>} : vector<288x4xbf16>, vector<4x32xbf16>, vector<288x32xf32> -> vector<288x32xf32>
    %16 = arith.addf %12, %15 : vector<288x32xf32>
    %c0_20 = arith.constant 0 : index
    %c0_21 = arith.constant 0 : index
    %17 = vector.load %arg6[%c0_20, %c0_21] : memref<288x32xf32, #tpu.memory_space<vmem>>, vector<288x32xf32>
    tpu.vector_store %arg6[%c0_20, %c0_21], %16 {strides = array<i32>} : memref<288x32xf32, #tpu.memory_space<vmem>>, vector<288x32xf32>,
    %c0_22 = arith.constant 0 : index
    %c2 = arith.constant 2 : index
    %c0_23 = arith.constant 0 : index
    %18 = vector.load %arg2[%c0_22, %c2, %c0_23] : memref<1x342x4xbf16, #tpu.memory_space<vmem>>, vector<1x288x4xbf16>
    %19 = vector.shape_cast %18 : vector<1x288x4xbf16> to vector<288x4xbf16>
    %c0_24 = arith.constant 0 : index
    %c0_25 = arith.constant 0 : index
    %20 = vector.load %arg6[%c0_24, %c0_25] : memref<288x32xf32, #tpu.memory_space<vmem>>, vector<288x32xf32>
    %c2_26 = arith.constant 2 : index
    %c0_27 = arith.constant 0 : index
    %c0_28 = arith.constant 0 : index
    %21 = vector.load %arg3[%c2_26, %c0_27, %c0_28] : memref<9x4x32xbf16, #tpu.memory_space<vmem>>, vector<1x4x32xbf16>
    %22 = vector.shape_cast %21 : vector<1x4x32xbf16> to vector<4x32xbf16>
    %cst_29 = arith.constant dense<0.000000e+00> : vector<288x32xf32>
    %23 = tpu.matmul %19, %22, %cst_29 {dimension_numbers = #tpu.dot_dimension_numbers<[1], [0], [0], [1], [0, 0, 1, 1], [], []>} : vector<288x4xbf16>, vector<4x32xbf16>, vector<288x32xf32> -> vector<288x32xf32>
    %24 = arith.addf %20, %23 : vector<288x32xf32>
    %c0_30 = arith.constant 0 : index
    %c0_31 = arith.constant 0 : index
    %25 = vector.load %arg6[%c0_30, %c0_31] : memref<288x32xf32, #tpu.memory_space<vmem>>, vector<288x32xf32>
    tpu.vector_store %arg6[%c0_30, %c0_31], %24 {strides = array<i32>} : memref<288x32xf32, #tpu.memory_space<vmem>>, vector<288x32xf32>,
    %c0_32 = arith.constant 0 : index
    %c18 = arith.constant 18 : index
    %c0_33 = arith.constant 0 : index
    %26 = vector.load %arg2[%c0_32, %c18, %c0_33] : memref<1x342x4xbf16, #tpu.memory_space<vmem>>, vector<1x288x4xbf16>
    %27 = vector.shape_cast %26 : vector<1x288x4xbf16> to vector<288x4xbf16>
    %c0_34 = arith.constant 0 : index
    %c0_35 = arith.constant 0 : index
    %28 = vector.load %arg6[%c0_34, %c0_35] : memref<288x32xf32, #tpu.memory_space<vmem>>, vector<288x32xf32>
    %c3 = arith.constant 3 : index
    %c0_36 = arith.constant 0 : index
    %c0_37 = arith.constant 0 : index
    %29 = vector.load %arg3[%c3, %c0_36, %c0_37] : memref<9x4x32xbf16, #tpu.memory_space<vmem>>, vector<1x4x32xbf16>
    %30 = vector.shape_cast %29 : vector<1x4x32xbf16> to vector<4x32xbf16>
    %cst_38 = arith.constant dense<0.000000e+00> : vector<288x32xf32>
    %31 = tpu.matmul %27, %30, %cst_38 {dimension_numbers = #tpu.dot_dimension_numbers<[1], [0], [0], [1], [0, 0, 1, 1], [], []>} : vector<288x4xbf16>, vector<4x32xbf16>, vector<288x32xf32> -> vector<288x32xf32>
    %32 = arith.addf %28, %31 : vector<288x32xf32>
    %c0_39 = arith.constant 0 : index
    %c0_40 = arith.constant 0 : index
    %33 = vector.load %arg6[%c0_39, %c0_40] : memref<288x32xf32, #tpu.memory_space<vmem>>, vector<288x32xf32>
    tpu.vector_store %arg6[%c0_39, %c0_40], %32 {strides = array<i32>} : memref<288x32xf32, #tpu.memory_space<vmem>>, vector<288x32xf32>,
    %c0_41 = arith.constant 0 : index
    %c19 = arith.constant 19 : index
    %c0_42 = arith.constant 0 : index
    %34 = vector.load %arg2[%c0_41, %c19, %c0_42] : memref<1x342x4xbf16, #tpu.memory_space<vmem>>, vector<1x288x4xbf16>
    %35 = vector.shape_cast %34 : vector<1x288x4xbf16> to vector<288x4xbf16>
    %c0_43 = arith.constant 0 : index
    %c0_44 = arith.constant 0 : index
    %36 = vector.load %arg6[%c0_43, %c0_44] : memref<288x32xf32, #tpu.memory_space<vmem>>, vector<288x32xf32>
    %c4 = arith.constant 4 : index
    %c0_45 = arith.constant 0 : index
    %c0_46 = arith.constant 0 : index
    %37 = vector.load %arg3[%c4, %c0_45, %c0_46] : memref<9x4x32xbf16, #tpu.memory_space<vmem>>, vector<1x4x32xbf16>
    %38 = vector.shape_cast %37 : vector<1x4x32xbf16> to vector<4x32xbf16>
    %cst_47 = arith.constant dense<0.000000e+00> : vector<288x32xf32>
    %39 = tpu.matmul %35, %38, %cst_47 {dimension_numbers = #tpu.dot_dimension_numbers<[1], [0], [0], [1], [0, 0, 1, 1], [], []>} : vector<288x4xbf16>, vector<4x32xbf16>, vector<288x32xf32> -> vector<288x32xf32>
    %40 = arith.addf %36, %39 : vector<288x32xf32>
    %c0_48 = arith.constant 0 : index
    %c0_49 = arith.constant 0 : index
    %41 = vector.load %arg6[%c0_48, %c0_49] : memref<288x32xf32, #tpu.memory_space<vmem>>, vector<288x32xf32>
    tpu.vector_store %arg6[%c0_48, %c0_49], %40 {strides = array<i32>} : memref<288x32xf32, #tpu.memory_space<vmem>>, vector<288x32xf32>,
    %c0_50 = arith.constant 0 : index
    %c20 = arith.constant 20 : index
    %c0_51 = arith.constant 0 : index
    %42 = vector.load %arg2[%c0_50, %c20, %c0_51] : memref<1x342x4xbf16, #tpu.memory_space<vmem>>, vector<1x288x4xbf16>
    %43 = vector.shape_cast %42 : vector<1x288x4xbf16> to vector<288x4xbf16>
    %c0_52 = arith.constant 0 : index
    %c0_53 = arith.constant 0 : index
    %44 = vector.load %arg6[%c0_52, %c0_53] : memref<288x32xf32, #tpu.memory_space<vmem>>, vector<288x32xf32>
    %c5 = arith.constant 5 : index
    %c0_54 = arith.constant 0 : index
    %c0_55 = arith.constant 0 : index
    %45 = vector.load %arg3[%c5, %c0_54, %c0_55] : memref<9x4x32xbf16, #tpu.memory_space<vmem>>, vector<1x4x32xbf16>
    %46 = vector.shape_cast %45 : vector<1x4x32xbf16> to vector<4x32xbf16>
    %cst_56 = arith.constant dense<0.000000e+00> : vector<288x32xf32>
    %47 = tpu.matmul %43, %46, %cst_56 {dimension_numbers = #tpu.dot_dimension_numbers<[1], [0], [0], [1], [0, 0, 1, 1], [], []>} : vector<288x4xbf16>, vector<4x32xbf16>, vector<288x32xf32> -> vector<288x32xf32>
    %48 = arith.addf %44, %47 : vector<288x32xf32>
    %c0_57 = arith.constant 0 : index
    %c0_58 = arith.constant 0 : index
    %49 = vector.load %arg6[%c0_57, %c0_58] : memref<288x32xf32, #tpu.memory_space<vmem>>, vector<288x32xf32>
    tpu.vector_store %arg6[%c0_57, %c0_58], %48 {strides = array<i32>} : memref<288x32xf32, #tpu.memory_space<vmem>>, vector<288x32xf32>,
    %c0_59 = arith.constant 0 : index
    %c36 = arith.constant 36 : index
    %c0_60 = arith.constant 0 : index
    %50 = vector.load %arg2[%c0_59, %c36, %c0_60] : memref<1x342x4xbf16, #tpu.memory_space<vmem>>, vector<1x288x4xbf16>
    %51 = vector.shape_cast %50 : vector<1x288x4xbf16> to vector<288x4xbf16>
    %c0_61 = arith.constant 0 : index
    %c0_62 = arith.constant 0 : index
    %52 = vector.load %arg6[%c0_61, %c0_62] : memref<288x32xf32, #tpu.memory_space<vmem>>, vector<288x32xf32>
    %c6 = arith.constant 6 : index
    %c0_63 = arith.constant 0 : index
    %c0_64 = arith.constant 0 : index
    %53 = vector.load %arg3[%c6, %c0_63, %c0_64] : memref<9x4x32xbf16, #tpu.memory_space<vmem>>, vector<1x4x32xbf16>
    %54 = vector.shape_cast %53 : vector<1x4x32xbf16> to vector<4x32xbf16>
    %cst_65 = arith.constant dense<0.000000e+00> : vector<288x32xf32>
    %55 = tpu.matmul %51, %54, %cst_65 {dimension_numbers = #tpu.dot_dimension_numbers<[1], [0], [0], [1], [0, 0, 1, 1], [], []>} : vector<288x4xbf16>, vector<4x32xbf16>, vector<288x32xf32> -> vector<288x32xf32>
    %56 = arith.addf %52, %55 : vector<288x32xf32>
    %c0_66 = arith.constant 0 : index
    %c0_67 = arith.constant 0 : index
    %57 = vector.load %arg6[%c0_66, %c0_67] : memref<288x32xf32, #tpu.memory_space<vmem>>, vector<288x32xf32>
    tpu.vector_store %arg6[%c0_66, %c0_67], %56 {strides = array<i32>} : memref<288x32xf32, #tpu.memory_space<vmem>>, vector<288x32xf32>,
    %c0_68 = arith.constant 0 : index
    %c37 = arith.constant 37 : index
    %c0_69 = arith.constant 0 : index
    %58 = vector.load %arg2[%c0_68, %c37, %c0_69] : memref<1x342x4xbf16, #tpu.memory_space<vmem>>, vector<1x288x4xbf16>
    %59 = vector.shape_cast %58 : vector<1x288x4xbf16> to vector<288x4xbf16>
    %c0_70 = arith.constant 0 : index
    %c0_71 = arith.constant 0 : index
    %60 = vector.load %arg6[%c0_70, %c0_71] : memref<288x32xf32, #tpu.memory_space<vmem>>, vector<288x32xf32>
    %c7 = arith.constant 7 : index
    %c0_72 = arith.constant 0 : index
    %c0_73 = arith.constant 0 : index
    %61 = vector.load %arg3[%c7, %c0_72, %c0_73] : memref<9x4x32xbf16, #tpu.memory_space<vmem>>, vector<1x4x32xbf16>
    %62 = vector.shape_cast %61 : vector<1x4x32xbf16> to vector<4x32xbf16>
    %cst_74 = arith.constant dense<0.000000e+00> : vector<288x32xf32>
    %63 = tpu.matmul %59, %62, %cst_74 {dimension_numbers = #tpu.dot_dimension_numbers<[1], [0], [0], [1], [0, 0, 1, 1], [], []>} : vector<288x4xbf16>, vector<4x32xbf16>, vector<288x32xf32> -> vector<288x32xf32>
    %64 = arith.addf %60, %63 : vector<288x32xf32>
    %c0_75 = arith.constant 0 : index
    %c0_76 = arith.constant 0 : index
    %65 = vector.load %arg6[%c0_75, %c0_76] : memref<288x32xf32, #tpu.memory_space<vmem>>, vector<288x32xf32>
    tpu.vector_store %arg6[%c0_75, %c0_76], %64 {strides = array<i32>} : memref<288x32xf32, #tpu.memory_space<vmem>>, vector<288x32xf32>,
    %c0_77 = arith.constant 0 : index
    %c38 = arith.constant 38 : index
    %c0_78 = arith.constant 0 : index
    %66 = vector.load %arg2[%c0_77, %c38, %c0_78] : memref<1x342x4xbf16, #tpu.memory_space<vmem>>, vector<1x288x4xbf16>
    %67 = vector.shape_cast %66 : vector<1x288x4xbf16> to vector<288x4xbf16>
    %c0_79 = arith.constant 0 : index
    %c0_80 = arith.constant 0 : index
    %68 = vector.load %arg6[%c0_79, %c0_80] : memref<288x32xf32, #tpu.memory_space<vmem>>, vector<288x32xf32>
    %c8 = arith.constant 8 : index
    %c0_81 = arith.constant 0 : index
    %c0_82 = arith.constant 0 : index
    %69 = vector.load %arg3[%c8, %c0_81, %c0_82] : memref<9x4x32xbf16, #tpu.memory_space<vmem>>, vector<1x4x32xbf16>
    %70 = vector.shape_cast %69 : vector<1x4x32xbf16> to vector<4x32xbf16>
    %cst_83 = arith.constant dense<0.000000e+00> : vector<288x32xf32>
    %71 = tpu.matmul %67, %70, %cst_83 {dimension_numbers = #tpu.dot_dimension_numbers<[1], [0], [0], [1], [0, 0, 1, 1], [], []>} : vector<288x4xbf16>, vector<4x32xbf16>, vector<288x32xf32> -> vector<288x32xf32>
    %72 = arith.addf %68, %71 : vector<288x32xf32>
    %c0_84 = arith.constant 0 : index
    %c0_85 = arith.constant 0 : index
    %73 = vector.load %arg6[%c0_84, %c0_85] : memref<288x32xf32, #tpu.memory_space<vmem>>, vector<288x32xf32>
    tpu.vector_store %arg6[%c0_84, %c0_85], %72 {strides = array<i32>} : memref<288x32xf32, #tpu.memory_space<vmem>>, vector<288x32xf32>,
    %c0_86 = arith.constant 0 : index
    %c0_87 = arith.constant 0 : index
    %74 = vector.load %arg6[%c0_86, %c0_87] : memref<288x32xf32, #tpu.memory_space<vmem>>, vector<288x32xf32>
    %c0_88 = arith.constant 0 : index
    %c0_89 = arith.constant 0 : index
    %75 = vector.load %arg4[%c0_88, %c0_89] : memref<1x32xf32, #tpu.memory_space<vmem>>, vector<1x32xf32>
    %76 = vector.broadcast %75 : vector<1x32xf32> to vector<288x32xf32>
    %77 = arith.addf %74, %76 : vector<288x32xf32>
    %cst_90 = arith.constant 0.000000e+00 : f32
    %78 = vector.broadcast %cst_90 : f32 to vector<288x32xf32>
    %79 = arith.cmpf oge, %77, %78 : vector<288x32xf32>
    %cst_91 = arith.constant 1.000000e-01 : f32
    %80 = vector.broadcast %cst_91 : f32 to vector<288x32xf32>
    %81 = arith.mulf %80, %77 : vector<288x32xf32>
    %82 = arith.select %79, %77, %81 : vector<288x32xi1>, vector<288x32xf32>
    %83 = arith.truncf %82 : vector<288x32xf32> to vector<288x32xbf16>
    %c0_92 = arith.constant 0 : index
    %c0_93 = arith.constant 0 : index
    %c0_94 = arith.constant 0 : index
    %84 = vector.load %arg5[%c0_92, %c0_93, %c0_94] : memref<1x288x32xbf16, #tpu.memory_space<vmem>>, vector<1x288x32xbf16>
    %85 = vector.shape_cast %84 : vector<1x288x32xbf16> to vector<288x32xbf16>
    %86 = vector.shape_cast %83 : vector<288x32xbf16> to vector<1x288x32xbf16>
    tpu.vector_store %arg5[%c0_92, %c0_93, %c0_94], %86 {strides = array<i32>} : memref<1x288x32xbf16, #tpu.memory_space<vmem>>, vector<1x288x32xbf16>,
    return
  }
  func.func @transform_0(%arg0: i32, %arg1: i32) -> (i32, i32, i32) {
    %c0_i32 = arith.constant 0 : i32
    %c0_i32_0 = arith.constant 0 : i32
    %c0_i32_1 = arith.constant 0 : i32
    return %arg0, %c0_i32, %c0_i32_0 : i32, i32, i32
  }
  func.func @transform_1(%arg0: i32, %arg1: i32) -> (i32, i32, i32) {
    %c0_i32 = arith.constant 0 : i32
    %c0_i32_0 = arith.constant 0 : i32
    %c0_i32_1 = arith.constant 0 : i32
    %c0_i32_2 = arith.constant 0 : i32
    return %c0_i32, %c0_i32_0, %c0_i32_1 : i32, i32, i32
  }
  func.func @transform_2(%arg0: i32, %arg1: i32) -> (i32, i32) {
    %c0_i32 = arith.constant 0 : i32
    %c0_i32_0 = arith.constant 0 : i32
    %c0_i32_1 = arith.constant 0 : i32
    return %c0_i32, %c0_i32_0 : i32, i32
  }
  func.func @transform_3(%arg0: i32, %arg1: i32) -> (i32, i32, i32) {
    %c0_i32 = arith.constant 0 : i32
    %c0_i32_0 = arith.constant 0 : i32
    return %arg0, %arg1, %c0_i32 : i32, i32, i32
  }
}

</mosaic_0001>

<llo_original>
// kernel: cnn_block_forward.1
$region0: #{cnn_block_forward.1}
  #allocation0 [shape = 'u32[]', space=smem, size = 0x4, offset = 0x4, fixed_abs, tag = 'smem constant byte address 0x4 - core index']
  #allocation1 [shape = 'u32[144,128]{1,0:T(1,128)}', space=vmem, size = 0x12000, scoped, tag = 'internal scratch']
  #allocation2 [shape = 'f32[288,32]{1,0:T(8,128)}', space=vmem, size = 0x24000, scoped, tag = 'scratch operand']
  %s0 = inlined_call_operand.vmem [shape: bf16[2,342,4], index: 0, kind: input, shape index: {}]
  %s1 = inlined_call_operand.vmem [shape: bf16[9,4,32], index: 1, kind: input, shape index: {}]
  %s2 = inlined_call_operand.vmem [shape: f32[1,32], index: 2, kind: input, shape index: {}]
  %s3 = inlined_call_operand.vmem [shape: bf16[2,288,32], index: 3, kind: output, shape index: {}]
  %s4 = sld [smem:[#allocation0]]
  $region45: #{cnn_block_forward.1} parent=0
    _
  %s6 = ssub.s32 1, %s4
  %s7 = scalar_select 0, %s6, %s4
  loop: start=0, step=1, limit=4
  $region2: #{cnn_block_forward.1} parent=0 // loop_pre_header
    _
  $region3: #{cnn_block_forward.1} parent=0 // loop_header
    %s9 = sphi 0, %s13
    %p10 = scmp.ge.s32.totalorder %s9, 4
    %s16 = sphi 0, %s28
    %s17 = sphi 0, %s24
    %s18 = sphi 0, %s16
    %s19 = sphi 0, %s17
    %s20 = sphi 0, %s18
    %s21 = sphi 0, %s19
    %s31 = sphi 0, %s33
    %s34 = sphi 0, %s31
    %s35 = sphi 0, %s34
    %s51 = sphi 0, %s35
    %s55 = sphi 0, %s55
    %s57 = sphi 0, %s55
    %s58 = sphi 0, %s57
    %s72 = sphi 0, %s58
    %s76 = sphi 0, %s76
    %s78 = sphi 0, %s76
    %s79 = sphi 0, %s78
    %s93 = sphi 0, %s79
    %s101 = sphi 0, %s103
    %s104 = sphi 0, %s101
    %s105 = sphi 0, %s104
    %s121 = sphi 0, %s105
  $region4: #{cnn_block_forward.1} parent=0 // loop_header_branch
    %12 = sbr.rel (%p10) target = $region8
  $region5: #{cnn_block_forward.1} parent=0 // loop_body
    %s14 = ssub.s32 %s9, 1
    %s15 = ssub.s32 %s9, 2
    %s22 = sadd.s32 1, %s17
    %p23 = scmp.ge.s32.totalorder %s22, 1
    %s24 = scalar_select %p23, 0, %s22
    %s25 = sadd.s32 1, %s16
    %s26 = scalar_select %p23, %s25, %s16
    %p27 = scmp.ge.s32.totalorder %s26, 2
    %s28 = scalar_select %p27, 0, %s26
    %s29 = ssub.s32 %s16, %s28
    %p30 = scmp.eq.s32.totalorder %s29, 0
    %s32 = sadd.s32 %s31, 1
    %s33 = scalar_select %p30, %s31, %s32
    %p36 = pneg %p30
    %p37 = scmp.eq.s32.totalorder %s9, 1
    %p38 = por %p36, %p37
    %p39 = scmp.ne.s32.totalorder %s31, %s34
    %p40 = scmp.eq.s32.totalorder %s9, 0
    %p41 = por %p39, %p40
    %p42 = scmp.ne.s32.totalorder %s31, %s34
    %p43 = scmp.eq.s32.totalorder %s14, 1
    %p44 = por %p42, %p43
    %p45 = scmp.ne.s32.totalorder %s34, %s35
    %p46 = scmp.eq.s32.totalorder %s14, 0
    %p47 = por %p45, %p46
    %p48 = scmp.ne.s32.totalorder %s34, %s35
    %p49 = scmp.eq.s32.totalorder %s15, 1
    %p50 = por %p48, %p49
    %p52 = scmp.ne.s32.totalorder %s35, %s51
    %p53 = scmp.eq.s32.totalorder %s15, 0
    %p54 = por %p52, %p53
    %s56 = sadd.s32 %s55, 1
    %p59 = scmp.eq.s32.totalorder %s9, 1
    %p60 = scmp.ne.s32.totalorder %s55, %s57
    %p61 = scmp.eq.s32.totalorder %s9, 0
    %p62 = por %p60, %p61
    %p63 = scmp.ne.s32.totalorder %s55, %s57
    %p64 = scmp.eq.s32.totalorder %s14, 1
    %p65 = por %p63, %p64
    %p66 = scmp.ne.s32.totalorder %s57, %s58
    %p67 = scmp.eq.s32.totalorder %s14, 0
    %p68 = por %p66, %p67
    %p69 = scmp.ne.s32.totalorder %s57, %s58
    %p70 = scmp.eq.s32.totalorder %s15, 1
    %p71 = por %p69, %p70
    %p73 = scmp.ne.s32.totalorder %s58, %s72
    %p74 = scmp.eq.s32.totalorder %s15, 0
    %p75 = por %p73, %p74
    %s77 = sadd.s32 %s76, 1
    %p80 = scmp.eq.s32.totalorder %s9, 1
    %p81 = scmp.ne.s32.totalorder %s76, %s78
    %p82 = scmp.eq.s32.totalorder %s9, 0
    %p83 = por %p81, %p82
    %p84 = scmp.ne.s32.totalorder %s76, %s78
    %p85 = scmp.eq.s32.totalorder %s14, 1
    %p86 = por %p84, %p85
    %p87 = scmp.ne.s32.totalorder %s78, %s79
    %p88 = scmp.eq.s32.totalorder %s14, 0
    %p89 = por %p87, %p88
    %p90 = scmp.ne.s32.totalorder %s78, %s79
    %p91 = scmp.eq.s32.totalorder %s15, 1
    %p92 = por %p90, %p91
    %p94 = scmp.ne.s32.totalorder %s79, %s93
    %p95 = scmp.eq.s32.totalorder %s15, 0
    %p96 = por %p94, %p95
    %s97 = ssub.s32 %s16, %s28
    %s98 = ssub.s32 %s17, %s24
    %s99 = sor.u32 %s97, %s98
    %p100 = scmp.eq.s32.totalorder %s99, 0
    %s102 = sadd.s32 %s101, 1
    %s103 = scalar_select %p100, %s101, %s102
    %p106 = pneg %p100
    %p107 = scmp.eq.s32.totalorder %s9, 1
    %p108 = por %p106, %p107
    %p109 = scmp.ne.s32.totalorder %s101, %s104
    %p110 = scmp.eq.s32.totalorder %s9, 0
    %p111 = por %p109, %p110
    %p112 = scmp.ne.s32.totalorder %s101, %s104
    %p113 = scmp.eq.s32.totalorder %s14, 1
    %p114 = por %p112, %p113
    %p115 = scmp.ne.s32.totalorder %s104, %s105
    %p116 = scmp.eq.s32.totalorder %s14, 0
    %p117 = por %p115, %p116
    %p118 = scmp.ne.s32.totalorder %s104, %s105
    %p119 = scmp.eq.s32.totalorder %s15, 1
    %p120 = por %p118, %p119
    %p122 = scmp.ne.s32.totalorder %s105, %s121
    %p123 = scmp.eq.s32.totalorder %s15, 0
    %p124 = por %p122, %p123
    %p125 = scmp.le.s32.totalorder 1, %s9
    %p126 = scmp.lt.s32.totalorder %s9, 3
    %p127 = pnand %p125, %p126
    %p128 = pneg %p127
    // Predicated region
    $region9: #{cnn_block_forward.1} parent=5 // pred_check
      _
    $region10: #{cnn_block_forward.1} parent=5 // pred_check_branch
      %130 = sbr.rel (%p127) target = $region12
    $region11: #{cnn_block_forward.1} parent=5 // pred_region
      %s131 = ssub.s32 %s9, 1
      // Predicated region
      $region13: #{cnn_block_forward.1} parent=11 // pred_check
        %p132 = pneg %p68
      $region14: #{cnn_block_forward.1} parent=11 // pred_check_branch
        %134 = sbr.rel (%p132) target = $region16
      $region15: #{cnn_block_forward.1} parent=11 // pred_region
        _
      $region16: #{cnn_block_forward.1} parent=11 // pred_fallthru
        _
      // Predicated region
      $region17: #{cnn_block_forward.1} parent=11 // pred_check
        %p135 = pneg %p89
      $region18: #{cnn_block_forward.1} parent=11 // pred_check_branch
        %137 = sbr.rel (%p135) target = $region20
      $region19: #{cnn_block_forward.1} parent=11 // pred_region
        _
      $region20: #{cnn_block_forward.1} parent=11 // pred_fallthru
        _
    $region12: #{cnn_block_forward.1} parent=5 // pred_fallthru
      _
    %p138 = scmp.lt.s32.totalorder %s9, 2
    // Predicated region
    $region21: #{cnn_block_forward.1} parent=5 // pred_check
      %p139 = pneg %p138
    $region22: #{cnn_block_forward.1} parent=5 // pred_check_branch
      %141 = sbr.rel (%p139) target = $region24
    $region23: #{cnn_block_forward.1} parent=5 // pred_region
      // Predicated region
      $region25: #{cnn_block_forward.1} parent=23 // pred_check
        %p142 = pneg %p41
      $region26: #{cnn_block_forward.1} parent=23 // pred_check_branch
        %144 = sbr.rel (%p142) target = $region28
      $region27: #{cnn_block_forward.1} parent=23 // pred_region
        %p145 = scmp.lt.s32.totalorder %s16, 1
        %s146 = scalar_select %p145, %s16, 1
        %s147 = smul.addr %s146, 43
        %s148 = smul.addr %s147, 4
        %s149 = scalar_lea.vmem %s0, %s148
      $region28: #{cnn_block_forward.1} parent=23 // pred_fallthru
        _
    $region24: #{cnn_block_forward.1} parent=5 // pred_fallthru
      _
    %p150 = scmp.le.s32.totalorder 1, %s9
    %p151 = scmp.lt.s32.totalorder %s9, 3
    %p152 = pnand %p150, %p151
    %p153 = pneg %p152
    // Predicated region
    $region29: #{cnn_block_forward.1} parent=5 // pred_check
      _
    $region30: #{cnn_block_forward.1} parent=5 // pred_check_branch
      %155 = sbr.rel (%p152) target = $region32
    $region31: #{cnn_block_forward.1} parent=5 // pred_region
      %s156 = ssub.s32 %s9, 1
      %p157 = scmp.lt.s32.totalorder %s18, 1
      %s158 = scalar_select %p157, %s18, 1
      %s159 = smul.addr %s158, 43
      %s160 = smul.addr %s159, 4
      %s161 = scalar_lea.vmem %s0, %s160
      %p162 = pneg %p47
      %p163 = pneg %p44
      %p164 = pneg %p68
      %p165 = pneg %p65
      %p166 = pneg %p89
      %p167 = pneg %p86
      %p168 = pneg %p117
      %p169 = pneg %p114
      %s170 = smul.u32 36, %s19
      %p171 = scmp.lt.s32.totalorder %s18, 1
      %s172 = scalar_select %p171, %s18, 1
      %p173 = scmp.lt.s32.totalorder %s170, 35
      %s174 = scalar_select %p173, %s170, 35
      %s175 = smul.addr %s172, 36
      %s176 = sadd.s32 %s174, %s175
      %s177 = smul.addr %s176, 4
      %s178 = scalar_lea.vmem %s3, %s177
      %p179 = scmp.lt.s32.totalorder %s18, 1
      %s180 = scalar_select %p179, %s18, 1
      %s181 = smul.addr %s180, 43
      %s182 = smul.addr %s181, 4
      %s183 = scalar_lea.vmem %s0, %s182
      %s184 = smul.u32 36, %s19
      %p185 = scmp.lt.s32.totalorder %s18, 1
      %s186 = scalar_select %p185, %s18, 1
      %p187 = scmp.lt.s32.totalorder %s184, 35
      %s188 = scalar_select %p187, %s184, 35
      %s189 = smul.addr %s186, 36
      %s190 = sadd.s32 %s188, %s189
      %s191 = smul.addr %s190, 4
      %s192 = scalar_lea.vmem %s3, %s191
      %s193 = smul.u32 36, %s19
      %vm195 = vcmask 261120
      %196 = vst.msk [vmem:[#allocation2] sm:$0xff] %vm195, 0.0
      %197 = vst.msk [vmem:[#allocation2 + $0x8] sm:$0xff] %vm195, 0.0
      %198 = vst.msk [vmem:[#allocation2 + $0x10] sm:$0xff] %vm195, 0.0
      %199 = vst.msk [vmem:[#allocation2 + $0x18] sm:$0xff] %vm195, 0.0
      %200 = vst.msk [vmem:[#allocation2 + $0x20] sm:$0xff] %vm195, 0.0
      %201 = vst.msk [vmem:[#allocation2 + $0x28] sm:$0xff] %vm195, 0.0
      %202 = vst.msk [vmem:[#allocation2 + $0x30] sm:$0xff] %vm195, 0.0
      %203 = vst.msk [vmem:[#allocation2 + $0x38] sm:$0xff] %vm195, 0.0
      %204 = vst.msk [vmem:[#allocation2 + $0x40] sm:$0xff] %vm195, 0.0
      %205 = vst.msk [vmem:[#allocation2 + $0x48] sm:$0xff] %vm195, 0.0
      %206 = vst.msk [vmem:[#allocation2 + $0x50] sm:$0xff] %vm195, 0.0
      %207 = vst.msk [vmem:[#allocation2 + $0x58] sm:$0xff] %vm195, 0.0
      %208 = vst.msk [vmem:[#allocation2 + $0x60] sm:$0xff] %vm195, 0.0
      %209 = vst.msk [vmem:[#allocation2 + $0x68] sm:$0xff] %vm195, 0.0
      %210 = vst.msk [vmem:[#allocation2 + $0x70] sm:$0xff] %vm195, 0.0
      %211 = vst.msk [vmem:[#allocation2 + $0x78] sm:$0xff] %vm195, 0.0
      %212 = vst.msk [vmem:[#allocation2 + $0x80] sm:$0xff] %vm195, 0.0
      %213 = vst.msk [vmem:[#allocation2 + $0x88] sm:$0xff] %vm195, 0.0
      %214 = vst.msk [vmem:[#allocation2 + $0x90] sm:$0xff] %vm195, 0.0
      %215 = vst.msk [vmem:[#allocation2 + $0x98] sm:$0xff] %vm195, 0.0
      %216 = vst.msk [vmem:[#allocation2 + $0xa0] sm:$0xff] %vm195, 0.0
      %217 = vst.msk [vmem:[#allocation2 + $0xa8] sm:$0xff] %vm195, 0.0
      %218 = vst.msk [vmem:[#allocation2 + $0xb0] sm:$0xff] %vm195, 0.0
      %219 = vst.msk [vmem:[#allocation2 + $0xb8] sm:$0xff] %vm195, 0.0
      %220 = vst.msk [vmem:[#allocation2 + $0xc0] sm:$0xff] %vm195, 0.0
      %221 = vst.msk [vmem:[#allocation2 + $0xc8] sm:$0xff] %vm195, 0.0
      %222 = vst.msk [vmem:[#allocation2 + $0xd0] sm:$0xff] %vm195, 0.0
      %223 = vst.msk [vmem:[#allocation2 + $0xd8] sm:$0xff] %vm195, 0.0
      %224 = vst.msk [vmem:[#allocation2 + $0xe0] sm:$0xff] %vm195, 0.0
      %225 = vst.msk [vmem:[#allocation2 + $0xe8] sm:$0xff] %vm195, 0.0
      %226 = vst.msk [vmem:[#allocation2 + $0xf0] sm:$0xff] %vm195, 0.0
      %227 = vst.msk [vmem:[#allocation2 + $0xf8] sm:$0xff] %vm195, 0.0
      %228 = vst.msk [vmem:[#allocation2 + $0x100] sm:$0xff] %vm195, 0.0
      %229 = vst.msk [vmem:[#allocation2 + $0x108] sm:$0xff] %vm195, 0.0
      %230 = vst.msk [vmem:[#allocation2 + $0x110] sm:$0xff] %vm195, 0.0
      %231 = vst.msk [vmem:[#allocation2 + $0x118] sm:$0xff] %vm195, 0.0
      %v232 = vld [vmem:[%s183] sm:$0xf]
      %v233 = vld [vmem:[%s183 + $0x4] sm:$0xf]
      %v234 = vld [vmem:[%s183 + $0x8] sm:$0xf]
      %v235 = vld [vmem:[%s183 + $0xc] sm:$0xf]
      %v236 = vld [vmem:[%s183 + $0x10] sm:$0xf]
      %v237 = vld [vmem:[%s183 + $0x14] sm:$0xf]
      %v238 = vld [vmem:[%s183 + $0x18] sm:$0xf]
      %v239 = vld [vmem:[%s183 + $0x1c] sm:$0xf]
      %v240 = vld [vmem:[%s183 + $0x20] sm:$0xf]
      %v241 = vld [vmem:[%s183 + $0x24] sm:$0xf]
      %v242 = vld [vmem:[%s183 + $0x28] sm:$0xf]
      %v243 = vld [vmem:[%s183 + $0x2c] sm:$0xf]
      %v244 = vld [vmem:[%s183 + $0x30] sm:$0xf]
      %v245 = vld [vmem:[%s183 + $0x34] sm:$0xf]
      %v246 = vld [vmem:[%s183 + $0x38] sm:$0xf]
      %v247 = vld [vmem:[%s183 + $0x3c] sm:$0xf]
      %v248 = vld [vmem:[%s183 + $0x40] sm:$0xf]
      %v249 = vld [vmem:[%s183 + $0x44] sm:$0xf]
      %v250 = vld [vmem:[%s183 + $0x48] sm:$0xf]
      %v251 = vld [vmem:[%s183 + $0x4c] sm:$0xf]
      %v252 = vld [vmem:[%s183 + $0x50] sm:$0xf]
      %v253 = vld [vmem:[%s183 + $0x54] sm:$0xf]
      %v254 = vld [vmem:[%s183 + $0x58] sm:$0xf]
      %v255 = vld [vmem:[%s183 + $0x5c] sm:$0xf]
      %v256 = vld [vmem:[%s183 + $0x60] sm:$0xf]
      %v257 = vld [vmem:[%s183 + $0x64] sm:$0xf]
      %v258 = vld [vmem:[%s183 + $0x68] sm:$0xf]
      %v259 = vld [vmem:[%s183 + $0x6c] sm:$0xf]
      %v260 = vld [vmem:[%s183 + $0x70] sm:$0xf]
      %v261 = vld [vmem:[%s183 + $0x74] sm:$0xf]
      %v262 = vld [vmem:[%s183 + $0x78] sm:$0xf]
      %v263 = vld [vmem:[%s183 + $0x7c] sm:$0xf]
      %v264 = vld [vmem:[%s183 + $0x80] sm:$0xf]
      %v265 = vld [vmem:[%s183 + $0x84] sm:$0xf]
      %v266 = vld [vmem:[%s183 + $0x88] sm:$0xf]
      %v267 = vld [vmem:[%s183 + $0x8c] sm:$0xf]
      %v268 = vld [vmem:[#allocation2] sm:$0xff]
      %v269 = vld [vmem:[#allocation2 + $0x8] sm:$0xff]
      %v270 = vld [vmem:[#allocation2 + $0x10] sm:$0xff]
      %v271 = vld [vmem:[#allocation2 + $0x18] sm:$0xff]
      %v272 = vld [vmem:[#allocation2 + $0x20] sm:$0xff]
      %v273 = vld [vmem:[#allocation2 + $0x28] sm:$0xff]
      %v274 = vld [vmem:[#allocation2 + $0x30] sm:$0xff]
      %v275 = vld [vmem:[#allocation2 + $0x38] sm:$0xff]
      %v276 = vld [vmem:[#allocation2 + $0x40] sm:$0xff]
      %v277 = vld [vmem:[#allocation2 + $0x48] sm:$0xff]
      %v278 = vld [vmem:[#allocation2 + $0x50] sm:$0xff]
      %v279 = vld [vmem:[#allocation2 + $0x58] sm:$0xff]
      %v280 = vld [vmem:[#allocation2 + $0x60] sm:$0xff]
      %v281 = vld [vmem:[#allocation2 + $0x68] sm:$0xff]
      %v282 = vld [vmem:[#allocation2 + $0x70] sm:$0xff]
      %v283 = vld [vmem:[#allocation2 + $0x78] sm:$0xff]
      %v284 = vld [vmem:[#allocation2 + $0x80] sm:$0xff]
      %v285 = vld [vmem:[#allocation2 + $0x88] sm:$0xff]
      %v286 = vld [vmem:[#allocation2 + $0x90] sm:$0xff]
      %v287 = vld [vmem:[#allocation2 + $0x98] sm:$0xff]
      %v288 = vld [vmem:[#allocation2 + $0xa0] sm:$0xff]
      %v289 = vld [vmem:[#allocation2 + $0xa8] sm:$0xff]
      %v290 = vld [vmem:[#allocation2 + $0xb0] sm:$0xff]
      %v291 = vld [vmem:[#allocation2 + $0xb8] sm:$0xff]
      %v292 = vld [vmem:[#allocation2 + $0xc0] sm:$0xff]
      %v293 = vld [vmem:[#allocation2 + $0xc8] sm:$0xff]
      %v294 = vld [vmem:[#allocation2 + $0xd0] sm:$0xff]
      %v295 = vld [vmem:[#allocation2 + $0xd8] sm:$0xff]
      %v296 = vld [vmem:[#allocation2 + $0xe0] sm:$0xff]
      %v297 = vld [vmem:[#allocation2 + $0xe8] sm:$0xff]
      %v298 = vld [vmem:[#allocation2 + $0xf0] sm:$0xff]
      %v299 = vld [vmem:[#allocation2 + $0xf8] sm:$0xff]
      %v300 = vld [vmem:[#allocation2 + $0x100] sm:$0xff]
      %v301 = vld [vmem:[#allocation2 + $0x108] sm:$0xff]
      %v302 = vld [vmem:[#allocation2 + $0x110] sm:$0xff]
      %v303 = vld [vmem:[#allocation2 + $0x118] sm:$0xff]
      %v304 = vld [vmem:[%s1] sm:$0x3]
      %v341 = vunpack.c.l.b16 %v232
      %v342 = vunpack.c.l.b16 %v233
      %v343 = vunpack.c.l.b16 %v234
      %v344 = vunpack.c.l.b16 %v235
      %v345 = vunpack.c.l.b16 %v236
      %v346 = vunpack.c.l.b16 %v237
      %v347 = vunpack.c.l.b16 %v238
      %v348 = vunpack.c.l.b16 %v239
      %v349 = vunpack.c.l.b16 %v240
      %v350 = vunpack.c.l.b16 %v241
      %v351 = vunpack.c.l.b16 %v242
      %v352 = vunpack.c.l.b16 %v243
      %v353 = vunpack.c.l.b16 %v244
      %v354 = vunpack.c.l.b16 %v245
      %v355 = vunpack.c.l.b16 %v246
      %v356 = vunpack.c.l.b16 %v247
      %v357 = vunpack.c.l.b16 %v248
      %v358 = vunpack.c.l.b16 %v249
      %v359 = vunpack.c.l.b16 %v250
      %v360 = vunpack.c.l.b16 %v251
      %v361 = vunpack.c.l.b16 %v252
      %v362 = vunpack.c.l.b16 %v253
      %v363 = vunpack.c.l.b16 %v254
      %v364 = vunpack.c.l.b16 %v255
      %v365 = vunpack.c.l.b16 %v256
      %v366 = vunpack.c.l.b16 %v257
      %v367 = vunpack.c.l.b16 %v258
      %v368 = vunpack.c.l.b16 %v259
      %v369 = vunpack.c.l.b16 %v260
      %v370 = vunpack.c.l.b16 %v261
      %v371 = vunpack.c.l.b16 %v262
      %v372 = vunpack.c.l.b16 %v263
      %v373 = vunpack.c.l.b16 %v264
      %v374 = vunpack.c.l.b16 %v265
      %v375 = vunpack.c.l.b16 %v266
      %v376 = vunpack.c.l.b16 %v267
      %v377 = vpack.c.b16 %v342, %v341
      %v378 = vpack.c.b16 %v344, %v343
      %v379 = vpack.c.b16 %v346, %v345
      %v380 = vpack.c.b16 %v348, %v347
      %v381 = vpack.c.b16 %v350, %v349
      %v382 = vpack.c.b16 %v352, %v351
      %v383 = vpack.c.b16 %v354, %v353
      %v384 = vpack.c.b16 %v356, %v355
      %v385 = vpack.c.b16 %v358, %v357
      %v386 = vpack.c.b16 %v360, %v359
      %v387 = vpack.c.b16 %v362, %v361
      %v388 = vpack.c.b16 %v364, %v363
      %v389 = vpack.c.b16 %v366, %v365
      %v390 = vpack.c.b16 %v368, %v367
      %v391 = vpack.c.b16 %v370, %v369
      %v392 = vpack.c.b16 %v372, %v371
      %v393 = vpack.c.b16 %v374, %v373
      %v394 = vpack.c.b16 %v376, %v375
      %vm395 = vcmask 31744
      %v397 = vsel %vm395, %v377, 0
      %v400 = vsel %vm395, %v378, 0
      %v403 = vsel %vm395, %v379, 0
      %v406 = vsel %vm395, %v380, 0
      %v409 = vsel %vm395, %v381, 0
      %v412 = vsel %vm395, %v382, 0
      %v415 = vsel %vm395, %v383, 0
      %v418 = vsel %vm395, %v384, 0
      %v421 = vsel %vm395, %v385, 0
      %v424 = vsel %vm395, %v386, 0
      %v427 = vsel %vm395, %v387, 0
      %v430 = vsel %vm395, %v388, 0
      %v433 = vsel %vm395, %v389, 0
      %v436 = vsel %vm395, %v390, 0
      %v439 = vsel %vm395, %v391, 0
      %v442 = vsel %vm395, %v392, 0
      %v445 = vsel %vm395, %v393, 0
      %v448 = vsel %vm395, %v394, 0
      %vm450 = vcmask 1041408
      %v452 = vsel %vm450, %v304, 0
      %454 = vmatprep.subr.bf16.mxu0 0
      %455 = vmatpush1.bf16.msra.mxu0 %v452
      %456 = vmatprep.subr.bf16.mxu0 0
      %457 = vmatpush1.bf16.msra.mxu0 0
      %458 = vmatprep.subr.bf16.mxu0 0
      %459 = vmatpush1.bf16.msra.mxu0 0
      %460 = vmatprep.subr.bf16.mxu0 0
      %461 = vmatpush1.bf16.msra.mxu0 0
      %462 = vmatprep.subr.bf16.mxu0 0
      %463 = vmatpush1.bf16.msra.mxu0 0
      %464 = vmatprep.subr.bf16.mxu0 0
      %465 = vmatpush1.bf16.msra.mxu0 0
      %466 = vmatprep.subr.bf16.mxu0 0
      %467 = vmatpush1.bf16.msra.mxu0 0
      %468 = vmatprep.subr.bf16.mxu0 0
      %469 = vmatpush1.bf16.msra.mxu0 0
      %470 = vmatprep.subr.bf16.mxu0 0
      %471 = vmatpush1.bf16.msra.mxu0 0
      %472 = vmatprep.subr.bf16.mxu0 0
      %473 = vmatpush1.bf16.msra.mxu0 0
      %474 = vmatprep.subr.bf16.mxu0 0
      %475 = vmatpush1.bf16.msra.mxu0 0
      %476 = vmatprep.subr.bf16.mxu0 0
      %477 = vmatpush1.bf16.msra.mxu0 0
      %478 = vmatprep.subr.bf16.mxu0 0
      %479 = vmatpush1.bf16.msra.mxu0 0
      %480 = vmatprep.subr.bf16.mxu0 0
      %481 = vmatpush1.bf16.msra.mxu0 0
      %482 = vmatprep.subr.bf16.mxu0 0
      %483 = vmatpush1.bf16.msra.mxu0 0
      %484 = vmatprep.subr.bf16.mxu0 0
      %485 = vmatpush1.bf16.msra.mxu0 0
      %486 = vmatprep.mubr.bf16.mxu0 0
      %487 = vmatmul.mubr.bf16.gmra.mrb[0].mxu0 %v397
      %v488 = vpop.f32.mrb[0].mxu0
      %v489 = vadd.f32 0.0, %v488
      %v490 = vpop.f32.mrb[0].mxu0
      %v491 = vpop.f32.mrb[0].mxu0
      %v492 = vadd.f32 0.0, %v491
      %v493 = vpop.f32.mrb[0].mxu0
      %494 = vmatprep.mubr.bf16.mxu0 0
      %495 = vmatmul.mubr.bf16.gmra.mrb[0].mxu0 %v400
      %v496 = vpop.f32.mrb[0].mxu0
      %v497 = vadd.f32 0.0, %v496
      %v498 = vpop.f32.mrb[0].mxu0
      %v499 = vpop.f32.mrb[0].mxu0
      %v500 = vadd.f32 0.0, %v499
      %v501 = vpop.f32.mrb[0].mxu0
      %502 = vmatprep.mubr.bf16.mxu0 0
      %503 = vmatmul.mubr.bf16.gmra.mrb[0].mxu0 %v403
      %v504 = vpop.f32.mrb[0].mxu0
      %v505 = vadd.f32 0.0, %v504
      %v506 = vpop.f32.mrb[0].mxu0
      %v507 = vpop.f32.mrb[0].mxu0
      %v508 = vadd.f32 0.0, %v507
      %v509 = vpop.f32.mrb[0].mxu0
      %510 = vmatprep.mubr.bf16.mxu0 0
      %511 = vmatmul.mubr.bf16.gmra.mrb[0].mxu0 %v406
      %v512 = vpop.f32.mrb[0].mxu0
      %v513 = vadd.f32 0.0, %v512
      %v514 = vpop.f32.mrb[0].mxu0
      %v515 = vpop.f32.mrb[0].mxu0
      %v516 = vadd.f32 0.0, %v515
      %v517 = vpop.f32.mrb[0].mxu0
      %518 = vmatprep.mubr.bf16.mxu0 0
      %519 = vmatmul.mubr.bf16.gmra.mrb[0].mxu0 %v409
      %v520 = vpop.f32.mrb[0].mxu0
      %v521 = vadd.f32 0.0, %v520
      %v522 = vpop.f32.mrb[0].mxu0
      %v523 = vpop.f32.mrb[0].mxu0
      %v524 = vadd.f32 0.0, %v523
      %v525 = vpop.f32.mrb[0].mxu0
      %526 = vmatprep.mubr.bf16.mxu0 0
      %527 = vmatmul.mubr.bf16.gmra.mrb[0].mxu0 %v412
      %v528 = vpop.f32.mrb[0].mxu0
      %v529 = vadd.f32 0.0, %v528
      %v530 = vpop.f32.mrb[0].mxu0
      %v531 = vpop.f32.mrb[0].mxu0
      %v532 = vadd.f32 0.0, %v531
      %v533 = vpop.f32.mrb[0].mxu0
      %534 = vmatprep.mubr.bf16.mxu0 0
      %535 = vmatmul.mubr.bf16.gmra.mrb[0].mxu0 %v415
      %v536 = vpop.f32.mrb[0].mxu0
      %v537 = vadd.f32 0.0, %v536
      %v538 = vpop.f32.mrb[0].mxu0
      %v539 = vpop.f32.mrb[0].mxu0
      %v540 = vadd.f32 0.0, %v539
      %v541 = vpop.f32.mrb[0].mxu0
      %542 = vmatprep.mubr.bf16.mxu0 0
      %543 = vmatmul.mubr.bf16.gmra.mrb[0].mxu0 %v418
      %v544 = vpop.f32.mrb[0].mxu0
      %v545 = vadd.f32 0.0, %v544
      %v546 = vpop.f32.mrb[0].mxu0
      %v547 = vpop.f32.mrb[0].mxu0
      %v548 = vadd.f32 0.0, %v547
      %v549 = vpop.f32.mrb[0].mxu0
      %550 = vmatprep.mubr.bf16.mxu0 0
      %551 = vmatmul.mubr.bf16.gmra.mrb[0].mxu0 %v421
      %v552 = vpop.f32.mrb[0].mxu0
      %v553 = vadd.f32 0.0, %v552
      %v554 = vpop.f32.mrb[0].mxu0
      %v555 = vpop.f32.mrb[0].mxu0
      %v556 = vadd.f32 0.0, %v555
      %v557 = vpop.f32.mrb[0].mxu0
      %558 = vmatprep.mubr.bf16.mxu0 0
      %559 = vmatmul.mubr.bf16.gmra.mrb[0].mxu0 %v424
      %v560 = vpop.f32.mrb[0].mxu0
      %v561 = vadd.f32 0.0, %v560
      %v562 = vpop.f32.mrb[0].mxu0
      %v563 = vpop.f32.mrb[0].mxu0
      %v564 = vadd.f32 0.0, %v563
      %v565 = vpop.f32.mrb[0].mxu0
      %566 = vmatprep.mubr.bf16.mxu0 0
      %567 = vmatmul.mubr.bf16.gmra.mrb[0].mxu0 %v427
      %v568 = vpop.f32.mrb[0].mxu0
      %v569 = vadd.f32 0.0, %v568
      %v570 = vpop.f32.mrb[0].mxu0
      %v571 = vpop.f32.mrb[0].mxu0
      %v572 = vadd.f32 0.0, %v571
      %v573 = vpop.f32.mrb[0].mxu0
      %574 = vmatprep.mubr.bf16.mxu0 0
      %575 = vmatmul.mubr.bf16.gmra.mrb[0].mxu0 %v430
      %v576 = vpop.f32.mrb[0].mxu0
      %v577 = vadd.f32 0.0, %v576
      %v578 = vpop.f32.mrb[0].mxu0
      %v579 = vpop.f32.mrb[0].mxu0
      %v580 = vadd.f32 0.0, %v579
      %v581 = vpop.f32.mrb[0].mxu0
      %582 = vmatprep.mubr.bf16.mxu0 0
      %583 = vmatmul.mubr.bf16.gmra.mrb[0].mxu0 %v433
      %v584 = vpop.f32.mrb[0].mxu0
      %v585 = vadd.f32 0.0, %v584
      %v586 = vpop.f32.mrb[0].mxu0
      %v587 = vpop.f32.mrb[0].mxu0
      %v588 = vadd.f32 0.0, %v587
      %v589 = vpop.f32.mrb[0].mxu0
      %590 = vmatprep.mubr.bf16.mxu0 0
      %591 = vmatmul.mubr.bf16.gmra.mrb[0].mxu0 %v436
      %v592 = vpop.f32.mrb[0].mxu0
      %v593 = vadd.f32 0.0, %v592
      %v594 = vpop.f32.mrb[0].mxu0
      %v595 = vpop.f32.mrb[0].mxu0
      %v596 = vadd.f32 0.0, %v595
      %v597 = vpop.f32.mrb[0].mxu0
      %598 = vmatprep.mubr.bf16.mxu0 0
      %599 = vmatmul.mubr.bf16.gmra.mrb[0].mxu0 %v439
      %v600 = vpop.f32.mrb[0].mxu0
      %v601 = vadd.f32 0.0, %v600
      %v602 = vpop.f32.mrb[0].mxu0
      %v603 = vpop.f32.mrb[0].mxu0
      %v604 = vadd.f32 0.0, %v603
      %v605 = vpop.f32.mrb[0].mxu0
      %606 = vmatprep.mubr.bf16.mxu0 0
      %607 = vmatmul.mubr.bf16.gmra.mrb[0].mxu0 %v442
      %v608 = vpop.f32.mrb[0].mxu0
      %v609 = vadd.f32 0.0, %v608
      %v610 = vpop.f32.mrb[0].mxu0
      %v611 = vpop.f32.mrb[0].mxu0
      %v612 = vadd.f32 0.0, %v611
      %v613 = vpop.f32.mrb[0].mxu0
      %614 = vmatprep.mubr.bf16.mxu0 0
      %615 = vmatmul.mubr.bf16.gmra.mrb[0].mxu0 %v445
      %v616 = vpop.f32.mrb[0].mxu0
      %v617 = vadd.f32 0.0, %v616
      %v618 = vpop.f32.mrb[0].mxu0
      %v619 = vpop.f32.mrb[0].mxu0
      %v620 = vadd.f32 0.0, %v619
      %v621 = vpop.f32.mrb[0].mxu0
      %622 = vmatprep.mubr.bf16.mxu0 0
      %623 = vmatmul.mubr.bf16.gmra.mrb[0].mxu0 %v448
      %v624 = vpop.f32.mrb[0].mxu0
      %v625 = vadd.f32 0.0, %v624
      %v626 = vpop.f32.mrb[0].mxu0
      %v627 = vpop.f32.mrb[0].mxu0
      %v628 = vadd.f32 0.0, %v627
      %v629 = vpop.f32.mrb[0].mxu0
      %630 = vdwg.mxu0
      %v631 = vadd.f32 %v268, %v489
      %v632 = vadd.f32 %v269, %v492
      %v633 = vadd.f32 %v270, %v497
      %v634 = vadd.f32 %v271, %v500
      %v635 = vadd.f32 %v272, %v505
      %v636 = vadd.f32 %v273, %v508
      %v637 = vadd.f32 %v274, %v513
      %v638 = vadd.f32 %v275, %v516
      %v639 = vadd.f32 %v276, %v521
      %v640 = vadd.f32 %v277, %v524
      %v641 = vadd.f32 %v278, %v529
      %v642 = vadd.f32 %v279, %v532
      %v643 = vadd.f32 %v280, %v537
      %v644 = vadd.f32 %v281, %v540
      %v645 = vadd.f32 %v282, %v545
      %v646 = vadd.f32 %v283, %v548
      %v647 = vadd.f32 %v284, %v553
      %v648 = vadd.f32 %v285, %v556
      %v649 = vadd.f32 %v286, %v561
      %v650 = vadd.f32 %v287, %v564
      %v651 = vadd.f32 %v288, %v569
      %v652 = vadd.f32 %v289, %v572
      %v653 = vadd.f32 %v290, %v577
      %v654 = vadd.f32 %v291, %v580
      %v655 = vadd.f32 %v292, %v585
      %v656 = vadd.f32 %v293, %v588
      %v657 = vadd.f32 %v294, %v593
      %v658 = vadd.f32 %v295, %v596
      %v659 = vadd.f32 %v296, %v601
      %v660 = vadd.f32 %v297, %v604
      %v661 = vadd.f32 %v298, %v609
      %v662 = vadd.f32 %v299, %v612
      %v663 = vadd.f32 %v300, %v617
      %v664 = vadd.f32 %v301, %v620
      %v665 = vadd.f32 %v302, %v625
      %v666 = vadd.f32 %v303, %v628
      %667 = vst.msk [vmem:[#allocation2] sm:$0xff] %vm195, %v631
      %668 = vst.msk [vmem:[#allocation2 + $0x8] sm:$0xff] %vm195, %v632
      %669 = vst.msk [vmem:[#allocation2 + $0x10] sm:$0xff] %vm195, %v633
      %670 = vst.msk [vmem:[#allocation2 + $0x18] sm:$0xff] %vm195, %v634
      %671 = vst.msk [vmem:[#allocation2 + $0x20] sm:$0xff] %vm195, %v635
      %672 = vst.msk [vmem:[#allocation2 + $0x28] sm:$0xff] %vm195, %v636
      %673 = vst.msk [vmem:[#allocation2 + $0x30] sm:$0xff] %vm195, %v637
      %674 = vst.msk [vmem:[#allocation2 + $0x38] sm:$0xff] %vm195, %v638
      %675 = vst.msk [vmem:[#allocation2 + $0x40] sm:$0xff] %vm195, %v639
      %676 = vst.msk [vmem:[#allocation2 + $0x48] sm:$0xff] %vm195, %v640
      %677 = vst.msk [vmem:[#allocation2 + $0x50] sm:$0xff] %vm195, %v641
      %678 = vst.msk [vmem:[#allocation2 + $0x58] sm:$0xff] %vm195, %v642
      %679 = vst.msk [vmem:[#allocation2 + $0x60] sm:$0xff] %vm195, %v643
      %680 = vst.msk [vmem:[#allocation2 + $0x68] sm:$0xff] %vm195, %v644
      %681 = vst.msk [vmem:[#allocation2 + $0x70] sm:$0xff] %vm195, %v645
      %682 = vst.msk [vmem:[#allocation2 + $0x78] sm:$0xff] %vm195, %v646
      %683 = vst.msk [vmem:[#allocation2 + $0x80] sm:$0xff] %vm195, %v647
      %684 = vst.msk [vmem:[#allocation2 + $0x88] sm:$0xff] %vm195, %v648
      %685 = vst.msk [vmem:[#allocation2 + $0x90] sm:$0xff] %vm195, %v649
      %686 = vst.msk [vmem:[#allocation2 + $0x98] sm:$0xff] %vm195, %v650
      %687 = vst.msk [vmem:[#allocation2 + $0xa0] sm:$0xff] %vm195, %v651
      %688 = vst.msk [vmem:[#allocation2 + $0xa8] sm:$0xff] %vm195, %v652
      %689 = vst.msk [vmem:[#allocation2 + $0xb0] sm:$0xff] %vm195, %v653
      %690 = vst.msk [vmem:[#allocation2 + $0xb8] sm:$0xff] %vm195, %v654
      %691 = vst.msk [vmem:[#allocation2 + $0xc0] sm:$0xff] %vm195, %v655
      %692 = vst.msk [vmem:[#allocation2 + $0xc8] sm:$0xff] %vm195, %v656
      %693 = vst.msk [vmem:[#allocation2 + $0xd0] sm:$0xff] %vm195, %v657
      %694 = vst.msk [vmem:[#allocation2 + $0xd8] sm:$0xff] %vm195, %v658
      %695 = vst.msk [vmem:[#allocation2 + $0xe0] sm:$0xff] %vm195, %v659
      %696 = vst.msk [vmem:[#allocation2 + $0xe8] sm:$0xff] %vm195, %v660
      %697 = vst.msk [vmem:[#allocation2 + $0xf0] sm:$0xff] %vm195, %v661
      %698 = vst.msk [vmem:[#allocation2 + $0xf8] sm:$0xff] %vm195, %v662
      %699 = vst.msk [vmem:[#allocation2 + $0x100] sm:$0xff] %vm195, %v663
      %700 = vst.msk [vmem:[#allocation2 + $0x108] sm:$0xff] %vm195, %v664
      %701 = vst.msk [vmem:[#allocation2 + $0x110] sm:$0xff] %vm195, %v665
      %702 = vst.msk [vmem:[#allocation2 + $0x118] sm:$0xff] %vm195, %v666
      %v703 = vld [vmem:[%s183] sm:$0xf]
      %v704 = vld [vmem:[%s183 + $0x4] sm:$0xf]
      %v705 = vld [vmem:[%s183 + $0x8] sm:$0xf]
      %v706 = vld [vmem:[%s183 + $0xc] sm:$0xf]
      %v707 = vld [vmem:[%s183 + $0x10] sm:$0xf]
      %v708 = vld [vmem:[%s183 + $0x14] sm:$0xf]
      %v709 = vld [vmem:[%s183 + $0x18] sm:$0xf]
      %v710 = vld [vmem:[%s183 + $0x1c] sm:$0xf]
      %v711 = vld [vmem:[%s183 + $0x20] sm:$0xf]
      %v712 = vld [vmem:[%s183 + $0x24] sm:$0xf]
      %v713 = vld [vmem:[%s183 + $0x28] sm:$0xf]
      %v714 = vld [vmem:[%s183 + $0x2c] sm:$0xf]
      %v715 = vld [vmem:[%s183 + $0x30] sm:$0xf]
      %v716 = vld [vmem:[%s183 + $0x34] sm:$0xf]
      %v717 = vld [vmem:[%s183 + $0x38] sm:$0xf]
      %v718 = vld [vmem:[%s183 + $0x3c] sm:$0xf]
      %v719 = vld [vmem:[%s183 + $0x40] sm:$0xf]
      %v720 = vld [vmem:[%s183 + $0x44] sm:$0xf]
      %v721 = vld [vmem:[%s183 + $0x48] sm:$0xf]
      %v722 = vld [vmem:[%s183 + $0x4c] sm:$0xf]
      %v723 = vld [vmem:[%s183 + $0x50] sm:$0xf]
      %v724 = vld [vmem:[%s183 + $0x54] sm:$0xf]
      %v725 = vld [vmem:[%s183 + $0x58] sm:$0xf]
      %v726 = vld [vmem:[%s183 + $0x5c] sm:$0xf]
      %v727 = vld [vmem:[%s183 + $0x60] sm:$0xf]
      %v728 = vld [vmem:[%s183 + $0x64] sm:$0xf]
      %v729 = vld [vmem:[%s183 + $0x68] sm:$0xf]
      %v730 = vld [vmem:[%s183 + $0x6c] sm:$0xf]
      %v731 = vld [vmem:[%s183 + $0x70] sm:$0xf]
      %v732 = vld [vmem:[%s183 + $0x74] sm:$0xf]
      %v733 = vld [vmem:[%s183 + $0x78] sm:$0xf]
      %v734 = vld [vmem:[%s183 + $0x7c] sm:$0xf]
      %v735 = vld [vmem:[%s183 + $0x80] sm:$0xf]
      %v736 = vld [vmem:[%s183 + $0x84] sm:$0xf]
      %v737 = vld [vmem:[%s183 + $0x88] sm:$0xf]
      %v738 = vld [vmem:[%s183 + $0x8c] sm:$0xf]
      %v739 = vld [vmem:[%s183 + $0x90] sm:$0x1]
      %v740 = vld [vmem:[#allocation2] sm:$0xff]
      %v741 = vld [vmem:[#allocation2 + $0x8] sm:$0xff]
      %v742 = vld [vmem:[#allocation2 + $0x10] sm:$0xff]
      %v743 = vld [vmem:[#allocation2 + $0x18] sm:$0xff]
      %v744 = vld [vmem:[#allocation2 + $0x20] sm:$0xff]
      %v745 = vld [vmem:[#allocation2 + $0x28] sm:$0xff]
      %v746 = vld [vmem:[#allocation2 + $0x30] sm:$0xff]
      %v747 = vld [vmem:[#allocation2 + $0x38] sm:$0xff]
      %v748 = vld [vmem:[#allocation2 + $0x40] sm:$0xff]
      %v749 = vld [vmem:[#allocation2 + $0x48] sm:$0xff]
      %v750 = vld [vmem:[#allocation2 + $0x50] sm:$0xff]
      %v751 = vld [vmem:[#allocation2 + $0x58] sm:$0xff]
      %v752 = vld [vmem:[#allocation2 + $0x60] sm:$0xff]
      %v753 = vld [vmem:[#allocation2 + $0x68] sm:$0xff]
      %v754 = vld [vmem:[#allocation2 + $0x70] sm:$0xff]
      %v755 = vld [vmem:[#allocation2 + $0x78] sm:$0xff]
      %v756 = vld [vmem:[#allocation2 + $0x80] sm:$0xff]
      %v757 = vld [vmem:[#allocation2 + $0x88] sm:$0xff]
      %v758 = vld [vmem:[#allocation2 + $0x90] sm:$0xff]
      %v759 = vld [vmem:[#allocation2 + $0x98] sm:$0xff]
      %v760 = vld [vmem:[#allocation2 + $0xa0] sm:$0xff]
      %v761 = vld [vmem:[#allocation2 + $0xa8] sm:$0xff]
      %v762 = vld [vmem:[#allocation2 + $0xb0] sm:$0xff]
      %v763 = vld [vmem:[#allocation2 + $0xb8] sm:$0xff]
      %v764 = vld [vmem:[#allocation2 + $0xc0] sm:$0xff]
      %v765 = vld [vmem:[#allocation2 + $0xc8] sm:$0xff]
      %v766 = vld [vmem:[#allocation2 + $0xd0] sm:$0xff]
      %v767 = vld [vmem:[#allocation2 + $0xd8] sm:$0xff]
      %v768 = vld [vmem:[#allocation2 + $0xe0] sm:$0xff]
      %v769 = vld [vmem:[#allocation2 + $0xe8] sm:$0xff]
      %v770 = vld [vmem:[#allocation2 + $0xf0] sm:$0xff]
      %v771 = vld [vmem:[#allocation2 + $0xf8] sm:$0xff]
      %v772 = vld [vmem:[#allocation2 + $0x100] sm:$0xff]
      %v773 = vld [vmem:[#allocation2 + $0x108] sm:$0xff]
      %v774 = vld [vmem:[#allocation2 + $0x110] sm:$0xff]
      %v775 = vld [vmem:[#allocation2 + $0x118] sm:$0xff]
      %s776 = scalar_lea.vmem %s1, 2
      %v777 = vld [vmem:[%s776] sm:$0x3]
      %v815 = vunpack.c.l.b16 %v703
      %v816 = vunpack.c.l.b16 %v704
      %v817 = vunpack.c.l.b16 %v705
      %v818 = vunpack.c.l.b16 %v706
      %v819 = vunpack.c.l.b16 %v707
      %v820 = vunpack.c.l.b16 %v708
      %v821 = vunpack.c.l.b16 %v709
      %v822 = vunpack.c.l.b16 %v710
      %v823 = vunpack.c.l.b16 %v711
      %v824 = vunpack.c.l.b16 %v712
      %v825 = vunpack.c.l.b16 %v713
      %v826 = vunpack.c.l.b16 %v714
      %v827 = vunpack.c.l.b16 %v715
      %v828 = vunpack.c.l.b16 %v716
      %v829 = vunpack.c.l.b16 %v717
      %v830 = vunpack.c.l.b16 %v718
      %v831 = vunpack.c.l.b16 %v719
      %v832 = vunpack.c.l.b16 %v720
      %v833 = vunpack.c.l.b16 %v721
      %v834 = vunpack.c.l.b16 %v722
      %v835 = vunpack.c.l.b16 %v723
      %v836 = vunpack.c.l.b16 %v724
      %v837 = vunpack.c.l.b16 %v725
      %v838 = vunpack.c.l.b16 %v726
      %v839 = vunpack.c.l.b16 %v727
      %v840 = vunpack.c.l.b16 %v728
      %v841 = vunpack.c.l.b16 %v729
      %v842 = vunpack.c.l.b16 %v730
      %v843 = vunpack.c.l.b16 %v731
      %v844 = vunpack.c.l.b16 %v732
      %v845 = vunpack.c.l.b16 %v733
      %v846 = vunpack.c.l.b16 %v734
      %v847 = vunpack.c.l.b16 %v735
      %v848 = vunpack.c.l.b16 %v736
      %v849 = vunpack.c.l.b16 %v737
      %v850 = vunpack.c.l.b16 %v738
      %v851 = vunpack.c.l.b16 %v739
      %v852 = vpack.c.b16 %v816, %v815
      %v853 = vpack.c.b16 %v818, %v817
      %v854 = vpack.c.b16 %v820, %v819
      %v855 = vpack.c.b16 %v822, %v821
      %v856 = vpack.c.b16 %v824, %v823
      %v857 = vpack.c.b16 %v826, %v825
      %v858 = vpack.c.b16 %v828, %v827
      %v859 = vpack.c.b16 %v830, %v829
      %v860 = vpack.c.b16 %v832, %v831
      %v861 = vpack.c.b16 %v834, %v833
      %v862 = vpack.c.b16 %v836, %v835
      %v863 = vpack.c.b16 %v838, %v837
      %v864 = vpack.c.b16 %v840, %v839
      %v865 = vpack.c.b16 %v842, %v841
      %v866 = vpack.c.b16 %v844, %v843
      %v867 = vpack.c.b16 %v846, %v845
      %v868 = vpack.c.b16 %v848, %v847
      %v869 = vpack.c.b16 %v850, %v849
      %v870 = vpack.c.b16 %v851, %v851
      %vm871 = vsmask.f32 7424
      %v873 = vshrl.u32 %v852, 16
      %v875 = vshll.u32 %v852, 16
      %v877 = vrot.slane %v875, 1
      %v878 = vor.u32 %v873, %v877
      %v880 = vshll.u32 %v853, 16
      %v882 = vrot.slane %v880, 1
      %v883 = vsel %vm871, %v878, %v882
      %v884 = vshrl.u32 %v853, 16
      %v886 = vor.u32 %v884, %v882
      %v888 = vshll.u32 %v854, 16
      %v890 = vrot.slane %v888, 1
      %v891 = vsel %vm871, %v886, %v890
      %v892 = vshrl.u32 %v854, 16
      %v894 = vor.u32 %v892, %v890
      %v896 = vshll.u32 %v855, 16
      %v898 = vrot.slane %v896, 1
      %v899 = vsel %vm871, %v894, %v898
      %v900 = vshrl.u32 %v855, 16
      %v902 = vor.u32 %v900, %v898
      %v904 = vshll.u32 %v856, 16
      %v906 = vrot.slane %v904, 1
      %v907 = vsel %vm871, %v902, %v906
      %v908 = vshrl.u32 %v856, 16
      %v910 = vor.u32 %v908, %v906
      %v912 = vshll.u32 %v857, 16
      %v914 = vrot.slane %v912, 1
      %v915 = vsel %vm871, %v910, %v914
      %v916 = vshrl.u32 %v857, 16
      %v918 = vor.u32 %v916, %v914
      %v920 = vshll.u32 %v858, 16
      %v922 = vrot.slane %v920, 1
      %v923 = vsel %vm871, %v918, %v922
      %v924 = vshrl.u32 %v858, 16
      %v926 = vor.u32 %v924, %v922
      %v928 = vshll.u32 %v859, 16
      %v930 = vrot.slane %v928, 1
      %v931 = vsel %vm871, %v926, %v930
      %v932 = vshrl.u32 %v859, 16
      %v934 = vor.u32 %v932, %v930
      %v936 = vshll.u32 %v860, 16
      %v938 = vrot.slane %v936, 1
      %v939 = vsel %vm871, %v934, %v938
      %v940 = vshrl.u32 %v860, 16
      %v942 = vor.u32 %v940, %v938
      %v944 = vshll.u32 %v861, 16
      %v946 = vrot.slane %v944, 1
      %v947 = vsel %vm871, %v942, %v946
      %v948 = vshrl.u32 %v861, 16
      %v950 = vor.u32 %v948, %v946
      %v952 = vshll.u32 %v862, 16
      %v954 = vrot.slane %v952, 1
      %v955 = vsel %vm871, %v950, %v954
      %v956 = vshrl.u32 %v862, 16
      %v958 = vor.u32 %v956, %v954
      %v960 = vshll.u32 %v863, 16
      %v962 = vrot.slane %v960, 1
      %v963 = vsel %vm871, %v958, %v962
      %v964 = vshrl.u32 %v863, 16
      %v966 = vor.u32 %v964, %v962
      %v968 = vshll.u32 %v864, 16
      %v970 = vrot.slane %v968, 1
      %v971 = vsel %vm871, %v966, %v970
      %v972 = vshrl.u32 %v864, 16
      %v974 = vor.u32 %v972, %v970
      %v976 = vshll.u32 %v865, 16
      %v978 = vrot.slane %v976, 1
      %v979 = vsel %vm871, %v974, %v978
      %v980 = vshrl.u32 %v865, 16
      %v982 = vor.u32 %v980, %v978
      %v984 = vshll.u32 %v866, 16
      %v986 = vrot.slane %v984, 1
      %v987 = vsel %vm871, %v982, %v986
      %v988 = vshrl.u32 %v866, 16
      %v990 = vor.u32 %v988, %v986
      %v992 = vshll.u32 %v867, 16
      %v994 = vrot.slane %v992, 1
      %v995 = vsel %vm871, %v990, %v994
      %v996 = vshrl.u32 %v867, 16
      %v998 = vor.u32 %v996, %v994
      %v1000 = vshll.u32 %v868, 16
      %v1002 = vrot.slane %v1000, 1
      %v1003 = vsel %vm871, %v998, %v1002
      %v1004 = vshrl.u32 %v868, 16
      %v1006 = vor.u32 %v1004, %v1002
      %v1008 = vshll.u32 %v869, 16
      %v1010 = vrot.slane %v1008, 1
      %v1011 = vsel %vm871, %v1006, %v1010
      %v1012 = vshrl.u32 %v869, 16
      %v1014 = vor.u32 %v1012, %v1010
      %v1016 = vshll.u32 %v870, 16
      %v1018 = vrot.slane %v1016, 1
      %v1019 = vsel %vm871, %v1014, %v1018
      %v1021 = vsel %vm395, %v883, 0
      %v1024 = vsel %vm395, %v891, 0
      %v1027 = vsel %vm395, %v899, 0
      %v1030 = vsel %vm395, %v907, 0
      %v1033 = vsel %vm395, %v915, 0
      %v1036 = vsel %vm395, %v923, 0
      %v1039 = vsel %vm395, %v931, 0
      %v1042 = vsel %vm395, %v939, 0
      %v1045 = vsel %vm395, %v947, 0
      %v1048 = vsel %vm395, %v955, 0
      %v1051 = vsel %vm395, %v963, 0
      %v1054 = vsel %vm395, %v971, 0
      %v1057 = vsel %vm395, %v979, 0
      %v1060 = vsel %vm395, %v987, 0
      %v1063 = vsel %vm395, %v995, 0
      %v1066 = vsel %vm395, %v1003, 0
      %v1069 = vsel %vm395, %v1011, 0
      %v1072 = vsel %vm395, %v1019, 0
      %v1075 = vsel %vm450, %v777, 0
      %1077 = vmatprep.subr.bf16.mxu0 0
      %1078 = vmatpush1.bf16.msra.mxu0 %v1075
      %1079 = vmatprep.subr.bf16.mxu0 0
      %1080 = vmatpush1.bf16.msra.mxu0 0
      %1081 = vmatprep.subr.bf16.mxu0 0
      %1082 = vmatpush1.bf16.msra.mxu0 0
      %1083 = vmatprep.subr.bf16.mxu0 0
      %1084 = vmatpush1.bf16.msra.mxu0 0
      %1085 = vmatprep.subr.bf16.mxu0 0
      %1086 = vmatpush1.bf16.msra.mxu0 0
      %1087 = vmatprep.subr.bf16.mxu0 0
      %1088 = vmatpush1.bf16.msra.mxu0 0
      %1089 = vmatprep.subr.bf16.mxu0 0
      %1090 = vmatpush1.bf16.msra.mxu0 0
      %1091 = vmatprep.subr.bf16.mxu0 0
      %1092 = vmatpush1.bf16.msra.mxu0 0
      %1093 = vmatprep.subr.bf16.mxu0 0
      %1094 = vmatpush1.bf16.msra.mxu0 0
      %1095 = vmatprep.subr.bf16.mxu0 0
      %1096 = vmatpush1.bf16.msra.mxu0 0
      %1097 = vmatprep.subr.bf16.mxu0 0
      %1098 = vmatpush1.bf16.msra.mxu0 0
      %1099 = vmatprep.subr.bf16.mxu0 0
      %1100 = vmatpush1.bf16.msra.mxu0 0
      %1101 = vmatprep.subr.bf16.mxu0 0
      %1102 = vmatpush1.bf16.msra.mxu0 0
      %1103 = vmatprep.subr.bf16.mxu0 0
      %1104 = vmatpush1.bf16.msra.mxu0 0
      %1105 = vmatprep.subr.bf16.mxu0 0
      %1106 = vmatpush1.bf16.msra.mxu0 0
      %1107 = vmatprep.subr.bf16.mxu0 0
      %1108 = vmatpush1.bf16.msra.mxu0 0
      %1109 = vmatprep.mubr.bf16.mxu0 0
      %1110 = vmatmul.mubr.bf16.gmra.mrb[0].mxu0 %v1021
      %v1111 = vpop.f32.mrb[0].mxu0
      %v1112 = vadd.f32 0.0, %v1111
      %v1113 = vpop.f32.mrb[0].mxu0
      %v1114 = vpop.f32.mrb[0].mxu0
      %v1115 = vadd.f32 0.0, %v1114
      %v1116 = vpop.f32.mrb[0].mxu0
      %1117 = vmatprep.mubr.bf16.mxu0 0
      %1118 = vmatmul.mubr.bf16.gmra.mrb[0].mxu0 %v1024
      %v1119 = vpop.f32.mrb[0].mxu0
      %v1120 = vadd.f32 0.0, %v1119
      %v1121 = vpop.f32.mrb[0].mxu0
      %v1122 = vpop.f32.mrb[0].mxu0
      %v1123 = vadd.f32 0.0, %v1122
      %v1124 = vpop.f32.mrb[0].mxu0
      %1125 = vmatprep.mubr.bf16.mxu0 0
      %1126 = vmatmul.mubr.bf16.gmra.mrb[0].mxu0 %v1027
      %v1127 = vpop.f32.mrb[0].mxu0
      %v1128 = vadd.f32 0.0, %v1127
      %v1129 = vpop.f32.mrb[0].mxu0
      %v1130 = vpop.f32.mrb[0].mxu0
      %v1131 = vadd.f32 0.0, %v1130
      %v1132 = vpop.f32.mrb[0].mxu0
      %1133 = vmatprep.mubr.bf16.mxu0 0
      %1134 = vmatmul.mubr.bf16.gmra.mrb[0].mxu0 %v1030
      %v1135 = vpop.f32.mrb[0].mxu0
      %v1136 = vadd.f32 0.0, %v1135
      %v1137 = vpop.f32.mrb[0].mxu0
      %v1138 = vpop.f32.mrb[0].mxu0
      %v1139 = vadd.f32 0.0, %v1138
      %v1140 = vpop.f32.mrb[0].mxu0
      %1141 = vmatprep.mubr.bf16.mxu0 0
      %1142 = vmatmul.mubr.bf16.gmra.mrb[0].mxu0 %v1033
      %v1143 = vpop.f32.mrb[0].mxu0
      %v1144 = vadd.f32 0.0, %v1143
      %v1145 = vpop.f32.mrb[0].mxu0
      %v1146 = vpop.f32.mrb[0].mxu0
      %v1147 = vadd.f32 0.0, %v1146
      %v1148 = vpop.f32.mrb[0].mxu0
      %1149 = vmatprep.mubr.bf16.mxu0 0
      %1150 = vmatmul.mubr.bf16.gmra.mrb[0].mxu0 %v1036
      %v1151 = vpop.f32.mrb[0].mxu0
      %v1152 = vadd.f32 0.0, %v1151
      %v1153 = vpop.f32.mrb[0].mxu0
      %v1154 = vpop.f32.mrb[0].mxu0
      %v1155 = vadd.f32 0.0, %v1154
      %v1156 = vpop.f32.mrb[0].mxu0
      %1157 = vmatprep.mubr.bf16.mxu0 0
      %1158 = vmatmul.mubr.bf16.gmra.mrb[0].mxu0 %v1039
      %v1159 = vpop.f32.mrb[0].mxu0
      %v1160 = vadd.f32 0.0, %v1159
      %v1161 = vpop.f32.mrb[0].mxu0
      %v1162 = vpop.f32.mrb[0].mxu0
      %v1163 = vadd.f32 0.0, %v1162
      %v1164 = vpop.f32.mrb[0].mxu0
      %1165 = vmatprep.mubr.bf16.mxu0 0
      %1166 = vmatmul.mubr.bf16.gmra.mrb[0].mxu0 %v1042
      %v1167 = vpop.f32.mrb[0].mxu0
      %v1168 = vadd.f32 0.0, %v1167
      %v1169 = vpop.f32.mrb[0].mxu0
      %v1170 = vpop.f32.mrb[0].mxu0
      %v1171 = vadd.f32 0.0, %v1170
      %v1172 = vpop.f32.mrb[0].mxu0
      %1173 = vmatprep.mubr.bf16.mxu0 0
      %1174 = vmatmul.mubr.bf16.gmra.mrb[0].mxu0 %v1045
      %v1175 = vpop.f32.mrb[0].mxu0
      %v1176 = vadd.f32 0.0, %v1175
      %v1177 = vpop.f32.mrb[0].mxu0
      %v1178 = vpop.f32.mrb[0].mxu0
      %v1179 = vadd.f32 0.0, %v1178
      %v1180 = vpop.f32.mrb[0].mxu0
      %1181 = vmatprep.mubr.bf16.mxu0 0
      %1182 = vmatmul.mubr.bf16.gmra.mrb[0].mxu0 %v1048
      %v1183 = vpop.f32.mrb[0].mxu0
      %v1184 = vadd.f32 0.0, %v1183
      %v1185 = vpop.f32.mrb[0].mxu0
      %v1186 = vpop.f32.mrb[0].mxu0
      %v1187 = vadd.f32 0.0, %v1186
      %v1188 = vpop.f32.mrb[0].mxu0
      %1189 = vmatprep.mubr.bf16.mxu0 0
      %1190 = vmatmul.mubr.bf16.gmra.mrb[0].mxu0 %v1051
      %v1191 = vpop.f32.mrb[0].mxu0
      %v1192 = vadd.f32 0.0, %v1191
      %v1193 = vpop.f32.mrb[0].mxu0
      %v1194 = vpop.f32.mrb[0].mxu0
      %v1195 = vadd.f32 0.0, %v1194
      %v1196 = vpop.f32.mrb[0].mxu0
      %1197 = vmatprep.mubr.bf16.mxu0 0
      %1198 = vmatmul.mubr.bf16.gmra.mrb[0].mxu0 %v1054
      %v1199 = vpop.f32.mrb[0].mxu0
      %v1200 = vadd.f32 0.0, %v1199
      %v1201 = vpop.f32.mrb[0].mxu0
      %v1202 = vpop.f32.mrb[0].mxu0
      %v1203 = vadd.f32 0.0, %v1202
      %v1204 = vpop.f32.mrb[0].mxu0
      %1205 = vmatprep.mubr.bf16.mxu0 0
      %1206 = vmatmul.mubr.bf16.gmra.mrb[0].mxu0 %v1057
      %v1207 = vpop.f32.mrb[0].mxu0
      %v1208 = vadd.f32 0.0, %v1207
      %v1209 = vpop.f32.mrb[0].mxu0
      %v1210 = vpop.f32.mrb[0].mxu0
      %v1211 = vadd.f32 0.0, %v1210
      %v1212 = vpop.f32.mrb[0].mxu0
      %1213 = vmatprep.mubr.bf16.mxu0 0
      %1214 = vmatmul.mubr.bf16.gmra.mrb[0].mxu0 %v1060
      %v1215 = vpop.f32.mrb[0].mxu0
      %v1216 = vadd.f32 0.0, %v1215
      %v1217 = vpop.f32.mrb[0].mxu0
      %v1218 = vpop.f32.mrb[0].mxu0
      %v1219 = vadd.f32 0.0, %v1218
      %v1220 = vpop.f32.mrb[0].mxu0
      %1221 = vmatprep.mubr.bf16.mxu0 0
      %1222 = vmatmul.mubr.bf16.gmra.mrb[0].mxu0 %v1063
      %v1223 = vpop.f32.mrb[0].mxu0
      %v1224 = vadd.f32 0.0, %v1223
      %v1225 = vpop.f32.mrb[0].mxu0
      %v1226 = vpop.f32.mrb[0].mxu0
      %v1227 = vadd.f32 0.0, %v1226
      %v1228 = vpop.f32.mrb[0].mxu0
      %1229 = vmatprep.mubr.bf16.mxu0 0
      %1230 = vmatmul.mubr.bf16.gmra.mrb[0].mxu0 %v1066
      %v1231 = vpop.f32.mrb[0].mxu0
      %v1232 = vadd.f32 0.0, %v1231
      %v1233 = vpop.f32.mrb[0].mxu0
      %v1234 = vpop.f32.mrb[0].mxu0
      %v1235 = vadd.f32 0.0, %v1234
      %v1236 = vpop.f32.mrb[0].mxu0
      %1237 = vmatprep.mubr.bf16.mxu0 0
      %1238 = vmatmul.mubr.bf16.gmra.mrb[0].mxu0 %v1069
      %v1239 = vpop.f32.mrb[0].mxu0
      %v1240 = vadd.f32 0.0, %v1239
      %v1241 = vpop.f32.mrb[0].mxu0
      %v1242 = vpop.f32.mrb[0].mxu0
      %v1243 = vadd.f32 0.0, %v1242
      %v1244 = vpop.f32.mrb[0].mxu0
      %1245 = vmatprep.mubr.bf16.mxu0 0
      %1246 = vmatmul.mubr.bf16.gmra.mrb[0].mxu0 %v1072
      %v1247 = vpop.f32.mrb[0].mxu0
      %v1248 = vadd.f32 0.0, %v1247
      %v1249 = vpop.f32.mrb[0].mxu0
      %v1250 = vpop.f32.mrb[0].mxu0
      %v1251 = vadd.f32 0.0, %v1250
      %v1252 = vpop.f32.mrb[0].mxu0
      %1253 = vdwg.mxu0
      %v1254 = vadd.f32 %v740, %v1112
      %v1255 = vadd.f32 %v741, %v1115
      %v1256 = vadd.f32 %v742, %v1120
      %v1257 = vadd.f32 %v743, %v1123
      %v1258 = vadd.f32 %v744, %v1128
      %v1259 = vadd.f32 %v745, %v1131
      %v1260 = vadd.f32 %v746, %v1136
      %v1261 = vadd.f32 %v747, %v1139
      %v1262 = vadd.f32 %v748, %v1144
      %v1263 = vadd.f32 %v749, %v1147
      %v1264 = vadd.f32 %v750, %v1152
      %v1265 = vadd.f32 %v751, %v1155
      %v1266 = vadd.f32 %v752, %v1160
      %v1267 = vadd.f32 %v753, %v1163
      %v1268 = vadd.f32 %v754, %v1168
      %v1269 = vadd.f32 %v755, %v1171
      %v1270 = vadd.f32 %v756, %v1176
      %v1271 = vadd.f32 %v757, %v1179
      %v1272 = vadd.f32 %v758, %v1184
      %v1273 = vadd.f32 %v759, %v1187
      %v1274 = vadd.f32 %v760, %v1192
      %v1275 = vadd.f32 %v761, %v1195
      %v1276 = vadd.f32 %v762, %v1200
      %v1277 = vadd.f32 %v763, %v1203
      %v1278 = vadd.f32 %v764, %v1208
      %v1279 = vadd.f32 %v765, %v1211
      %v1280 = vadd.f32 %v766, %v1216
      %v1281 = vadd.f32 %v767, %v1219
      %v1282 = vadd.f32 %v768, %v1224
      %v1283 = vadd.f32 %v769, %v1227
      %v1284 = vadd.f32 %v770, %v1232
      %v1285 = vadd.f32 %v771, %v1235
      %v1286 = vadd.f32 %v772, %v1240
      %v1287 = vadd.f32 %v773, %v1243
      %v1288 = vadd.f32 %v774, %v1248
      %v1289 = vadd.f32 %v775, %v1251
      %1290 = vst.msk [vmem:[#allocation2] sm:$0xff] %vm195, %v1254
      %1291 = vst.msk [vmem:[#allocation2 + $0x8] sm:$0xff] %vm195, %v1255
      %1292 = vst.msk [vmem:[#allocation2 + $0x10] sm:$0xff] %vm195, %v1256
      %1293 = vst.msk [vmem:[#allocation2 + $0x18] sm:$0xff] %vm195, %v1257
      %1294 = vst.msk [vmem:[#allocation2 + $0x20] sm:$0xff] %vm195, %v1258
      %1295 = vst.msk [vmem:[#allocation2 + $0x28] sm:$0xff] %vm195, %v1259
      %1296 = vst.msk [vmem:[#allocation2 + $0x30] sm:$0xff] %vm195, %v1260
      %1297 = vst.msk [vmem:[#allocation2 + $0x38] sm:$0xff] %vm195, %v1261
      %1298 = vst.msk [vmem:[#allocation2 + $0x40] sm:$0xff] %vm195, %v1262
      %1299 = vst.msk [vmem:[#allocation2 + $0x48] sm:$0xff] %vm195, %v1263
      %1300 = vst.msk [vmem:[#allocation2 + $0x50] sm:$0xff] %vm195, %v1264
      %1301 = vst.msk [vmem:[#allocation2 + $0x58] sm:$0xff] %vm195, %v1265
      %1302 = vst.msk [vmem:[#allocation2 + $0x60] sm:$0xff] %vm195, %v1266
      %1303 = vst.msk [vmem:[#allocation2 + $0x68] sm:$0xff] %vm195, %v1267
      %1304 = vst.msk [vmem:[#allocation2 + $0x70] sm:$0xff] %vm195, %v1268
      %1305 = vst.msk [vmem:[#allocation2 + $0x78] sm:$0xff] %vm195, %v1269
      %1306 = vst.msk [vmem:[#allocation2 + $0x80] sm:$0xff] %vm195, %v1270
      %1307 = vst.msk [vmem:[#allocation2 + $0x88] sm:$0xff] %vm195, %v1271
      %1308 = vst.msk [vmem:[#allocation2 + $0x90] sm:$0xff] %vm195, %v1272
      %1309 = vst.msk [vmem:[#allocation2 + $0x98] sm:$0xff] %vm195, %v1273
      %1310 = vst.msk [vmem:[#allocation2 + $0xa0] sm:$0xff] %vm195, %v1274
      %1311 = vst.msk [vmem:[#allocation2 + $0xa8] sm:$0xff] %vm195, %v1275
      %1312 = vst.msk [vmem:[#allocation2 + $0xb0] sm:$0xff] %vm195, %v1276
      %1313 = vst.msk [vmem:[#allocation2 + $0xb8] sm:$0xff] %vm195, %v1277
      %1314 = vst.msk [vmem:[#allocation2 + $0xc0] sm:$0xff] %vm195, %v1278
      %1315 = vst.msk [vmem:[#allocation2 + $0xc8] sm:$0xff] %vm195, %v1279
      %1316 = vst.msk [vmem:[#allocation2 + $0xd0] sm:$0xff] %vm195, %v1280
      %1317 = vst.msk [vmem:[#allocation2 + $0xd8] sm:$0xff] %vm195, %v1281
      %1318 = vst.msk [vmem:[#allocation2 + $0xe0] sm:$0xff] %vm195, %v1282
      %1319 = vst.msk [vmem:[#allocation2 + $0xe8] sm:$0xff] %vm195, %v1283
      %1320 = vst.msk [vmem:[#allocation2 + $0xf0] sm:$0xff] %vm195, %v1284
      %1321 = vst.msk [vmem:[#allocation2 + $0xf8] sm:$0xff] %vm195, %v1285
      %1322 = vst.msk [vmem:[#allocation2 + $0x100] sm:$0xff] %vm195, %v1286
      %1323 = vst.msk [vmem:[#allocation2 + $0x108] sm:$0xff] %vm195, %v1287
      %1324 = vst.msk [vmem:[#allocation2 + $0x110] sm:$0xff] %vm195, %v1288
      %1325 = vst.msk [vmem:[#allocation2 + $0x118] sm:$0xff] %vm195, %v1289
      %v1326 = vld [vmem:[%s183] sm:$0xe]
      %v1327 = vld [vmem:[%s183 + $0x4] sm:$0xf]
      %v1328 = vld [vmem:[%s183 + $0x8] sm:$0xf]
      %v1329 = vld [vmem:[%s183 + $0xc] sm:$0xf]
      %v1330 = vld [vmem:[%s183 + $0x10] sm:$0xf]
      %v1331 = vld [vmem:[%s183 + $0x14] sm:$0xf]
      %v1332 = vld [vmem:[%s183 + $0x18] sm:$0xf]
      %v1333 = vld [vmem:[%s183 + $0x1c] sm:$0xf]
      %v1334 = vld [vmem:[%s183 + $0x20] sm:$0xf]
      %v1335 = vld [vmem:[%s183 + $0x24] sm:$0xf]
      %v1336 = vld [vmem:[%s183 + $0x28] sm:$0xf]
      %v1337 = vld [vmem:[%s183 + $0x2c] sm:$0xf]
      %v1338 = vld [vmem:[%s183 + $0x30] sm:$0xf]
      %v1339 = vld [vmem:[%s183 + $0x34] sm:$0xf]
      %v1340 = vld [vmem:[%s183 + $0x38] sm:$0xf]
      %v1341 = vld [vmem:[%s183 + $0x3c] sm:$0xf]
      %v1342 = vld [vmem:[%s183 + $0x40] sm:$0xf]
      %v1343 = vld [vmem:[%s183 + $0x44] sm:$0xf]
      %v1344 = vld [vmem:[%s183 + $0x48] sm:$0xf]
      %v1345 = vld [vmem:[%s183 + $0x4c] sm:$0xf]
      %v1346 = vld [vmem:[%s183 + $0x50] sm:$0xf]
      %v1347 = vld [vmem:[%s183 + $0x54] sm:$0xf]
      %v1348 = vld [vmem:[%s183 + $0x58] sm:$0xf]
      %v1349 = vld [vmem:[%s183 + $0x5c] sm:$0xf]
      %v1350 = vld [vmem:[%s183 + $0x60] sm:$0xf]
      %v1351 = vld [vmem:[%s183 + $0x64] sm:$0xf]
      %v1352 = vld [vmem:[%s183 + $0x68] sm:$0xf]
      %v1353 = vld [vmem:[%s183 + $0x6c] sm:$0xf]
      %v1354 = vld [vmem:[%s183 + $0x70] sm:$0xf]
      %v1355 = vld [vmem:[%s183 + $0x74] sm:$0xf]
      %v1356 = vld [vmem:[%s183 + $0x78] sm:$0xf]
      %v1357 = vld [vmem:[%s183 + $0x7c] sm:$0xf]
      %v1358 = vld [vmem:[%s183 + $0x80] sm:$0xf]
      %v1359 = vld [vmem:[%s183 + $0x84] sm:$0xf]
      %v1360 = vld [vmem:[%s183 + $0x88] sm:$0xf]
      %v1361 = vld [vmem:[%s183 + $0x8c] sm:$0xf]
      %v1362 = vld [vmem:[%s183 + $0x90] sm:$0x1]
      %v1363 = vld [vmem:[#allocation2] sm:$0xff]
      %v1364 = vld [vmem:[#allocation2 + $0x8] sm:$0xff]
      %v1365 = vld [vmem:[#allocation2 + $0x10] sm:$0xff]
      %v1366 = vld [vmem:[#allocation2 + $0x18] sm:$0xff]
      %v1367 = vld [vmem:[#allocation2 + $0x20] sm:$0xff]
      %v1368 = vld [vmem:[#allocation2 + $0x28] sm:$0xff]
      %v1369 = vld [vmem:[#allocation2 + $0x30] sm:$0xff]
      %v1370 = vld [vmem:[#allocation2 + $0x38] sm:$0xff]
      %v1371 = vld [vmem:[#allocation2 + $0x40] sm:$0xff]
      %v1372 = vld [vmem:[#allocation2 + $0x48] sm:$0xff]
      %v1373 = vld [vmem:[#allocation2 + $0x50] sm:$0xff]
      %v1374 = vld [vmem:[#allocation2 + $0x58] sm:$0xff]
      %v1375 = vld [vmem:[#allocation2 + $0x60] sm:$0xff]
      %v1376 = vld [vmem:[#allocation2 + $0x68] sm:$0xff]
      %v1377 = vld [vmem:[#allocation2 + $0x70] sm:$0xff]
      %v1378 = vld [vmem:[#allocation2 + $0x78] sm:$0xff]
      %v1379 = vld [vmem:[#allocation2 + $0x80] sm:$0xff]
      %v1380 = vld [vmem:[#allocation2 + $0x88] sm:$0xff]
      %v1381 = vld [vmem:[#allocation2 + $0x90] sm:$0xff]
      %v1382 = vld [vmem:[#allocation2 + $0x98] sm:$0xff]
      %v1383 = vld [vmem:[#allocation2 + $0xa0] sm:$0xff]
      %v1384 = vld [vmem:[#allocation2 + $0xa8] sm:$0xff]
      %v1385 = vld [vmem:[#allocation2 + $0xb0] sm:$0xff]
      %v1386 = vld [vmem:[#allocation2 + $0xb8] sm:$0xff]
      %v1387 = vld [vmem:[#allocation2 + $0xc0] sm:$0xff]
      %v1388 = vld [vmem:[#allocation2 + $0xc8] sm:$0xff]
      %v1389 = vld [vmem:[#allocation2 + $0xd0] sm:$0xff]
      %v1390 = vld [vmem:[#allocation2 + $0xd8] sm:$0xff]
      %v1391 = vld [vmem:[#allocation2 + $0xe0] sm:$0xff]
      %v1392 = vld [vmem:[#allocation2 + $0xe8] sm:$0xff]
      %v1393 = vld [vmem:[#allocation2 + $0xf0] sm:$0xff]
      %v1394 = vld [vmem:[#allocation2 + $0xf8] sm:$0xff]
      %v1395 = vld [vmem:[#allocation2 + $0x100] sm:$0xff]
      %v1396 = vld [vmem:[#allocation2 + $0x108] sm:$0xff]
      %v1397 = vld [vmem:[#allocation2 + $0x110] sm:$0xff]
      %v1398 = vld [vmem:[#allocation2 + $0x118] sm:$0xff]
      %s1399 = scalar_lea.vmem %s1, 4
      %v1400 = vld [vmem:[%s1399] sm:$0x3]
      %v1438 = vunpack.c.l.b16 %v1326
      %v1439 = vunpack.c.l.b16 %v1327
      %v1440 = vunpack.c.l.b16 %v1328
      %v1441 = vunpack.c.l.b16 %v1329
      %v1442 = vunpack.c.l.b16 %v1330
      %v1443 = vunpack.c.l.b16 %v1331
      %v1444 = vunpack.c.l.b16 %v1332
      %v1445 = vunpack.c.l.b16 %v1333
      %v1446 = vunpack.c.l.b16 %v1334
      %v1447 = vunpack.c.l.b16 %v1335
      %v1448 = vunpack.c.l.b16 %v1336
      %v1449 = vunpack.c.l.b16 %v1337
      %v1450 = vunpack.c.l.b16 %v1338
      %v1451 = vunpack.c.l.b16 %v1339
      %v1452 = vunpack.c.l.b16 %v1340
      %v1453 = vunpack.c.l.b16 %v1341
      %v1454 = vunpack.c.l.b16 %v1342
      %v1455 = vunpack.c.l.b16 %v1343
      %v1456 = vunpack.c.l.b16 %v1344
      %v1457 = vunpack.c.l.b16 %v1345
      %v1458 = vunpack.c.l.b16 %v1346
      %v1459 = vunpack.c.l.b16 %v1347
      %v1460 = vunpack.c.l.b16 %v1348
      %v1461 = vunpack.c.l.b16 %v1349
      %v1462 = vunpack.c.l.b16 %v1350
      %v1463 = vunpack.c.l.b16 %v1351
      %v1464 = vunpack.c.l.b16 %v1352
      %v1465 = vunpack.c.l.b16 %v1353
      %v1466 = vunpack.c.l.b16 %v1354
      %v1467 = vunpack.c.l.b16 %v1355
      %v1468 = vunpack.c.l.b16 %v1356
      %v1469 = vunpack.c.l.b16 %v1357
      %v1470 = vunpack.c.l.b16 %v1358
      %v1471 = vunpack.c.l.b16 %v1359
      %v1472 = vunpack.c.l.b16 %v1360
      %v1473 = vunpack.c.l.b16 %v1361
      %v1474 = vunpack.c.l.b16 %v1362
      %v1475 = vpack.c.b16 %v1439, %v1438
      %v1476 = vpack.c.b16 %v1441, %v1440
      %v1477 = vpack.c.b16 %v1443, %v1442
      %v1478 = vpack.c.b16 %v1445, %v1444
      %v1479 = vpack.c.b16 %v1447, %v1446
      %v1480 = vpack.c.b16 %v1449, %v1448
      %v1481 = vpack.c.b16 %v1451, %v1450
      %v1482 = vpack.c.b16 %v1453, %v1452
      %v1483 = vpack.c.b16 %v1455, %v1454
      %v1484 = vpack.c.b16 %v1457, %v1456
      %v1485 = vpack.c.b16 %v1459, %v1458
      %v1486 = vpack.c.b16 %v1461, %v1460
      %v1487 = vpack.c.b16 %v1463, %v1462
      %v1488 = vpack.c.b16 %v1465, %v1464
      %v1489 = vpack.c.b16 %v1467, %v1466
      %v1490 = vpack.c.b16 %v1469, %v1468
      %v1491 = vpack.c.b16 %v1471, %v1470
      %v1492 = vpack.c.b16 %v1473, %v1472
      %v1493 = vpack.c.b16 %v1474, %v1474
      %vm1494 = vcmask 1046528
      %v1495 = vrot.slane %v1475, 1
      %v1496 = vrot.slane %v1476, 1
      %v1497 = vsel %vm1494, %v1495, %v1496
      %v1498 = vrot.slane %v1477, 1
      %v1499 = vsel %vm1494, %v1496, %v1498
      %v1500 = vrot.slane %v1478, 1
      %v1501 = vsel %vm1494, %v1498, %v1500
      %v1502 = vrot.slane %v1479, 1
      %v1503 = vsel %vm1494, %v1500, %v1502
      %v1504 = vrot.slane %v1480, 1
      %v1505 = vsel %vm1494, %v1502, %v1504
      %v1506 = vrot.slane %v1481, 1
      %v1507 = vsel %vm1494, %v1504, %v1506
      %v1508 = vrot.slane %v1482, 1
      %v1509 = vsel %vm1494, %v1506, %v1508
      %v1510 = vrot.slane %v1483, 1
      %v1511 = vsel %vm1494, %v1508, %v1510
      %v1512 = vrot.slane %v1484, 1
      %v1513 = vsel %vm1494, %v1510, %v1512
      %v1514 = vrot.slane %v1485, 1
      %v1515 = vsel %vm1494, %v1512, %v1514
      %v1516 = vrot.slane %v1486, 1
      %v1517 = vsel %vm1494, %v1514, %v1516
      %v1518 = vrot.slane %v1487, 1
      %v1519 = vsel %vm1494, %v1516, %v1518
      %v1520 = vrot.slane %v1488, 1
      %v1521 = vsel %vm1494, %v1518, %v1520
      %v1522 = vrot.slane %v1489, 1
      %v1523 = vsel %vm1494, %v1520, %v1522
      %v1524 = vrot.slane %v1490, 1
      %v1525 = vsel %vm1494, %v1522, %v1524
      %v1526 = vrot.slane %v1491, 1
      %v1527 = vsel %vm1494, %v1524, %v1526
      %v1528 = vrot.slane %v1492, 1
      %v1529 = vsel %vm1494, %v1526, %v1528
      %v1530 = vrot.slane %v1493, 1
      %v1531 = vsel %vm1494, %v1528, %v1530
      %v1533 = vsel %vm395, %v1497, 0
      %v1536 = vsel %vm395, %v1499, 0
      %v1539 = vsel %vm395, %v1501, 0
      %v1542 = vsel %vm395, %v1503, 0
      %v1545 = vsel %vm395, %v1505, 0
      %v1548 = vsel %vm395, %v1507, 0
      %v1551 = vsel %vm395, %v1509, 0
      %v1554 = vsel %vm395, %v1511, 0
      %v1557 = vsel %vm395, %v1513, 0
      %v1560 = vsel %vm395, %v1515, 0
      %v1563 = vsel %vm395, %v1517, 0
      %v1566 = vsel %vm395, %v1519, 0
      %v1569 = vsel %vm395, %v1521, 0
      %v1572 = vsel %vm395, %v1523, 0
      %v1575 = vsel %vm395, %v1525, 0
      %v1578 = vsel %vm395, %v1527, 0
      %v1581 = vsel %vm395, %v1529, 0
      %v1584 = vsel %vm395, %v1531, 0
      %v1587 = vsel %vm450, %v1400, 0
      %1589 = vmatprep.subr.bf16.mxu0 0
      %1590 = vmatpush1.bf16.msra.mxu0 %v1587
      %1591 = vmatprep.subr.bf16.mxu0 0
      %1592 = vmatpush1.bf16.msra.mxu0 0
      %1593 = vmatprep.subr.bf16.mxu0 0
      %1594 = vmatpush1.bf16.msra.mxu0 0
      %1595 = vmatprep.subr.bf16.mxu0 0
      %1596 = vmatpush1.bf16.msra.mxu0 0
      %1597 = vmatprep.subr.bf16.mxu0 0
      %1598 = vmatpush1.bf16.msra.mxu0 0
      %1599 = vmatprep.subr.bf16.mxu0 0
      %1600 = vmatpush1.bf16.msra.mxu0 0
      %1601 = vmatprep.subr.bf16.mxu0 0
      %1602 = vmatpush1.bf16.msra.mxu0 0
      %1603 = vmatprep.subr.bf16.mxu0 0
      %1604 = vmatpush1.bf16.msra.mxu0 0
      %1605 = vmatprep.subr.bf16.mxu0 0
      %1606 = vmatpush1.bf16.msra.mxu0 0
      %1607 = vmatprep.subr.bf16.mxu0 0
      %1608 = vmatpush1.bf16.msra.mxu0 0
      %1609 = vmatprep.subr.bf16.mxu0 0
      %1610 = vmatpush1.bf16.msra.mxu0 0
      %1611 = vmatprep.subr.bf16.mxu0 0
      %1612 = vmatpush1.bf16.msra.mxu0 0
      %1613 = vmatprep.subr.bf16.mxu0 0
      %1614 = vmatpush1.bf16.msra.mxu0 0
      %1615 = vmatprep.subr.bf16.mxu0 0
      %1616 = vmatpush1.bf16.msra.mxu0 0
      %1617 = vmatprep.subr.bf16.mxu0 0
      %1618 = vmatpush1.bf16.msra.mxu0 0
      %1619 = vmatprep.subr.bf16.mxu0 0
      %1620 = vmatpush1.bf16.msra.mxu0 0
      %1621 = vmatprep.mubr.bf16.mxu0 0
      %1622 = vmatmul.mubr.bf16.gmra.mrb[0].mxu0 %v1533
      %v1623 = vpop.f32.mrb[0].mxu0
      %v1624 = vadd.f32 0.0, %v1623
      %v1625 = vpop.f32.mrb[0].mxu0
      %v1626 = vpop.f32.mrb[0].mxu0
      %v1627 = vadd.f32 0.0, %v1626
      %v1628 = vpop.f32.mrb[0].mxu0
      %1629 = vmatprep.mubr.bf16.mxu0 0
      %1630 = vmatmul.mubr.bf16.gmra.mrb[0].mxu0 %v1536
      %v1631 = vpop.f32.mrb[0].mxu0
      %v1632 = vadd.f32 0.0, %v1631
      %v1633 = vpop.f32.mrb[0].mxu0
      %v1634 = vpop.f32.mrb[0].mxu0
      %v1635 = vadd.f32 0.0, %v1634
      %v1636 = vpop.f32.mrb[0].mxu0
      %1637 = vmatprep.mubr.bf16.mxu0 0
      %1638 = vmatmul.mubr.bf16.gmra.mrb[0].mxu0 %v1539
      %v1639 = vpop.f32.mrb[0].mxu0
      %v1640 = vadd.f32 0.0, %v1639
      %v1641 = vpop.f32.mrb[0].mxu0
      %v1642 = vpop.f32.mrb[0].mxu0
      %v1643 = vadd.f32 0.0, %v1642
      %v1644 = vpop.f32.mrb[0].mxu0
      %1645 = vmatprep.mubr.bf16.mxu0 0
      %1646 = vmatmul.mubr.bf16.gmra.mrb[0].mxu0 %v1542
      %v1647 = vpop.f32.mrb[0].mxu0
      %v1648 = vadd.f32 0.0, %v1647
      %v1649 = vpop.f32.mrb[0].mxu0
      %v1650 = vpop.f32.mrb[0].mxu0
      %v1651 = vadd.f32 0.0, %v1650
      %v1652 = vpop.f32.mrb[0].mxu0
      %1653 = vmatprep.mubr.bf16.mxu0 0
      %1654 = vmatmul.mubr.bf16.gmra.mrb[0].mxu0 %v1545
      %v1655 = vpop.f32.mrb[0].mxu0
      %v1656 = vadd.f32 0.0, %v1655
      %v1657 = vpop.f32.mrb[0].mxu0
      %v1658 = vpop.f32.mrb[0].mxu0
      %v1659 = vadd.f32 0.0, %v1658
      %v1660 = vpop.f32.mrb[0].mxu0
      %1661 = vmatprep.mubr.bf16.mxu0 0
      %1662 = vmatmul.mubr.bf16.gmra.mrb[0].mxu0 %v1548
      %v1663 = vpop.f32.mrb[0].mxu0
      %v1664 = vadd.f32 0.0, %v1663
      %v1665 = vpop.f32.mrb[0].mxu0
      %v1666 = vpop.f32.mrb[0].mxu0
      %v1667 = vadd.f32 0.0, %v1666
      %v1668 = vpop.f32.mrb[0].mxu0
      %1669 = vmatprep.mubr.bf16.mxu0 0
      %1670 = vmatmul.mubr.bf16.gmra.mrb[0].mxu0 %v1551
      %v1671 = vpop.f32.mrb[0].mxu0
      %v1672 = vadd.f32 0.0, %v1671
      %v1673 = vpop.f32.mrb[0].mxu0
      %v1674 = vpop.f32.mrb[0].mxu0
      %v1675 = vadd.f32 0.0, %v1674
      %v1676 = vpop.f32.mrb[0].mxu0
      %1677 = vmatprep.mubr.bf16.mxu0 0
      %1678 = vmatmul.mubr.bf16.gmra.mrb[0].mxu0 %v1554
      %v1679 = vpop.f32.mrb[0].mxu0
      %v1680 = vadd.f32 0.0, %v1679
      %v1681 = vpop.f32.mrb[0].mxu0
      %v1682 = vpop.f32.mrb[0].mxu0
      %v1683 = vadd.f32 0.0, %v1682
      %v1684 = vpop.f32.mrb[0].mxu0
      %1685 = vmatprep.mubr.bf16.mxu0 0
      %1686 = vmatmul.mubr.bf16.gmra.mrb[0].mxu0 %v1557
      %v1687 = vpop.f32.mrb[0].mxu0
      %v1688 = vadd.f32 0.0, %v1687
      %v1689 = vpop.f32.mrb[0].mxu0
      %v1690 = vpop.f32.mrb[0].mxu0
      %v1691 = vadd.f32 0.0, %v1690
      %v1692 = vpop.f32.mrb[0].mxu0
      %1693 = vmatprep.mubr.bf16.mxu0 0
      %1694 = vmatmul.mubr.bf16.gmra.mrb[0].mxu0 %v1560
      %v1695 = vpop.f32.mrb[0].mxu0
      %v1696 = vadd.f32 0.0, %v1695
      %v1697 = vpop.f32.mrb[0].mxu0
      %v1698 = vpop.f32.mrb[0].mxu0
      %v1699 = vadd.f32 0.0, %v1698
      %v1700 = vpop.f32.mrb[0].mxu0
      %1701 = vmatprep.mubr.bf16.mxu0 0
      %1702 = vmatmul.mubr.bf16.gmra.mrb[0].mxu0 %v1563
      %v1703 = vpop.f32.mrb[0].mxu0
      %v1704 = vadd.f32 0.0, %v1703
      %v1705 = vpop.f32.mrb[0].mxu0
      %v1706 = vpop.f32.mrb[0].mxu0
      %v1707 = vadd.f32 0.0, %v1706
      %v1708 = vpop.f32.mrb[0].mxu0
      %1709 = vmatprep.mubr.bf16.mxu0 0
      %1710 = vmatmul.mubr.bf16.gmra.mrb[0].mxu0 %v1566
      %v1711 = vpop.f32.mrb[0].mxu0
      %v1712 = vadd.f32 0.0, %v1711
      %v1713 = vpop.f32.mrb[0].mxu0
      %v1714 = vpop.f32.mrb[0].mxu0
      %v1715 = vadd.f32 0.0, %v1714
      %v1716 = vpop.f32.mrb[0].mxu0
      %1717 = vmatprep.mubr.bf16.mxu0 0
      %1718 = vmatmul.mubr.bf16.gmra.mrb[0].mxu0 %v1569
      %v1719 = vpop.f32.mrb[0].mxu0
      %v1720 = vadd.f32 0.0, %v1719
      %v1721 = vpop.f32.mrb[0].mxu0
      %v1722 = vpop.f32.mrb[0].mxu0
      %v1723 = vadd.f32 0.0, %v1722
      %v1724 = vpop.f32.mrb[0].mxu0
      %1725 = vmatprep.mubr.bf16.mxu0 0
      %1726 = vmatmul.mubr.bf16.gmra.mrb[0].mxu0 %v1572
      %v1727 = vpop.f32.mrb[0].mxu0
      %v1728 = vadd.f32 0.0, %v1727
      %v1729 = vpop.f32.mrb[0].mxu0
      %v1730 = vpop.f32.mrb[0].mxu0
      %v1731 = vadd.f32 0.0, %v1730
      %v1732 = vpop.f32.mrb[0].mxu0
      %1733 = vmatprep.mubr.bf16.mxu0 0
      %1734 = vmatmul.mubr.bf16.gmra.mrb[0].mxu0 %v1575
      %v1735 = vpop.f32.mrb[0].mxu0
      %v1736 = vadd.f32 0.0, %v1735
      %v1737 = vpop.f32.mrb[0].mxu0
      %v1738 = vpop.f32.mrb[0].mxu0
      %v1739 = vadd.f32 0.0, %v1738
      %v1740 = vpop.f32.mrb[0].mxu0
      %1741 = vmatprep.mubr.bf16.mxu0 0
      %1742 = vmatmul.mubr.bf16.gmra.mrb[0].mxu0 %v1578
      %v1743 = vpop.f32.mrb[0].mxu0
      %v1744 = vadd.f32 0.0, %v1743
      %v1745 = vpop.f32.mrb[0].mxu0
      %v1746 = vpop.f32.mrb[0].mxu0
      %v1747 = vadd.f32 0.0, %v1746
      %v1748 = vpop.f32.mrb[0].mxu0
      %1749 = vmatprep.mubr.bf16.mxu0 0
      %1750 = vmatmul.mubr.bf16.gmra.mrb[0].mxu0 %v1581
      %v1751 = vpop.f32.mrb[0].mxu0
      %v1752 = vadd.f32 0.0, %v1751
      %v1753 = vpop.f32.mrb[0].mxu0
      %v1754 = vpop.f32.mrb[0].mxu0
      %v1755 = vadd.f32 0.0, %v1754
      %v1756 = vpop.f32.mrb[0].mxu0
      %1757 = vmatprep.mubr.bf16.mxu0 0
      %1758 = vmatmul.mubr.bf16.gmra.mrb[0].mxu0 %v1584
      %v1759 = vpop.f32.mrb[0].mxu0
      %v1760 = vadd.f32 0.0, %v1759
      %v1761 = vpop.f32.mrb[0].mxu0
      %v1762 = vpop.f32.mrb[0].mxu0
      %v1763 = vadd.f32 0.0, %v1762
      %v1764 = vpop.f32.mrb[0].mxu0
      %1765 = vdwg.mxu0
      %v1766 = vadd.f32 %v1363, %v1624
      %v1767 = vadd.f32 %v1364, %v1627
      %v1768 = vadd.f32 %v1365, %v1632
      %v1769 = vadd.f32 %v1366, %v1635
      %v1770 = vadd.f32 %v1367, %v1640
      %v1771 = vadd.f32 %v1368, %v1643
      %v1772 = vadd.f32 %v1369, %v1648
      %v1773 = vadd.f32 %v1370, %v1651
      %v1774 = vadd.f32 %v1371, %v1656
      %v1775 = vadd.f32 %v1372, %v1659
      %v1776 = vadd.f32 %v1373, %v1664
      %v1777 = vadd.f32 %v1374, %v1667
      %v1778 = vadd.f32 %v1375, %v1672
      %v1779 = vadd.f32 %v1376, %v1675
      %v1780 = vadd.f32 %v1377, %v1680
      %v1781 = vadd.f32 %v1378, %v1683
      %v1782 = vadd.f32 %v1379, %v1688
      %v1783 = vadd.f32 %v1380, %v1691
      %v1784 = vadd.f32 %v1381, %v1696
      %v1785 = vadd.f32 %v1382, %v1699
      %v1786 = vadd.f32 %v1383, %v1704
      %v1787 = vadd.f32 %v1384, %v1707
      %v1788 = vadd.f32 %v1385, %v1712
      %v1789 = vadd.f32 %v1386, %v1715
      %v1790 = vadd.f32 %v1387, %v1720
      %v1791 = vadd.f32 %v1388, %v1723
      %v1792 = vadd.f32 %v1389, %v1728
      %v1793 = vadd.f32 %v1390, %v1731
      %v1794 = vadd.f32 %v1391, %v1736
      %v1795 = vadd.f32 %v1392, %v1739
      %v1796 = vadd.f32 %v1393, %v1744
      %v1797 = vadd.f32 %v1394, %v1747
      %v1798 = vadd.f32 %v1395, %v1752
      %v1799 = vadd.f32 %v1396, %v1755
      %v1800 = vadd.f32 %v1397, %v1760
      %v1801 = vadd.f32 %v1398, %v1763
      %1802 = vst.msk [vmem:[#allocation2] sm:$0xff] %vm195, %v1766
      %1803 = vst.msk [vmem:[#allocation2 + $0x8] sm:$0xff] %vm195, %v1767
      %1804 = vst.msk [vmem:[#allocation2 + $0x10] sm:$0xff] %vm195, %v1768
      %1805 = vst.msk [vmem:[#allocation2 + $0x18] sm:$0xff] %vm195, %v1769
      %1806 = vst.msk [vmem:[#allocation2 + $0x20] sm:$0xff] %vm195, %v1770
      %1807 = vst.msk [vmem:[#allocation2 + $0x28] sm:$0xff] %vm195, %v1771
      %1808 = vst.msk [vmem:[#allocation2 + $0x30] sm:$0xff] %vm195, %v1772
      %1809 = vst.msk [vmem:[#allocation2 + $0x38] sm:$0xff] %vm195, %v1773
      %1810 = vst.msk [vmem:[#allocation2 + $0x40] sm:$0xff] %vm195, %v1774
      %1811 = vst.msk [vmem:[#allocation2 + $0x48] sm:$0xff] %vm195, %v1775
      %1812 = vst.msk [vmem:[#allocation2 + $0x50] sm:$0xff] %vm195, %v1776
      %1813 = vst.msk [vmem:[#allocation2 + $0x58] sm:$0xff] %vm195, %v1777
      %1814 = vst.msk [vmem:[#allocation2 + $0x60] sm:$0xff] %vm195, %v1778
      %1815 = vst.msk [vmem:[#allocation2 + $0x68] sm:$0xff] %vm195, %v1779
      %1816 = vst.msk [vmem:[#allocation2 + $0x70] sm:$0xff] %vm195, %v1780
      %1817 = vst.msk [vmem:[#allocation2 + $0x78] sm:$0xff] %vm195, %v1781
      %1818 = vst.msk [vmem:[#allocation2 + $0x80] sm:$0xff] %vm195, %v1782
      %1819 = vst.msk [vmem:[#allocation2 + $0x88] sm:$0xff] %vm195, %v1783
      %1820 = vst.msk [vmem:[#allocation2 + $0x90] sm:$0xff] %vm195, %v1784
      %1821 = vst.msk [vmem:[#allocation2 + $0x98] sm:$0xff] %vm195, %v1785
      %1822 = vst.msk [vmem:[#allocation2 + $0xa0] sm:$0xff] %vm195, %v1786
      %1823 = vst.msk [vmem:[#allocation2 + $0xa8] sm:$0xff] %vm195, %v1787
      %1824 = vst.msk [vmem:[#allocation2 + $0xb0] sm:$0xff] %vm195, %v1788
      %1825 = vst.msk [vmem:[#allocation2 + $0xb8] sm:$0xff] %vm195, %v1789
      %1826 = vst.msk [vmem:[#allocation2 + $0xc0] sm:$0xff] %vm195, %v1790
      %1827 = vst.msk [vmem:[#allocation2 + $0xc8] sm:$0xff] %vm195, %v1791
      %1828 = vst.msk [vmem:[#allocation2 + $0xd0] sm:$0xff] %vm195, %v1792
      %1829 = vst.msk [vmem:[#allocation2 + $0xd8] sm:$0xff] %vm195, %v1793
      %1830 = vst.msk [vmem:[#allocation2 + $0xe0] sm:$0xff] %vm195, %v1794
      %1831 = vst.msk [vmem:[#allocation2 + $0xe8] sm:$0xff] %vm195, %v1795
      %1832 = vst.msk [vmem:[#allocation2 + $0xf0] sm:$0xff] %vm195, %v1796
      %1833 = vst.msk [vmem:[#allocation2 + $0xf8] sm:$0xff] %vm195, %v1797
      %1834 = vst.msk [vmem:[#allocation2 + $0x100] sm:$0xff] %vm195, %v1798
      %1835 = vst.msk [vmem:[#allocation2 + $0x108] sm:$0xff] %vm195, %v1799
      %1836 = vst.msk [vmem:[#allocation2 + $0x110] sm:$0xff] %vm195, %v1800
      %1837 = vst.msk [vmem:[#allocation2 + $0x118] sm:$0xff] %vm195, %v1801
      %v1838 = vld [vmem:[%s183 + $0x8] sm:$0xe]
      %v1839 = vld [vmem:[%s183 + $0xc] sm:$0xf]
      %v1840 = vld [vmem:[%s183 + $0x10] sm:$0xf]
      %v1841 = vld [vmem:[%s183 + $0x14] sm:$0xf]
      %v1842 = vld [vmem:[%s183 + $0x18] sm:$0xf]
      %v1843 = vld [vmem:[%s183 + $0x1c] sm:$0xf]
      %v1844 = vld [vmem:[%s183 + $0x20] sm:$0xf]
      %v1845 = vld [vmem:[%s183 + $0x24] sm:$0xf]
      %v1846 = vld [vmem:[%s183 + $0x28] sm:$0xf]
      %v1847 = vld [vmem:[%s183 + $0x2c] sm:$0xf]
      %v1848 = vld [vmem:[%s183 + $0x30] sm:$0xf]
      %v1849 = vld [vmem:[%s183 + $0x34] sm:$0xf]
      %v1850 = vld [vmem:[%s183 + $0x38] sm:$0xf]
      %v1851 = vld [vmem:[%s183 + $0x3c] sm:$0xf]
      %v1852 = vld [vmem:[%s183 + $0x40] sm:$0xf]
      %v1853 = vld [vmem:[%s183 + $0x44] sm:$0xf]
      %v1854 = vld [vmem:[%s183 + $0x48] sm:$0xf]
      %v1855 = vld [vmem:[%s183 + $0x4c] sm:$0xf]
      %v1856 = vld [vmem:[%s183 + $0x50] sm:$0xf]
      %v1857 = vld [vmem:[%s183 + $0x54] sm:$0xf]
      %v1858 = vld [vmem:[%s183 + $0x58] sm:$0xf]
      %v1859 = vld [vmem:[%s183 + $0x5c] sm:$0xf]
      %v1860 = vld [vmem:[%s183 + $0x60] sm:$0xf]
      %v1861 = vld [vmem:[%s183 + $0x64] sm:$0xf]
      %v1862 = vld [vmem:[%s183 + $0x68] sm:$0xf]
      %v1863 = vld [vmem:[%s183 + $0x6c] sm:$0xf]
      %v1864 = vld [vmem:[%s183 + $0x70] sm:$0xf]
      %v1865 = vld [vmem:[%s183 + $0x74] sm:$0xf]
      %v1866 = vld [vmem:[%s183 + $0x78] sm:$0xf]
      %v1867 = vld [vmem:[%s183 + $0x7c] sm:$0xf]
      %v1868 = vld [vmem:[%s183 + $0x80] sm:$0xf]
      %v1869 = vld [vmem:[%s183 + $0x84] sm:$0xf]
      %v1870 = vld [vmem:[%s183 + $0x88] sm:$0xf]
      %v1871 = vld [vmem:[%s183 + $0x8c] sm:$0xf]
      %v1872 = vld [vmem:[%s183 + $0x90] sm:$0xf]
      %v1873 = vld [vmem:[%s183 + $0x94] sm:$0xf]
      %v1874 = vld [vmem:[%s183 + $0x98] sm:$0x1]
      %v1875 = vld [vmem:[#allocation2] sm:$0xff]
      %v1876 = vld [vmem:[#allocation2 + $0x8] sm:$0xff]
      %v1877 = vld [vmem:[#allocation2 + $0x10] sm:$0xff]
      %v1878 = vld [vmem:[#allocation2 + $0x18] sm:$0xff]
      %v1879 = vld [vmem:[#allocation2 + $0x20] sm:$0xff]
      %v1880 = vld [vmem:[#allocation2 + $0x28] sm:$0xff]
      %v1881 = vld [vmem:[#allocation2 + $0x30] sm:$0xff]
      %v1882 = vld [vmem:[#allocation2 + $0x38] sm:$0xff]
      %v1883 = vld [vmem:[#allocation2 + $0x40] sm:$0xff]
      %v1884 = vld [vmem:[#allocation2 + $0x48] sm:$0xff]
      %v1885 = vld [vmem:[#allocation2 + $0x50] sm:$0xff]
      %v1886 = vld [vmem:[#allocation2 + $0x58] sm:$0xff]
      %v1887 = vld [vmem:[#allocation2 + $0x60] sm:$0xff]
      %v1888 = vld [vmem:[#allocation2 + $0x68] sm:$0xff]
      %v1889 = vld [vmem:[#allocation2 + $0x70] sm:$0xff]
      %v1890 = vld [vmem:[#allocation2 + $0x78] sm:$0xff]
      %v1891 = vld [vmem:[#allocation2 + $0x80] sm:$0xff]
      %v1892 = vld [vmem:[#allocation2 + $0x88] sm:$0xff]
      %v1893 = vld [vmem:[#allocation2 + $0x90] sm:$0xff]
      %v1894 = vld [vmem:[#allocation2 + $0x98] sm:$0xff]
      %v1895 = vld [vmem:[#allocation2 + $0xa0] sm:$0xff]
      %v1896 = vld [vmem:[#allocation2 + $0xa8] sm:$0xff]
      %v1897 = vld [vmem:[#allocation2 + $0xb0] sm:$0xff]
      %v1898 = vld [vmem:[#allocation2 + $0xb8] sm:$0xff]
      %v1899 = vld [vmem:[#allocation2 + $0xc0] sm:$0xff]
      %v1900 = vld [vmem:[#allocation2 + $0xc8] sm:$0xff]
      %v1901 = vld [vmem:[#allocation2 + $0xd0] sm:$0xff]
      %v1902 = vld [vmem:[#allocation2 + $0xd8] sm:$0xff]
      %v1903 = vld [vmem:[#allocation2 + $0xe0] sm:$0xff]
      %v1904 = vld [vmem:[#allocation2 + $0xe8] sm:$0xff]
      %v1905 = vld [vmem:[#allocation2 + $0xf0] sm:$0xff]
      %v1906 = vld [vmem:[#allocation2 + $0xf8] sm:$0xff]
      %v1907 = vld [vmem:[#allocation2 + $0x100] sm:$0xff]
      %v1908 = vld [vmem:[#allocation2 + $0x108] sm:$0xff]
      %v1909 = vld [vmem:[#allocation2 + $0x110] sm:$0xff]
      %v1910 = vld [vmem:[#allocation2 + $0x118] sm:$0xff]
      %s1911 = scalar_lea.vmem %s1, 6
      %v1912 = vld [vmem:[%s1911] sm:$0x3]
      %v1950 = vunpack.c.l.b16 %v1838
      %v1951 = vunpack.c.l.b16 %v1839
      %v1952 = vunpack.c.l.b16 %v1840
      %v1953 = vunpack.c.l.b16 %v1841
      %v1954 = vunpack.c.l.b16 %v1842
      %v1955 = vunpack.c.l.b16 %v1843
      %v1956 = vunpack.c.l.b16 %v1844
      %v1957 = vunpack.c.l.b16 %v1845
      %v1958 = vunpack.c.l.b16 %v1846
      %v1959 = vunpack.c.l.b16 %v1847
      %v1960 = vunpack.c.l.b16 %v1848
      %v1961 = vunpack.c.l.b16 %v1849
      %v1962 = vunpack.c.l.b16 %v1850
      %v1963 = vunpack.c.l.b16 %v1851
      %v1964 = vunpack.c.l.b16 %v1852
      %v1965 = vunpack.c.l.b16 %v1853
      %v1966 = vunpack.c.l.b16 %v1854
      %v1967 = vunpack.c.l.b16 %v1855
      %v1968 = vunpack.c.l.b16 %v1856
      %v1969 = vunpack.c.l.b16 %v1857
      %v1970 = vunpack.c.l.b16 %v1858
      %v1971 = vunpack.c.l.b16 %v1859
      %v1972 = vunpack.c.l.b16 %v1860
      %v1973 = vunpack.c.l.b16 %v1861
      %v1974 = vunpack.c.l.b16 %v1862
      %v1975 = vunpack.c.l.b16 %v1863
      %v1976 = vunpack.c.l.b16 %v1864
      %v1977 = vunpack.c.l.b16 %v1865
      %v1978 = vunpack.c.l.b16 %v1866
      %v1979 = vunpack.c.l.b16 %v1867
      %v1980 = vunpack.c.l.b16 %v1868
      %v1981 = vunpack.c.l.b16 %v1869
      %v1982 = vunpack.c.l.b16 %v1870
      %v1983 = vunpack.c.l.b16 %v1871
      %v1984 = vunpack.c.l.b16 %v1872
      %v1985 = vunpack.c.l.b16 %v1873
      %v1986 = vunpack.c.l.b16 %v1874
      %v1987 = vpack.c.b16 %v1951, %v1950
      %v1988 = vpack.c.b16 %v1953, %v1952
      %v1989 = vpack.c.b16 %v1955, %v1954
      %v1990 = vpack.c.b16 %v1957, %v1956
      %v1991 = vpack.c.b16 %v1959, %v1958
      %v1992 = vpack.c.b16 %v1961, %v1960
      %v1993 = vpack.c.b16 %v1963, %v1962
      %v1994 = vpack.c.b16 %v1965, %v1964
      %v1995 = vpack.c.b16 %v1967, %v1966
      %v1996 = vpack.c.b16 %v1969, %v1968
      %v1997 = vpack.c.b16 %v1971, %v1970
      %v1998 = vpack.c.b16 %v1973, %v1972
      %v1999 = vpack.c.b16 %v1975, %v1974
      %v2000 = vpack.c.b16 %v1977, %v1976
      %v2001 = vpack.c.b16 %v1979, %v1978
      %v2002 = vpack.c.b16 %v1981, %v1980
      %v2003 = vpack.c.b16 %v1983, %v1982
      %v2004 = vpack.c.b16 %v1985, %v1984
      %v2005 = vpack.c.b16 %v1986, %v1986
      %v2006 = vrot.slane %v1987, 1
      %v2007 = vrot.slane %v1988, 1
      %v2008 = vsel %vm1494, %v2006, %v2007
      %v2009 = vrot.slane %v1989, 1
      %v2010 = vsel %vm1494, %v2007, %v2009
      %v2011 = vrot.slane %v1990, 1
      %v2012 = vsel %vm1494, %v2009, %v2011
      %v2013 = vrot.slane %v1991, 1
      %v2014 = vsel %vm1494, %v2011, %v2013
      %v2015 = vrot.slane %v1992, 1
      %v2016 = vsel %vm1494, %v2013, %v2015
      %v2017 = vrot.slane %v1993, 1
      %v2018 = vsel %vm1494, %v2015, %v2017
      %v2019 = vrot.slane %v1994, 1
      %v2020 = vsel %vm1494, %v2017, %v2019
      %v2021 = vrot.slane %v1995, 1
      %v2022 = vsel %vm1494, %v2019, %v2021
      %v2023 = vrot.slane %v1996, 1
      %v2024 = vsel %vm1494, %v2021, %v2023
      %v2025 = vrot.slane %v1997, 1
      %v2026 = vsel %vm1494, %v2023, %v2025
      %v2027 = vrot.slane %v1998, 1
      %v2028 = vsel %vm1494, %v2025, %v2027
      %v2029 = vrot.slane %v1999, 1
      %v2030 = vsel %vm1494, %v2027, %v2029
      %v2031 = vrot.slane %v2000, 1
      %v2032 = vsel %vm1494, %v2029, %v2031
      %v2033 = vrot.slane %v2001, 1
      %v2034 = vsel %vm1494, %v2031, %v2033
      %v2035 = vrot.slane %v2002, 1
      %v2036 = vsel %vm1494, %v2033, %v2035
      %v2037 = vrot.slane %v2003, 1
      %v2038 = vsel %vm1494, %v2035, %v2037
      %v2039 = vrot.slane %v2004, 1
      %v2040 = vsel %vm1494, %v2037, %v2039
      %v2041 = vrot.slane %v2005, 1
      %v2042 = vsel %vm1494, %v2039, %v2041
      %v2044 = vsel %vm395, %v2008, 0
      %v2047 = vsel %vm395, %v2010, 0
      %v2050 = vsel %vm395, %v2012, 0
      %v2053 = vsel %vm395, %v2014, 0
      %v2056 = vsel %vm395, %v2016, 0
      %v2059 = vsel %vm395, %v2018, 0
      %v2062 = vsel %vm395, %v2020, 0
      %v2065 = vsel %vm395, %v2022, 0
      %v2068 = vsel %vm395, %v2024, 0
      %v2071 = vsel %vm395, %v2026, 0
      %v2074 = vsel %vm395, %v2028, 0
      %v2077 = vsel %vm395, %v2030, 0
      %v2080 = vsel %vm395, %v2032, 0
      %v2083 = vsel %vm395, %v2034, 0
      %v2086 = vsel %vm395, %v2036, 0
      %v2089 = vsel %vm395, %v2038, 0
      %v2092 = vsel %vm395, %v2040, 0
      %v2095 = vsel %vm395, %v2042, 0
      %v2098 = vsel %vm450, %v1912, 0
      %2100 = vmatprep.subr.bf16.mxu0 0
      %2101 = vmatpush1.bf16.msra.mxu0 %v2098
      %2102 = vmatprep.subr.bf16.mxu0 0
      %2103 = vmatpush1.bf16.msra.mxu0 0
      %2104 = vmatprep.subr.bf16.mxu0 0
      %2105 = vmatpush1.bf16.msra.mxu0 0
      %2106 = vmatprep.subr.bf16.mxu0 0
      %2107 = vmatpush1.bf16.msra.mxu0 0
      %2108 = vmatprep.subr.bf16.mxu0 0
      %2109 = vmatpush1.bf16.msra.mxu0 0
      %2110 = vmatprep.subr.bf16.mxu0 0
      %2111 = vmatpush1.bf16.msra.mxu0 0
      %2112 = vmatprep.subr.bf16.mxu0 0
      %2113 = vmatpush1.bf16.msra.mxu0 0
      %2114 = vmatprep.subr.bf16.mxu0 0
      %2115 = vmatpush1.bf16.msra.mxu0 0
      %2116 = vmatprep.subr.bf16.mxu0 0
      %2117 = vmatpush1.bf16.msra.mxu0 0
      %2118 = vmatprep.subr.bf16.mxu0 0
      %2119 = vmatpush1.bf16.msra.mxu0 0
      %2120 = vmatprep.subr.bf16.mxu0 0
      %2121 = vmatpush1.bf16.msra.mxu0 0
      %2122 = vmatprep.subr.bf16.mxu0 0
      %2123 = vmatpush1.bf16.msra.mxu0 0
      %2124 = vmatprep.subr.bf16.mxu0 0
      %2125 = vmatpush1.bf16.msra.mxu0 0
      %2126 = vmatprep.subr.bf16.mxu0 0
      %2127 = vmatpush1.bf16.msra.mxu0 0
      %2128 = vmatprep.subr.bf16.mxu0 0
      %2129 = vmatpush1.bf16.msra.mxu0 0
      %2130 = vmatprep.subr.bf16.mxu0 0
      %2131 = vmatpush1.bf16.msra.mxu0 0
      %2132 = vmatprep.mubr.bf16.mxu0 0
      %2133 = vmatmul.mubr.bf16.gmra.mrb[0].mxu0 %v2044
      %v2134 = vpop.f32.mrb[0].mxu0
      %v2135 = vadd.f32 0.0, %v2134
      %v2136 = vpop.f32.mrb[0].mxu0
      %v2137 = vpop.f32.mrb[0].mxu0
      %v2138 = vadd.f32 0.0, %v2137
      %v2139 = vpop.f32.mrb[0].mxu0
      %2140 = vmatprep.mubr.bf16.mxu0 0
      %2141 = vmatmul.mubr.bf16.gmra.mrb[0].mxu0 %v2047
      %v2142 = vpop.f32.mrb[0].mxu0
      %v2143 = vadd.f32 0.0, %v2142
      %v2144 = vpop.f32.mrb[0].mxu0
      %v2145 = vpop.f32.mrb[0].mxu0
      %v2146 = vadd.f32 0.0, %v2145
      %v2147 = vpop.f32.mrb[0].mxu0
      %2148 = vmatprep.mubr.bf16.mxu0 0
      %2149 = vmatmul.mubr.bf16.gmra.mrb[0].mxu0 %v2050
      %v2150 = vpop.f32.mrb[0].mxu0
      %v2151 = vadd.f32 0.0, %v2150
      %v2152 = vpop.f32.mrb[0].mxu0
      %v2153 = vpop.f32.mrb[0].mxu0
      %v2154 = vadd.f32 0.0, %v2153
      %v2155 = vpop.f32.mrb[0].mxu0
      %2156 = vmatprep.mubr.bf16.mxu0 0
      %2157 = vmatmul.mubr.bf16.gmra.mrb[0].mxu0 %v2053
      %v2158 = vpop.f32.mrb[0].mxu0
      %v2159 = vadd.f32 0.0, %v2158
      %v2160 = vpop.f32.mrb[0].mxu0
      %v2161 = vpop.f32.mrb[0].mxu0
      %v2162 = vadd.f32 0.0, %v2161
      %v2163 = vpop.f32.mrb[0].mxu0
      %2164 = vmatprep.mubr.bf16.mxu0 0
      %2165 = vmatmul.mubr.bf16.gmra.mrb[0].mxu0 %v2056
      %v2166 = vpop.f32.mrb[0].mxu0
      %v2167 = vadd.f32 0.0, %v2166
      %v2168 = vpop.f32.mrb[0].mxu0
      %v2169 = vpop.f32.mrb[0].mxu0
      %v2170 = vadd.f32 0.0, %v2169
      %v2171 = vpop.f32.mrb[0].mxu0
      %2172 = vmatprep.mubr.bf16.mxu0 0
      %2173 = vmatmul.mubr.bf16.gmra.mrb[0].mxu0 %v2059
      %v2174 = vpop.f32.mrb[0].mxu0
      %v2175 = vadd.f32 0.0, %v2174
      %v2176 = vpop.f32.mrb[0].mxu0
      %v2177 = vpop.f32.mrb[0].mxu0
      %v2178 = vadd.f32 0.0, %v2177
      %v2179 = vpop.f32.mrb[0].mxu0
      %2180 = vmatprep.mubr.bf16.mxu0 0
      %2181 = vmatmul.mubr.bf16.gmra.mrb[0].mxu0 %v2062
      %v2182 = vpop.f32.mrb[0].mxu0
      %v2183 = vadd.f32 0.0, %v2182
      %v2184 = vpop.f32.mrb[0].mxu0
      %v2185 = vpop.f32.mrb[0].mxu0
      %v2186 = vadd.f32 0.0, %v2185
      %v2187 = vpop.f32.mrb[0].mxu0
      %2188 = vmatprep.mubr.bf16.mxu0 0
      %2189 = vmatmul.mubr.bf16.gmra.mrb[0].mxu0 %v2065
      %v2190 = vpop.f32.mrb[0].mxu0
      %v2191 = vadd.f32 0.0, %v2190
      %v2192 = vpop.f32.mrb[0].mxu0
      %v2193 = vpop.f32.mrb[0].mxu0
      %v2194 = vadd.f32 0.0, %v2193
      %v2195 = vpop.f32.mrb[0].mxu0
      %2196 = vmatprep.mubr.bf16.mxu0 0
      %2197 = vmatmul.mubr.bf16.gmra.mrb[0].mxu0 %v2068
      %v2198 = vpop.f32.mrb[0].mxu0
      %v2199 = vadd.f32 0.0, %v2198
      %v2200 = vpop.f32.mrb[0].mxu0
      %v2201 = vpop.f32.mrb[0].mxu0
      %v2202 = vadd.f32 0.0, %v2201
      %v2203 = vpop.f32.mrb[0].mxu0
      %2204 = vmatprep.mubr.bf16.mxu0 0
      %2205 = vmatmul.mubr.bf16.gmra.mrb[0].mxu0 %v2071
      %v2206 = vpop.f32.mrb[0].mxu0
      %v2207 = vadd.f32 0.0, %v2206
      %v2208 = vpop.f32.mrb[0].mxu0
      %v2209 = vpop.f32.mrb[0].mxu0
      %v2210 = vadd.f32 0.0, %v2209
      %v2211 = vpop.f32.mrb[0].mxu0
      %2212 = vmatprep.mubr.bf16.mxu0 0
      %2213 = vmatmul.mubr.bf16.gmra.mrb[0].mxu0 %v2074
      %v2214 = vpop.f32.mrb[0].mxu0
      %v2215 = vadd.f32 0.0, %v2214
      %v2216 = vpop.f32.mrb[0].mxu0
      %v2217 = vpop.f32.mrb[0].mxu0
      %v2218 = vadd.f32 0.0, %v2217
      %v2219 = vpop.f32.mrb[0].mxu0
      %2220 = vmatprep.mubr.bf16.mxu0 0
      %2221 = vmatmul.mubr.bf16.gmra.mrb[0].mxu0 %v2077
      %v2222 = vpop.f32.mrb[0].mxu0
      %v2223 = vadd.f32 0.0, %v2222
      %v2224 = vpop.f32.mrb[0].mxu0
      %v2225 = vpop.f32.mrb[0].mxu0
      %v2226 = vadd.f32 0.0, %v2225
      %v2227 = vpop.f32.mrb[0].mxu0
      %2228 = vmatprep.mubr.bf16.mxu0 0
      %2229 = vmatmul.mubr.bf16.gmra.mrb[0].mxu0 %v2080
      %v2230 = vpop.f32.mrb[0].mxu0
      %v2231 = vadd.f32 0.0, %v2230
      %v2232 = vpop.f32.mrb[0].mxu0
      %v2233 = vpop.f32.mrb[0].mxu0
      %v2234 = vadd.f32 0.0, %v2233
      %v2235 = vpop.f32.mrb[0].mxu0
      %2236 = vmatprep.mubr.bf16.mxu0 0
      %2237 = vmatmul.mubr.bf16.gmra.mrb[0].mxu0 %v2083
      %v2238 = vpop.f32.mrb[0].mxu0
      %v2239 = vadd.f32 0.0, %v2238
      %v2240 = vpop.f32.mrb[0].mxu0
      %v2241 = vpop.f32.mrb[0].mxu0
      %v2242 = vadd.f32 0.0, %v2241
      %v2243 = vpop.f32.mrb[0].mxu0
      %2244 = vmatprep.mubr.bf16.mxu0 0
      %2245 = vmatmul.mubr.bf16.gmra.mrb[0].mxu0 %v2086
      %v2246 = vpop.f32.mrb[0].mxu0
      %v2247 = vadd.f32 0.0, %v2246
      %v2248 = vpop.f32.mrb[0].mxu0
      %v2249 = vpop.f32.mrb[0].mxu0
      %v2250 = vadd.f32 0.0, %v2249
      %v2251 = vpop.f32.mrb[0].mxu0
      %2252 = vmatprep.mubr.bf16.mxu0 0
      %2253 = vmatmul.mubr.bf16.gmra.mrb[0].mxu0 %v2089
      %v2254 = vpop.f32.mrb[0].mxu0
      %v2255 = vadd.f32 0.0, %v2254
      %v2256 = vpop.f32.mrb[0].mxu0
      %v2257 = vpop.f32.mrb[0].mxu0
      %v2258 = vadd.f32 0.0, %v2257
      %v2259 = vpop.f32.mrb[0].mxu0
      %2260 = vmatprep.mubr.bf16.mxu0 0
      %2261 = vmatmul.mubr.bf16.gmra.mrb[0].mxu0 %v2092
      %v2262 = vpop.f32.mrb[0].mxu0
      %v2263 = vadd.f32 0.0, %v2262
      %v2264 = vpop.f32.mrb[0].mxu0
      %v2265 = vpop.f32.mrb[0].mxu0
      %v2266 = vadd.f32 0.0, %v2265
      %v2267 = vpop.f32.mrb[0].mxu0
      %2268 = vmatprep.mubr.bf16.mxu0 0
      %2269 = vmatmul.mubr.bf16.gmra.mrb[0].mxu0 %v2095
      %v2270 = vpop.f32.mrb[0].mxu0
      %v2271 = vadd.f32 0.0, %v2270
      %v2272 = vpop.f32.mrb[0].mxu0
      %v2273 = vpop.f32.mrb[0].mxu0
      %v2274 = vadd.f32 0.0, %v2273
      %v2275 = vpop.f32.mrb[0].mxu0
      %2276 = vdwg.mxu0
      %v2277 = vadd.f32 %v1875, %v2135
      %v2278 = vadd.f32 %v1876, %v2138
      %v2279 = vadd.f32 %v1877, %v2143
      %v2280 = vadd.f32 %v1878, %v2146
      %v2281 = vadd.f32 %v1879, %v2151
      %v2282 = vadd.f32 %v1880, %v2154
      %v2283 = vadd.f32 %v1881, %v2159
      %v2284 = vadd.f32 %v1882, %v2162
      %v2285 = vadd.f32 %v1883, %v2167
      %v2286 = vadd.f32 %v1884, %v2170
      %v2287 = vadd.f32 %v1885, %v2175
      %v2288 = vadd.f32 %v1886, %v2178
      %v2289 = vadd.f32 %v1887, %v2183
      %v2290 = vadd.f32 %v1888, %v2186
      %v2291 = vadd.f32 %v1889, %v2191
      %v2292 = vadd.f32 %v1890, %v2194
      %v2293 = vadd.f32 %v1891, %v2199
      %v2294 = vadd.f32 %v1892, %v2202
      %v2295 = vadd.f32 %v1893, %v2207
      %v2296 = vadd.f32 %v1894, %v2210
      %v2297 = vadd.f32 %v1895, %v2215
      %v2298 = vadd.f32 %v1896, %v2218
      %v2299 = vadd.f32 %v1897, %v2223
      %v2300 = vadd.f32 %v1898, %v2226
      %v2301 = vadd.f32 %v1899, %v2231
      %v2302 = vadd.f32 %v1900, %v2234
      %v2303 = vadd.f32 %v1901, %v2239
      %v2304 = vadd.f32 %v1902, %v2242
      %v2305 = vadd.f32 %v1903, %v2247
      %v2306 = vadd.f32 %v1904, %v2250
      %v2307 = vadd.f32 %v1905, %v2255
      %v2308 = vadd.f32 %v1906, %v2258
      %v2309 = vadd.f32 %v1907, %v2263
      %v2310 = vadd.f32 %v1908, %v2266
      %v2311 = vadd.f32 %v1909, %v2271
      %v2312 = vadd.f32 %v1910, %v2274
      %2313 = vst.msk [vmem:[#allocation2] sm:$0xff] %vm195, %v2277
      %2314 = vst.msk [vmem:[#allocation2 + $0x8] sm:$0xff] %vm195, %v2278
      %2315 = vst.msk [vmem:[#allocation2 + $0x10] sm:$0xff] %vm195, %v2279
      %2316 = vst.msk [vmem:[#allocation2 + $0x18] sm:$0xff] %vm195, %v2280
      %2317 = vst.msk [vmem:[#allocation2 + $0x20] sm:$0xff] %vm195, %v2281
      %2318 = vst.msk [vmem:[#allocation2 + $0x28] sm:$0xff] %vm195, %v2282
      %2319 = vst.msk [vmem:[#allocation2 + $0x30] sm:$0xff] %vm195, %v2283
      %2320 = vst.msk [vmem:[#allocation2 + $0x38] sm:$0xff] %vm195, %v2284
      %2321 = vst.msk [vmem:[#allocation2 + $0x40] sm:$0xff] %vm195, %v2285
      %2322 = vst.msk [vmem:[#allocation2 + $0x48] sm:$0xff] %vm195, %v2286
      %2323 = vst.msk [vmem:[#allocation2 + $0x50] sm:$0xff] %vm195, %v2287
      %2324 = vst.msk [vmem:[#allocation2 + $0x58] sm:$0xff] %vm195, %v2288
      %2325 = vst.msk [vmem:[#allocation2 + $0x60] sm:$0xff] %vm195, %v2289
      %2326 = vst.msk [vmem:[#allocation2 + $0x68] sm:$0xff] %vm195, %v2290
      %2327 = vst.msk [vmem:[#allocation2 + $0x70] sm:$0xff] %vm195, %v2291
      %2328 = vst.msk [vmem:[#allocation2 + $0x78] sm:$0xff] %vm195, %v2292
      %2329 = vst.msk [vmem:[#allocation2 + $0x80] sm:$0xff] %vm195, %v2293
      %2330 = vst.msk [vmem:[#allocation2 + $0x88] sm:$0xff] %vm195, %v2294
      %2331 = vst.msk [vmem:[#allocation2 + $0x90] sm:$0xff] %vm195, %v2295
      %2332 = vst.msk [vmem:[#allocation2 + $0x98] sm:$0xff] %vm195, %v2296
      %2333 = vst.msk [vmem:[#allocation2 + $0xa0] sm:$0xff] %vm195, %v2297
      %2334 = vst.msk [vmem:[#allocation2 + $0xa8] sm:$0xff] %vm195, %v2298
      %2335 = vst.msk [vmem:[#allocation2 + $0xb0] sm:$0xff] %vm195, %v2299
      %2336 = vst.msk [vmem:[#allocation2 + $0xb8] sm:$0xff] %vm195, %v2300
      %2337 = vst.msk [vmem:[#allocation2 + $0xc0] sm:$0xff] %vm195, %v2301
      %2338 = vst.msk [vmem:[#allocation2 + $0xc8] sm:$0xff] %vm195, %v2302
      %2339 = vst.msk [vmem:[#allocation2 + $0xd0] sm:$0xff] %vm195, %v2303
      %2340 = vst.msk [vmem:[#allocation2 + $0xd8] sm:$0xff] %vm195, %v2304
      %2341 = vst.msk [vmem:[#allocation2 + $0xe0] sm:$0xff] %vm195, %v2305
      %2342 = vst.msk [vmem:[#allocation2 + $0xe8] sm:$0xff] %vm195, %v2306
      %2343 = vst.msk [vmem:[#allocation2 + $0xf0] sm:$0xff] %vm195, %v2307
      %2344 = vst.msk [vmem:[#allocation2 + $0xf8] sm:$0xff] %vm195, %v2308
      %2345 = vst.msk [vmem:[#allocation2 + $0x100] sm:$0xff] %vm195, %v2309
      %2346 = vst.msk [vmem:[#allocation2 + $0x108] sm:$0xff] %vm195, %v2310
      %2347 = vst.msk [vmem:[#allocation2 + $0x110] sm:$0xff] %vm195, %v2311
      %2348 = vst.msk [vmem:[#allocation2 + $0x118] sm:$0xff] %vm195, %v2312
      %v2349 = vld [vmem:[%s183 + $0x8] sm:$0xe]
      %v2350 = vld [vmem:[%s183 + $0xc] sm:$0xf]
      %v2351 = vld [vmem:[%s183 + $0x10] sm:$0xf]
      %v2352 = vld [vmem:[%s183 + $0x14] sm:$0xf]
      %v2353 = vld [vmem:[%s183 + $0x18] sm:$0xf]
      %v2354 = vld [vmem:[%s183 + $0x1c] sm:$0xf]
      %v2355 = vld [vmem:[%s183 + $0x20] sm:$0xf]
      %v2356 = vld [vmem:[%s183 + $0x24] sm:$0xf]
      %v2357 = vld [vmem:[%s183 + $0x28] sm:$0xf]
      %v2358 = vld [vmem:[%s183 + $0x2c] sm:$0xf]
      %v2359 = vld [vmem:[%s183 + $0x30] sm:$0xf]
      %v2360 = vld [vmem:[%s183 + $0x34] sm:$0xf]
      %v2361 = vld [vmem:[%s183 + $0x38] sm:$0xf]
      %v2362 = vld [vmem:[%s183 + $0x3c] sm:$0xf]
      %v2363 = vld [vmem:[%s183 + $0x40] sm:$0xf]
      %v2364 = vld [vmem:[%s183 + $0x44] sm:$0xf]
      %v2365 = vld [vmem:[%s183 + $0x48] sm:$0xf]
      %v2366 = vld [vmem:[%s183 + $0x4c] sm:$0xf]
      %v2367 = vld [vmem:[%s183 + $0x50] sm:$0xf]
      %v2368 = vld [vmem:[%s183 + $0x54] sm:$0xf]
      %v2369 = vld [vmem:[%s183 + $0x58] sm:$0xf]
      %v2370 = vld [vmem:[%s183 + $0x5c] sm:$0xf]
      %v2371 = vld [vmem:[%s183 + $0x60] sm:$0xf]
      %v2372 = vld [vmem:[%s183 + $0x64] sm:$0xf]
      %v2373 = vld [vmem:[%s183 + $0x68] sm:$0xf]
      %v2374 = vld [vmem:[%s183 + $0x6c] sm:$0xf]
      %v2375 = vld [vmem:[%s183 + $0x70] sm:$0xf]
      %v2376 = vld [vmem:[%s183 + $0x74] sm:$0xf]
      %v2377 = vld [vmem:[%s183 + $0x78] sm:$0xf]
      %v2378 = vld [vmem:[%s183 + $0x7c] sm:$0xf]
      %v2379 = vld [vmem:[%s183 + $0x80] sm:$0xf]
      %v2380 = vld [vmem:[%s183 + $0x84] sm:$0xf]
      %v2381 = vld [vmem:[%s183 + $0x88] sm:$0xf]
      %v2382 = vld [vmem:[%s183 + $0x8c] sm:$0xf]
      %v2383 = vld [vmem:[%s183 + $0x90] sm:$0xf]
      %v2384 = vld [vmem:[%s183 + $0x94] sm:$0xf]
      %v2385 = vld [vmem:[%s183 + $0x98] sm:$0x3]
      %v2386 = vld [vmem:[#allocation2] sm:$0xff]
      %v2387 = vld [vmem:[#allocation2 + $0x8] sm:$0xff]
      %v2388 = vld [vmem:[#allocation2 + $0x10] sm:$0xff]
      %v2389 = vld [vmem:[#allocation2 + $0x18] sm:$0xff]
      %v2390 = vld [vmem:[#allocation2 + $0x20] sm:$0xff]
      %v2391 = vld [vmem:[#allocation2 + $0x28] sm:$0xff]
      %v2392 = vld [vmem:[#allocation2 + $0x30] sm:$0xff]
      %v2393 = vld [vmem:[#allocation2 + $0x38] sm:$0xff]
      %v2394 = vld [vmem:[#allocation2 + $0x40] sm:$0xff]
      %v2395 = vld [vmem:[#allocation2 + $0x48] sm:$0xff]
      %v2396 = vld [vmem:[#allocation2 + $0x50] sm:$0xff]
      %v2397 = vld [vmem:[#allocation2 + $0x58] sm:$0xff]
      %v2398 = vld [vmem:[#allocation2 + $0x60] sm:$0xff]
      %v2399 = vld [vmem:[#allocation2 + $0x68] sm:$0xff]
      %v2400 = vld [vmem:[#allocation2 + $0x70] sm:$0xff]
      %v2401 = vld [vmem:[#allocation2 + $0x78] sm:$0xff]
      %v2402 = vld [vmem:[#allocation2 + $0x80] sm:$0xff]
      %v2403 = vld [vmem:[#allocation2 + $0x88] sm:$0xff]
      %v2404 = vld [vmem:[#allocation2 + $0x90] sm:$0xff]
      %v2405 = vld [vmem:[#allocation2 + $0x98] sm:$0xff]
      %v2406 = vld [vmem:[#allocation2 + $0xa0] sm:$0xff]
      %v2407 = vld [vmem:[#allocation2 + $0xa8] sm:$0xff]
      %v2408 = vld [vmem:[#allocation2 + $0xb0] sm:$0xff]
      %v2409 = vld [vmem:[#allocation2 + $0xb8] sm:$0xff]
      %v2410 = vld [vmem:[#allocation2 + $0xc0] sm:$0xff]
      %v2411 = vld [vmem:[#allocation2 + $0xc8] sm:$0xff]
      %v2412 = vld [vmem:[#allocation2 + $0xd0] sm:$0xff]
      %v2413 = vld [vmem:[#allocation2 + $0xd8] sm:$0xff]
      %v2414 = vld [vmem:[#allocation2 + $0xe0] sm:$0xff]
      %v2415 = vld [vmem:[#allocation2 + $0xe8] sm:$0xff]
      %v2416 = vld [vmem:[#allocation2 + $0xf0] sm:$0xff]
      %v2417 = vld [vmem:[#allocation2 + $0xf8] sm:$0xff]
      %v2418 = vld [vmem:[#allocation2 + $0x100] sm:$0xff]
      %v2419 = vld [vmem:[#allocation2 + $0x108] sm:$0xff]
      %v2420 = vld [vmem:[#allocation2 + $0x110] sm:$0xff]
      %v2421 = vld [vmem:[#allocation2 + $0x118] sm:$0xff]
      %s2422 = scalar_lea.vmem %s1, 8
      %v2423 = vld [vmem:[%s2422] sm:$0x3]
      %v2461 = vunpack.c.l.b16 %v2349
      %v2462 = vunpack.c.l.b16 %v2350
      %v2463 = vunpack.c.l.b16 %v2351
      %v2464 = vunpack.c.l.b16 %v2352
      %v2465 = vunpack.c.l.b16 %v2353
      %v2466 = vunpack.c.l.b16 %v2354
      %v2467 = vunpack.c.l.b16 %v2355
      %v2468 = vunpack.c.l.b16 %v2356
      %v2469 = vunpack.c.l.b16 %v2357
      %v2470 = vunpack.c.l.b16 %v2358
      %v2471 = vunpack.c.l.b16 %v2359
      %v2472 = vunpack.c.l.b16 %v2360
      %v2473 = vunpack.c.l.b16 %v2361
      %v2474 = vunpack.c.l.b16 %v2362
      %v2475 = vunpack.c.l.b16 %v2363
      %v2476 = vunpack.c.l.b16 %v2364
      %v2477 = vunpack.c.l.b16 %v2365
      %v2478 = vunpack.c.l.b16 %v2366
      %v2479 = vunpack.c.l.b16 %v2367
      %v2480 = vunpack.c.l.b16 %v2368
      %v2481 = vunpack.c.l.b16 %v2369
      %v2482 = vunpack.c.l.b16 %v2370
      %v2483 = vunpack.c.l.b16 %v2371
      %v2484 = vunpack.c.l.b16 %v2372
      %v2485 = vunpack.c.l.b16 %v2373
      %v2486 = vunpack.c.l.b16 %v2374
      %v2487 = vunpack.c.l.b16 %v2375
      %v2488 = vunpack.c.l.b16 %v2376
      %v2489 = vunpack.c.l.b16 %v2377
      %v2490 = vunpack.c.l.b16 %v2378
      %v2491 = vunpack.c.l.b16 %v2379
      %v2492 = vunpack.c.l.b16 %v2380
      %v2493 = vunpack.c.l.b16 %v2381
      %v2494 = vunpack.c.l.b16 %v2382
      %v2495 = vunpack.c.l.b16 %v2383
      %v2496 = vunpack.c.l.b16 %v2384
      %v2497 = vunpack.c.l.b16 %v2385
      %v2498 = vpack.c.b16 %v2462, %v2461
      %v2499 = vpack.c.b16 %v2464, %v2463
      %v2500 = vpack.c.b16 %v2466, %v2465
      %v2501 = vpack.c.b16 %v2468, %v2467
      %v2502 = vpack.c.b16 %v2470, %v2469
      %v2503 = vpack.c.b16 %v2472, %v2471
      %v2504 = vpack.c.b16 %v2474, %v2473
      %v2505 = vpack.c.b16 %v2476, %v2475
      %v2506 = vpack.c.b16 %v2478, %v2477
      %v2507 = vpack.c.b16 %v2480, %v2479
      %v2508 = vpack.c.b16 %v2482, %v2481
      %v2509 = vpack.c.b16 %v2484, %v2483
      %v2510 = vpack.c.b16 %v2486, %v2485
      %v2511 = vpack.c.b16 %v2488, %v2487
      %v2512 = vpack.c.b16 %v2490, %v2489
      %v2513 = vpack.c.b16 %v2492, %v2491
      %v2514 = vpack.c.b16 %v2494, %v2493
      %v2515 = vpack.c.b16 %v2496, %v2495
      %v2516 = vpack.c.b16 %v2497, %v2497
      %vm2517 = vsmask.f32 6400
      %v2519 = vshrl.u32 %v2498, 16
      %v2521 = vrot.slane %v2519, 1
      %v2522 = vshll.u32 %v2498, 16
      %v2524 = vrot.slane %v2522, 2
      %v2525 = vor.u32 %v2521, %v2524
      %v2527 = vshrl.u32 %v2499, 16
      %v2529 = vrot.slane %v2527, 1
      %v2530 = vshll.u32 %v2499, 16
      %v2532 = vrot.slane %v2530, 2
      %v2533 = vor.u32 %v2529, %v2532
      %v2534 = vsel %vm2517, %v2525, %v2533
      %v2536 = vshrl.u32 %v2500, 16
      %v2538 = vrot.slane %v2536, 1
      %v2539 = vshll.u32 %v2500, 16
      %v2541 = vrot.slane %v2539, 2
      %v2542 = vor.u32 %v2538, %v2541
      %v2543 = vsel %vm2517, %v2533, %v2542
      %v2545 = vshrl.u32 %v2501, 16
      %v2547 = vrot.slane %v2545, 1
      %v2548 = vshll.u32 %v2501, 16
      %v2550 = vrot.slane %v2548, 2
      %v2551 = vor.u32 %v2547, %v2550
      %v2552 = vsel %vm2517, %v2542, %v2551
      %v2554 = vshrl.u32 %v2502, 16
      %v2556 = vrot.slane %v2554, 1
      %v2557 = vshll.u32 %v2502, 16
      %v2559 = vrot.slane %v2557, 2
      %v2560 = vor.u32 %v2556, %v2559
      %v2561 = vsel %vm2517, %v2551, %v2560
      %v2563 = vshrl.u32 %v2503, 16
      %v2565 = vrot.slane %v2563, 1
      %v2566 = vshll.u32 %v2503, 16
      %v2568 = vrot.slane %v2566, 2
      %v2569 = vor.u32 %v2565, %v2568
      %v2570 = vsel %vm2517, %v2560, %v2569
      %v2572 = vshrl.u32 %v2504, 16
      %v2574 = vrot.slane %v2572, 1
      %v2575 = vshll.u32 %v2504, 16
      %v2577 = vrot.slane %v2575, 2
      %v2578 = vor.u32 %v2574, %v2577
      %v2579 = vsel %vm2517, %v2569, %v2578
      %v2581 = vshrl.u32 %v2505, 16
      %v2583 = vrot.slane %v2581, 1
      %v2584 = vshll.u32 %v2505, 16
      %v2586 = vrot.slane %v2584, 2
      %v2587 = vor.u32 %v2583, %v2586
      %v2588 = vsel %vm2517, %v2578, %v2587
      %v2590 = vshrl.u32 %v2506, 16
      %v2592 = vrot.slane %v2590, 1
      %v2593 = vshll.u32 %v2506, 16
      %v2595 = vrot.slane %v2593, 2
      %v2596 = vor.u32 %v2592, %v2595
      %v2597 = vsel %vm2517, %v2587, %v2596
      %v2599 = vshrl.u32 %v2507, 16
      %v2601 = vrot.slane %v2599, 1
      %v2602 = vshll.u32 %v2507, 16
      %v2604 = vrot.slane %v2602, 2
      %v2605 = vor.u32 %v2601, %v2604
      %v2606 = vsel %vm2517, %v2596, %v2605
      %v2608 = vshrl.u32 %v2508, 16
      %v2610 = vrot.slane %v2608, 1
      %v2611 = vshll.u32 %v2508, 16
      %v2613 = vrot.slane %v2611, 2
      %v2614 = vor.u32 %v2610, %v2613
      %v2615 = vsel %vm2517, %v2605, %v2614
      %v2617 = vshrl.u32 %v2509, 16
      %v2619 = vrot.slane %v2617, 1
      %v2620 = vshll.u32 %v2509, 16
      %v2622 = vrot.slane %v2620, 2
      %v2623 = vor.u32 %v2619, %v2622
      %v2624 = vsel %vm2517, %v2614, %v2623
      %v2626 = vshrl.u32 %v2510, 16
      %v2628 = vrot.slane %v2626, 1
      %v2629 = vshll.u32 %v2510, 16
      %v2631 = vrot.slane %v2629, 2
      %v2632 = vor.u32 %v2628, %v2631
      %v2633 = vsel %vm2517, %v2623, %v2632
      %v2635 = vshrl.u32 %v2511, 16
      %v2637 = vrot.slane %v2635, 1
      %v2638 = vshll.u32 %v2511, 16
      %v2640 = vrot.slane %v2638, 2
      %v2641 = vor.u32 %v2637, %v2640
      %v2642 = vsel %vm2517, %v2632, %v2641
      %v2644 = vshrl.u32 %v2512, 16
      %v2646 = vrot.slane %v2644, 1
      %v2647 = vshll.u32 %v2512, 16
      %v2649 = vrot.slane %v2647, 2
      %v2650 = vor.u32 %v2646, %v2649
      %v2651 = vsel %vm2517, %v2641, %v2650
      %v2653 = vshrl.u32 %v2513, 16
      %v2655 = vrot.slane %v2653, 1
      %v2656 = vshll.u32 %v2513, 16
      %v2658 = vrot.slane %v2656, 2
      %v2659 = vor.u32 %v2655, %v2658
      %v2660 = vsel %vm2517, %v2650, %v2659
      %v2662 = vshrl.u32 %v2514, 16
      %v2664 = vrot.slane %v2662, 1
      %v2665 = vshll.u32 %v2514, 16
      %v2667 = vrot.slane %v2665, 2
      %v2668 = vor.u32 %v2664, %v2667
      %v2669 = vsel %vm2517, %v2659, %v2668
      %v2671 = vshrl.u32 %v2515, 16
      %v2673 = vrot.slane %v2671, 1
      %v2674 = vshll.u32 %v2515, 16
      %v2676 = vrot.slane %v2674, 2
      %v2677 = vor.u32 %v2673, %v2676
      %v2678 = vsel %vm2517, %v2668, %v2677
      %v2680 = vshrl.u32 %v2516, 16
      %v2682 = vrot.slane %v2680, 1
      %v2683 = vshll.u32 %v2516, 16
      %v2685 = vrot.slane %v2683, 2
      %v2686 = vor.u32 %v2682, %v2685
      %v2687 = vsel %vm2517, %v2677, %v2686
      %v2689 = vsel %vm395, %v2534, 0
      %v2692 = vsel %vm395, %v2543, 0
      %v2695 = vsel %vm395, %v2552, 0
      %v2698 = vsel %vm395, %v2561, 0
      %v2701 = vsel %vm395, %v2570, 0
      %v2704 = vsel %vm395, %v2579, 0
      %v2707 = vsel %vm395, %v2588, 0
      %v2710 = vsel %vm395, %v2597, 0
      %v2713 = vsel %vm395, %v2606, 0
      %v2716 = vsel %vm395, %v2615, 0
      %v2719 = vsel %vm395, %v2624, 0
      %v2722 = vsel %vm395, %v2633, 0
      %v2725 = vsel %vm395, %v2642, 0
      %v2728 = vsel %vm395, %v2651, 0
      %v2731 = vsel %vm395, %v2660, 0
      %v2734 = vsel %vm395, %v2669, 0
      %v2737 = vsel %vm395, %v2678, 0
      %v2740 = vsel %vm395, %v2687, 0
      %v2743 = vsel %vm450, %v2423, 0
      %2745 = vmatprep.subr.bf16.mxu0 0
      %2746 = vmatpush1.bf16.msra.mxu0 %v2743
      %2747 = vmatprep.subr.bf16.mxu0 0
      %2748 = vmatpush1.bf16.msra.mxu0 0
      %2749 = vmatprep.subr.bf16.mxu0 0
      %2750 = vmatpush1.bf16.msra.mxu0 0
      %2751 = vmatprep.subr.bf16.mxu0 0
      %2752 = vmatpush1.bf16.msra.mxu0 0
      %2753 = vmatprep.subr.bf16.mxu0 0
      %2754 = vmatpush1.bf16.msra.mxu0 0
      %2755 = vmatprep.subr.bf16.mxu0 0
      %2756 = vmatpush1.bf16.msra.mxu0 0
      %2757 = vmatprep.subr.bf16.mxu0 0
      %2758 = vmatpush1.bf16.msra.mxu0 0
      %2759 = vmatprep.subr.bf16.mxu0 0
      %2760 = vmatpush1.bf16.msra.mxu0 0
      %2761 = vmatprep.subr.bf16.mxu0 0
      %2762 = vmatpush1.bf16.msra.mxu0 0
      %2763 = vmatprep.subr.bf16.mxu0 0
      %2764 = vmatpush1.bf16.msra.mxu0 0
      %2765 = vmatprep.subr.bf16.mxu0 0
      %2766 = vmatpush1.bf16.msra.mxu0 0
      %2767 = vmatprep.subr.bf16.mxu0 0
      %2768 = vmatpush1.bf16.msra.mxu0 0
      %2769 = vmatprep.subr.bf16.mxu0 0
      %2770 = vmatpush1.bf16.msra.mxu0 0
      %2771 = vmatprep.subr.bf16.mxu0 0
      %2772 = vmatpush1.bf16.msra.mxu0 0
      %2773 = vmatprep.subr.bf16.mxu0 0
      %2774 = vmatpush1.bf16.msra.mxu0 0
      %2775 = vmatprep.subr.bf16.mxu0 0
      %2776 = vmatpush1.bf16.msra.mxu0 0
      %2777 = vmatprep.mubr.bf16.mxu0 0
      %2778 = vmatmul.mubr.bf16.gmra.mrb[0].mxu0 %v2689
      %v2779 = vpop.f32.mrb[0].mxu0
      %v2780 = vadd.f32 0.0, %v2779
      %v2781 = vpop.f32.mrb[0].mxu0
      %v2782 = vpop.f32.mrb[0].mxu0
      %v2783 = vadd.f32 0.0, %v2782
      %v2784 = vpop.f32.mrb[0].mxu0
      %2785 = vmatprep.mubr.bf16.mxu0 0
      %2786 = vmatmul.mubr.bf16.gmra.mrb[0].mxu0 %v2692
      %v2787 = vpop.f32.mrb[0].mxu0
      %v2788 = vadd.f32 0.0, %v2787
      %v2789 = vpop.f32.mrb[0].mxu0
      %v2790 = vpop.f32.mrb[0].mxu0
      %v2791 = vadd.f32 0.0, %v2790
      %v2792 = vpop.f32.mrb[0].mxu0
      %2793 = vmatprep.mubr.bf16.mxu0 0
      %2794 = vmatmul.mubr.bf16.gmra.mrb[0].mxu0 %v2695
      %v2795 = vpop.f32.mrb[0].mxu0
      %v2796 = vadd.f32 0.0, %v2795
      %v2797 = vpop.f32.mrb[0].mxu0
      %v2798 = vpop.f32.mrb[0].mxu0
      %v2799 = vadd.f32 0.0, %v2798
      %v2800 = vpop.f32.mrb[0].mxu0
      %2801 = vmatprep.mubr.bf16.mxu0 0
      %2802 = vmatmul.mubr.bf16.gmra.mrb[0].mxu0 %v2698
      %v2803 = vpop.f32.mrb[0].mxu0
      %v2804 = vadd.f32 0.0, %v2803
      %v2805 = vpop.f32.mrb[0].mxu0
      %v2806 = vpop.f32.mrb[0].mxu0
      %v2807 = vadd.f32 0.0, %v2806
      %v2808 = vpop.f32.mrb[0].mxu0
      %2809 = vmatprep.mubr.bf16.mxu0 0
      %2810 = vmatmul.mubr.bf16.gmra.mrb[0].mxu0 %v2701
      %v2811 = vpop.f32.mrb[0].mxu0
      %v2812 = vadd.f32 0.0, %v2811
      %v2813 = vpop.f32.mrb[0].mxu0
      %v2814 = vpop.f32.mrb[0].mxu0
      %v2815 = vadd.f32 0.0, %v2814
      %v2816 = vpop.f32.mrb[0].mxu0
      %2817 = vmatprep.mubr.bf16.mxu0 0
      %2818 = vmatmul.mubr.bf16.gmra.mrb[0].mxu0 %v2704
      %v2819 = vpop.f32.mrb[0].mxu0
      %v2820 = vadd.f32 0.0, %v2819
      %v2821 = vpop.f32.mrb[0].mxu0
      %v2822 = vpop.f32.mrb[0].mxu0
      %v2823 = vadd.f32 0.0, %v2822
      %v2824 = vpop.f32.mrb[0].mxu0
      %2825 = vmatprep.mubr.bf16.mxu0 0
      %2826 = vmatmul.mubr.bf16.gmra.mrb[0].mxu0 %v2707
      %v2827 = vpop.f32.mrb[0].mxu0
      %v2828 = vadd.f32 0.0, %v2827
      %v2829 = vpop.f32.mrb[0].mxu0
      %v2830 = vpop.f32.mrb[0].mxu0
      %v2831 = vadd.f32 0.0, %v2830
      %v2832 = vpop.f32.mrb[0].mxu0
      %2833 = vmatprep.mubr.bf16.mxu0 0
      %2834 = vmatmul.mubr.bf16.gmra.mrb[0].mxu0 %v2710
      %v2835 = vpop.f32.mrb[0].mxu0
      %v2836 = vadd.f32 0.0, %v2835
      %v2837 = vpop.f32.mrb[0].mxu0
      %v2838 = vpop.f32.mrb[0].mxu0
      %v2839 = vadd.f32 0.0, %v2838
      %v2840 = vpop.f32.mrb[0].mxu0
      %2841 = vmatprep.mubr.bf16.mxu0 0
      %2842 = vmatmul.mubr.bf16.gmra.mrb[0].mxu0 %v2713
      %v2843 = vpop.f32.mrb[0].mxu0
      %v2844 = vadd.f32 0.0, %v2843
      %v2845 = vpop.f32.mrb[0].mxu0
      %v2846 = vpop.f32.mrb[0].mxu0
      %v2847 = vadd.f32 0.0, %v2846
      %v2848 = vpop.f32.mrb[0].mxu0
      %2849 = vmatprep.mubr.bf16.mxu0 0
      %2850 = vmatmul.mubr.bf16.gmra.mrb[0].mxu0 %v2716
      %v2851 = vpop.f32.mrb[0].mxu0
      %v2852 = vadd.f32 0.0, %v2851
      %v2853 = vpop.f32.mrb[0].mxu0
      %v2854 = vpop.f32.mrb[0].mxu0
      %v2855 = vadd.f32 0.0, %v2854
      %v2856 = vpop.f32.mrb[0].mxu0
      %2857 = vmatprep.mubr.bf16.mxu0 0
      %2858 = vmatmul.mubr.bf16.gmra.mrb[0].mxu0 %v2719
      %v2859 = vpop.f32.mrb[0].mxu0
      %v2860 = vadd.f32 0.0, %v2859
      %v2861 = vpop.f32.mrb[0].mxu0
      %v2862 = vpop.f32.mrb[0].mxu0
      %v2863 = vadd.f32 0.0, %v2862
      %v2864 = vpop.f32.mrb[0].mxu0
      %2865 = vmatprep.mubr.bf16.mxu0 0
      %2866 = vmatmul.mubr.bf16.gmra.mrb[0].mxu0 %v2722
      %v2867 = vpop.f32.mrb[0].mxu0
      %v2868 = vadd.f32 0.0, %v2867
      %v2869 = vpop.f32.mrb[0].mxu0
      %v2870 = vpop.f32.mrb[0].mxu0
      %v2871 = vadd.f32 0.0, %v2870
      %v2872 = vpop.f32.mrb[0].mxu0
      %2873 = vmatprep.mubr.bf16.mxu0 0
      %2874 = vmatmul.mubr.bf16.gmra.mrb[0].mxu0 %v2725
      %v2875 = vpop.f32.mrb[0].mxu0
      %v2876 = vadd.f32 0.0, %v2875
      %v2877 = vpop.f32.mrb[0].mxu0
      %v2878 = vpop.f32.mrb[0].mxu0
      %v2879 = vadd.f32 0.0, %v2878
      %v2880 = vpop.f32.mrb[0].mxu0
      %2881 = vmatprep.mubr.bf16.mxu0 0
      %2882 = vmatmul.mubr.bf16.gmra.mrb[0].mxu0 %v2728
      %v2883 = vpop.f32.mrb[0].mxu0
      %v2884 = vadd.f32 0.0, %v2883
      %v2885 = vpop.f32.mrb[0].mxu0
      %v2886 = vpop.f32.mrb[0].mxu0
      %v2887 = vadd.f32 0.0, %v2886
      %v2888 = vpop.f32.mrb[0].mxu0
      %2889 = vmatprep.mubr.bf16.mxu0 0
      %2890 = vmatmul.mubr.bf16.gmra.mrb[0].mxu0 %v2731
      %v2891 = vpop.f32.mrb[0].mxu0
      %v2892 = vadd.f32 0.0, %v2891
      %v2893 = vpop.f32.mrb[0].mxu0
      %v2894 = vpop.f32.mrb[0].mxu0
      %v2895 = vadd.f32 0.0, %v2894
      %v2896 = vpop.f32.mrb[0].mxu0
      %2897 = vmatprep.mubr.bf16.mxu0 0
      %2898 = vmatmul.mubr.bf16.gmra.mrb[0].mxu0 %v2734
      %v2899 = vpop.f32.mrb[0].mxu0
      %v2900 = vadd.f32 0.0, %v2899
      %v2901 = vpop.f32.mrb[0].mxu0
      %v2902 = vpop.f32.mrb[0].mxu0
      %v2903 = vadd.f32 0.0, %v2902
      %v2904 = vpop.f32.mrb[0].mxu0
      %2905 = vmatprep.mubr.bf16.mxu0 0
      %2906 = vmatmul.mubr.bf16.gmra.mrb[0].mxu0 %v2737
      %v2907 = vpop.f32.mrb[0].mxu0
      %v2908 = vadd.f32 0.0, %v2907
      %v2909 = vpop.f32.mrb[0].mxu0
      %v2910 = vpop.f32.mrb[0].mxu0
      %v2911 = vadd.f32 0.0, %v2910
      %v2912 = vpop.f32.mrb[0].mxu0
      %2913 = vmatprep.mubr.bf16.mxu0 0
      %2914 = vmatmul.mubr.bf16.gmra.mrb[0].mxu0 %v2740
      %v2915 = vpop.f32.mrb[0].mxu0
      %v2916 = vadd.f32 0.0, %v2915
      %v2917 = vpop.f32.mrb[0].mxu0
      %v2918 = vpop.f32.mrb[0].mxu0
      %v2919 = vadd.f32 0.0, %v2918
      %v2920 = vpop.f32.mrb[0].mxu0
      %2921 = vdwg.mxu0
      %v2922 = vadd.f32 %v2386, %v2780
      %v2923 = vadd.f32 %v2387, %v2783
      %v2924 = vadd.f32 %v2388, %v2788
      %v2925 = vadd.f32 %v2389, %v2791
      %v2926 = vadd.f32 %v2390, %v2796
      %v2927 = vadd.f32 %v2391, %v2799
      %v2928 = vadd.f32 %v2392, %v2804
      %v2929 = vadd.f32 %v2393, %v2807
      %v2930 = vadd.f32 %v2394, %v2812
      %v2931 = vadd.f32 %v2395, %v2815
      %v2932 = vadd.f32 %v2396, %v2820
      %v2933 = vadd.f32 %v2397, %v2823
      %v2934 = vadd.f32 %v2398, %v2828
      %v2935 = vadd.f32 %v2399, %v2831
      %v2936 = vadd.f32 %v2400, %v2836
      %v2937 = vadd.f32 %v2401, %v2839
      %v2938 = vadd.f32 %v2402, %v2844
      %v2939 = vadd.f32 %v2403, %v2847
      %v2940 = vadd.f32 %v2404, %v2852
      %v2941 = vadd.f32 %v2405, %v2855
      %v2942 = vadd.f32 %v2406, %v2860
      %v2943 = vadd.f32 %v2407, %v2863
      %v2944 = vadd.f32 %v2408, %v2868
      %v2945 = vadd.f32 %v2409, %v2871
      %v2946 = vadd.f32 %v2410, %v2876
      %v2947 = vadd.f32 %v2411, %v2879
      %v2948 = vadd.f32 %v2412, %v2884
      %v2949 = vadd.f32 %v2413, %v2887
      %v2950 = vadd.f32 %v2414, %v2892
      %v2951 = vadd.f32 %v2415, %v2895
      %v2952 = vadd.f32 %v2416, %v2900
      %v2953 = vadd.f32 %v2417, %v2903
      %v2954 = vadd.f32 %v2418, %v2908
      %v2955 = vadd.f32 %v2419, %v2911
      %v2956 = vadd.f32 %v2420, %v2916
      %v2957 = vadd.f32 %v2421, %v2919
      %2958 = vst.msk [vmem:[#allocation2] sm:$0xff] %vm195, %v2922
      %2959 = vst.msk [vmem:[#allocation2 + $0x8] sm:$0xff] %vm195, %v2923
      %2960 = vst.msk [vmem:[#allocation2 + $0x10] sm:$0xff] %vm195, %v2924
      %2961 = vst.msk [vmem:[#allocation2 + $0x18] sm:$0xff] %vm195, %v2925
      %2962 = vst.msk [vmem:[#allocation2 + $0x20] sm:$0xff] %vm195, %v2926
      %2963 = vst.msk [vmem:[#allocation2 + $0x28] sm:$0xff] %vm195, %v2927
      %2964 = vst.msk [vmem:[#allocation2 + $0x30] sm:$0xff] %vm195, %v2928
      %2965 = vst.msk [vmem:[#allocation2 + $0x38] sm:$0xff] %vm195, %v2929
      %2966 = vst.msk [vmem:[#allocation2 + $0x40] sm:$0xff] %vm195, %v2930
      %2967 = vst.msk [vmem:[#allocation2 + $0x48] sm:$0xff] %vm195, %v2931
      %2968 = vst.msk [vmem:[#allocation2 + $0x50] sm:$0xff] %vm195, %v2932
      %2969 = vst.msk [vmem:[#allocation2 + $0x58] sm:$0xff] %vm195, %v2933
      %2970 = vst.msk [vmem:[#allocation2 + $0x60] sm:$0xff] %vm195, %v2934
      %2971 = vst.msk [vmem:[#allocation2 + $0x68] sm:$0xff] %vm195, %v2935
      %2972 = vst.msk [vmem:[#allocation2 + $0x70] sm:$0xff] %vm195, %v2936
      %2973 = vst.msk [vmem:[#allocation2 + $0x78] sm:$0xff] %vm195, %v2937
      %2974 = vst.msk [vmem:[#allocation2 + $0x80] sm:$0xff] %vm195, %v2938
      %2975 = vst.msk [vmem:[#allocation2 + $0x88] sm:$0xff] %vm195, %v2939
      %2976 = vst.msk [vmem:[#allocation2 + $0x90] sm:$0xff] %vm195, %v2940
      %2977 = vst.msk [vmem:[#allocation2 + $0x98] sm:$0xff] %vm195, %v2941
      %2978 = vst.msk [vmem:[#allocation2 + $0xa0] sm:$0xff] %vm195, %v2942
      %2979 = vst.msk [vmem:[#allocation2 + $0xa8] sm:$0xff] %vm195, %v2943
      %2980 = vst.msk [vmem:[#allocation2 + $0xb0] sm:$0xff] %vm195, %v2944
      %2981 = vst.msk [vmem:[#allocation2 + $0xb8] sm:$0xff] %vm195, %v2945
      %2982 = vst.msk [vmem:[#allocation2 + $0xc0] sm:$0xff] %vm195, %v2946
      %2983 = vst.msk [vmem:[#allocation2 + $0xc8] sm:$0xff] %vm195, %v2947
      %2984 = vst.msk [vmem:[#allocation2 + $0xd0] sm:$0xff] %vm195, %v2948
      %2985 = vst.msk [vmem:[#allocation2 + $0xd8] sm:$0xff] %vm195, %v2949
      %2986 = vst.msk [vmem:[#allocation2 + $0xe0] sm:$0xff] %vm195, %v2950
      %2987 = vst.msk [vmem:[#allocation2 + $0xe8] sm:$0xff] %vm195, %v2951
      %2988 = vst.msk [vmem:[#allocation2 + $0xf0] sm:$0xff] %vm195, %v2952
      %2989 = vst.msk [vmem:[#allocation2 + $0xf8] sm:$0xff] %vm195, %v2953
      %2990 = vst.msk [vmem:[#allocation2 + $0x100] sm:$0xff] %vm195, %v2954
      %2991 = vst.msk [vmem:[#allocation2 + $0x108] sm:$0xff] %vm195, %v2955
      %2992 = vst.msk [vmem:[#allocation2 + $0x110] sm:$0xff] %vm195, %v2956
      %2993 = vst.msk [vmem:[#allocation2 + $0x118] sm:$0xff] %vm195, %v2957
      %v2994 = vld [vmem:[%s183 + $0x8] sm:$0xc]
      %v2995 = vld [vmem:[%s183 + $0xc] sm:$0xf]
      %v2996 = vld [vmem:[%s183 + $0x10] sm:$0xf]
      %v2997 = vld [vmem:[%s183 + $0x14] sm:$0xf]
      %v2998 = vld [vmem:[%s183 + $0x18] sm:$0xf]
      %v2999 = vld [vmem:[%s183 + $0x1c] sm:$0xf]
      %v3000 = vld [vmem:[%s183 + $0x20] sm:$0xf]
      %v3001 = vld [vmem:[%s183 + $0x24] sm:$0xf]
      %v3002 = vld [vmem:[%s183 + $0x28] sm:$0xf]
      %v3003 = vld [vmem:[%s183 + $0x2c] sm:$0xf]
      %v3004 = vld [vmem:[%s183 + $0x30] sm:$0xf]
      %v3005 = vld [vmem:[%s183 + $0x34] sm:$0xf]
      %v3006 = vld [vmem:[%s183 + $0x38] sm:$0xf]
      %v3007 = vld [vmem:[%s183 + $0x3c] sm:$0xf]
      %v3008 = vld [vmem:[%s183 + $0x40] sm:$0xf]
      %v3009 = vld [vmem:[%s183 + $0x44] sm:$0xf]
      %v3010 = vld [vmem:[%s183 + $0x48] sm:$0xf]
      %v3011 = vld [vmem:[%s183 + $0x4c] sm:$0xf]
      %v3012 = vld [vmem:[%s183 + $0x50] sm:$0xf]
      %v3013 = vld [vmem:[%s183 + $0x54] sm:$0xf]
      %v3014 = vld [vmem:[%s183 + $0x58] sm:$0xf]
      %v3015 = vld [vmem:[%s183 + $0x5c] sm:$0xf]
      %v3016 = vld [vmem:[%s183 + $0x60] sm:$0xf]
      %v3017 = vld [vmem:[%s183 + $0x64] sm:$0xf]
      %v3018 = vld [vmem:[%s183 + $0x68] sm:$0xf]
      %v3019 = vld [vmem:[%s183 + $0x6c] sm:$0xf]
      %v3020 = vld [vmem:[%s183 + $0x70] sm:$0xf]
      %v3021 = vld [vmem:[%s183 + $0x74] sm:$0xf]
      %v3022 = vld [vmem:[%s183 + $0x78] sm:$0xf]
      %v3023 = vld [vmem:[%s183 + $0x7c] sm:$0xf]
      %v3024 = vld [vmem:[%s183 + $0x80] sm:$0xf]
      %v3025 = vld [vmem:[%s183 + $0x84] sm:$0xf]
      %v3026 = vld [vmem:[%s183 + $0x88] sm:$0xf]
      %v3027 = vld [vmem:[%s183 + $0x8c] sm:$0xf]
      %v3028 = vld [vmem:[%s183 + $0x90] sm:$0xf]
      %v3029 = vld [vmem:[%s183 + $0x94] sm:$0xf]
      %v3030 = vld [vmem:[%s183 + $0x98] sm:$0x3]
      %v3031 = vld [vmem:[#allocation2] sm:$0xff]
      %v3032 = vld [vmem:[#allocation2 + $0x8] sm:$0xff]
      %v3033 = vld [vmem:[#allocation2 + $0x10] sm:$0xff]
      %v3034 = vld [vmem:[#allocation2 + $0x18] sm:$0xff]
      %v3035 = vld [vmem:[#allocation2 + $0x20] sm:$0xff]
      %v3036 = vld [vmem:[#allocation2 + $0x28] sm:$0xff]
      %v3037 = vld [vmem:[#allocation2 + $0x30] sm:$0xff]
      %v3038 = vld [vmem:[#allocation2 + $0x38] sm:$0xff]
      %v3039 = vld [vmem:[#allocation2 + $0x40] sm:$0xff]
      %v3040 = vld [vmem:[#allocation2 + $0x48] sm:$0xff]
      %v3041 = vld [vmem:[#allocation2 + $0x50] sm:$0xff]
      %v3042 = vld [vmem:[#allocation2 + $0x58] sm:$0xff]
      %v3043 = vld [vmem:[#allocation2 + $0x60] sm:$0xff]
      %v3044 = vld [vmem:[#allocation2 + $0x68] sm:$0xff]
      %v3045 = vld [vmem:[#allocation2 + $0x70] sm:$0xff]
      %v3046 = vld [vmem:[#allocation2 + $0x78] sm:$0xff]
      %v3047 = vld [vmem:[#allocation2 + $0x80] sm:$0xff]
      %v3048 = vld [vmem:[#allocation2 + $0x88] sm:$0xff]
      %v3049 = vld [vmem:[#allocation2 + $0x90] sm:$0xff]
      %v3050 = vld [vmem:[#allocation2 + $0x98] sm:$0xff]
      %v3051 = vld [vmem:[#allocation2 + $0xa0] sm:$0xff]
      %v3052 = vld [vmem:[#allocation2 + $0xa8] sm:$0xff]
      %v3053 = vld [vmem:[#allocation2 + $0xb0] sm:$0xff]
      %v3054 = vld [vmem:[#allocation2 + $0xb8] sm:$0xff]
      %v3055 = vld [vmem:[#allocation2 + $0xc0] sm:$0xff]
      %v3056 = vld [vmem:[#allocation2 + $0xc8] sm:$0xff]
      %v3057 = vld [vmem:[#allocation2 + $0xd0] sm:$0xff]
      %v3058 = vld [vmem:[#allocation2 + $0xd8] sm:$0xff]
      %v3059 = vld [vmem:[#allocation2 + $0xe0] sm:$0xff]
      %v3060 = vld [vmem:[#allocation2 + $0xe8] sm:$0xff]
      %v3061 = vld [vmem:[#allocation2 + $0xf0] sm:$0xff]
      %v3062 = vld [vmem:[#allocation2 + $0xf8] sm:$0xff]
      %v3063 = vld [vmem:[#allocation2 + $0x100] sm:$0xff]
      %v3064 = vld [vmem:[#allocation2 + $0x108] sm:$0xff]
      %v3065 = vld [vmem:[#allocation2 + $0x110] sm:$0xff]
      %v3066 = vld [vmem:[#allocation2 + $0x118] sm:$0xff]
      %s3067 = scalar_lea.vmem %s1, 10
      %v3068 = vld [vmem:[%s3067] sm:$0x3]
      %v3106 = vunpack.c.l.b16 %v2994
      %v3107 = vunpack.c.l.b16 %v2995
      %v3108 = vunpack.c.l.b16 %v2996
      %v3109 = vunpack.c.l.b16 %v2997
      %v3110 = vunpack.c.l.b16 %v2998
      %v3111 = vunpack.c.l.b16 %v2999
      %v3112 = vunpack.c.l.b16 %v3000
      %v3113 = vunpack.c.l.b16 %v3001
      %v3114 = vunpack.c.l.b16 %v3002
      %v3115 = vunpack.c.l.b16 %v3003
      %v3116 = vunpack.c.l.b16 %v3004
      %v3117 = vunpack.c.l.b16 %v3005
      %v3118 = vunpack.c.l.b16 %v3006
      %v3119 = vunpack.c.l.b16 %v3007
      %v3120 = vunpack.c.l.b16 %v3008
      %v3121 = vunpack.c.l.b16 %v3009
      %v3122 = vunpack.c.l.b16 %v3010
      %v3123 = vunpack.c.l.b16 %v3011
      %v3124 = vunpack.c.l.b16 %v3012
      %v3125 = vunpack.c.l.b16 %v3013
      %v3126 = vunpack.c.l.b16 %v3014
      %v3127 = vunpack.c.l.b16 %v3015
      %v3128 = vunpack.c.l.b16 %v3016
      %v3129 = vunpack.c.l.b16 %v3017
      %v3130 = vunpack.c.l.b16 %v3018
      %v3131 = vunpack.c.l.b16 %v3019
      %v3132 = vunpack.c.l.b16 %v3020
      %v3133 = vunpack.c.l.b16 %v3021
      %v3134 = vunpack.c.l.b16 %v3022
      %v3135 = vunpack.c.l.b16 %v3023
      %v3136 = vunpack.c.l.b16 %v3024
      %v3137 = vunpack.c.l.b16 %v3025
      %v3138 = vunpack.c.l.b16 %v3026
      %v3139 = vunpack.c.l.b16 %v3027
      %v3140 = vunpack.c.l.b16 %v3028
      %v3141 = vunpack.c.l.b16 %v3029
      %v3142 = vunpack.c.l.b16 %v3030
      %v3143 = vpack.c.b16 %v3107, %v3106
      %v3144 = vpack.c.b16 %v3109, %v3108
      %v3145 = vpack.c.b16 %v3111, %v3110
      %v3146 = vpack.c.b16 %v3113, %v3112
      %v3147 = vpack.c.b16 %v3115, %v3114
      %v3148 = vpack.c.b16 %v3117, %v3116
      %v3149 = vpack.c.b16 %v3119, %v3118
      %v3150 = vpack.c.b16 %v3121, %v3120
      %v3151 = vpack.c.b16 %v3123, %v3122
      %v3152 = vpack.c.b16 %v3125, %v3124
      %v3153 = vpack.c.b16 %v3127, %v3126
      %v3154 = vpack.c.b16 %v3129, %v3128
      %v3155 = vpack.c.b16 %v3131, %v3130
      %v3156 = vpack.c.b16 %v3133, %v3132
      %v3157 = vpack.c.b16 %v3135, %v3134
      %v3158 = vpack.c.b16 %v3137, %v3136
      %v3159 = vpack.c.b16 %v3139, %v3138
      %v3160 = vpack.c.b16 %v3141, %v3140
      %v3161 = vpack.c.b16 %v3142, %v3142
      %vm3162 = vcmask 1045504
      %v3163 = vrot.slane %v3143, 2
      %v3164 = vrot.slane %v3144, 2
      %v3165 = vsel %vm3162, %v3163, %v3164
      %v3166 = vrot.slane %v3145, 2
      %v3167 = vsel %vm3162, %v3164, %v3166
      %v3168 = vrot.slane %v3146, 2
      %v3169 = vsel %vm3162, %v3166, %v3168
      %v3170 = vrot.slane %v3147, 2
      %v3171 = vsel %vm3162, %v3168, %v3170
      %v3172 = vrot.slane %v3148, 2
      %v3173 = vsel %vm3162, %v3170, %v3172
      %v3174 = vrot.slane %v3149, 2
      %v3175 = vsel %vm3162, %v3172, %v3174
      %v3176 = vrot.slane %v3150, 2
      %v3177 = vsel %vm3162, %v3174, %v3176
      %v3178 = vrot.slane %v3151, 2
      %v3179 = vsel %vm3162, %v3176, %v3178
      %v3180 = vrot.slane %v3152, 2
      %v3181 = vsel %vm3162, %v3178, %v3180
      %v3182 = vrot.slane %v3153, 2
      %v3183 = vsel %vm3162, %v3180, %v3182
      %v3184 = vrot.slane %v3154, 2
      %v3185 = vsel %vm3162, %v3182, %v3184
      %v3186 = vrot.slane %v3155, 2
      %v3187 = vsel %vm3162, %v3184, %v3186
      %v3188 = vrot.slane %v3156, 2
      %v3189 = vsel %vm3162, %v3186, %v3188
      %v3190 = vrot.slane %v3157, 2
      %v3191 = vsel %vm3162, %v3188, %v3190
      %v3192 = vrot.slane %v3158, 2
      %v3193 = vsel %vm3162, %v3190, %v3192
      %v3194 = vrot.slane %v3159, 2
      %v3195 = vsel %vm3162, %v3192, %v3194
      %v3196 = vrot.slane %v3160, 2
      %v3197 = vsel %vm3162, %v3194, %v3196
      %v3198 = vrot.slane %v3161, 2
      %v3199 = vsel %vm3162, %v3196, %v3198
      %v3201 = vsel %vm395, %v3165, 0
      %v3204 = vsel %vm395, %v3167, 0
      %v3207 = vsel %vm395, %v3169, 0
      %v3210 = vsel %vm395, %v3171, 0
      %v3213 = vsel %vm395, %v3173, 0
      %v3216 = vsel %vm395, %v3175, 0
      %v3219 = vsel %vm395, %v3177, 0
      %v3222 = vsel %vm395, %v3179, 0
      %v3225 = vsel %vm395, %v3181, 0
      %v3228 = vsel %vm395, %v3183, 0
      %v3231 = vsel %vm395, %v3185, 0
      %v3234 = vsel %vm395, %v3187, 0
      %v3237 = vsel %vm395, %v3189, 0
      %v3240 = vsel %vm395, %v3191, 0
      %v3243 = vsel %vm395, %v3193, 0
      %v3246 = vsel %vm395, %v3195, 0
      %v3249 = vsel %vm395, %v3197, 0
      %v3252 = vsel %vm395, %v3199, 0
      %v3255 = vsel %vm450, %v3068, 0
      %3257 = vmatprep.subr.bf16.mxu0 0
      %3258 = vmatpush1.bf16.msra.mxu0 %v3255
      %3259 = vmatprep.subr.bf16.mxu0 0
      %3260 = vmatpush1.bf16.msra.mxu0 0
      %3261 = vmatprep.subr.bf16.mxu0 0
      %3262 = vmatpush1.bf16.msra.mxu0 0
      %3263 = vmatprep.subr.bf16.mxu0 0
      %3264 = vmatpush1.bf16.msra.mxu0 0
      %3265 = vmatprep.subr.bf16.mxu0 0
      %3266 = vmatpush1.bf16.msra.mxu0 0
      %3267 = vmatprep.subr.bf16.mxu0 0
      %3268 = vmatpush1.bf16.msra.mxu0 0
      %3269 = vmatprep.subr.bf16.mxu0 0
      %3270 = vmatpush1.bf16.msra.mxu0 0
      %3271 = vmatprep.subr.bf16.mxu0 0
      %3272 = vmatpush1.bf16.msra.mxu0 0
      %3273 = vmatprep.subr.bf16.mxu0 0
      %3274 = vmatpush1.bf16.msra.mxu0 0
      %3275 = vmatprep.subr.bf16.mxu0 0
      %3276 = vmatpush1.bf16.msra.mxu0 0
      %3277 = vmatprep.subr.bf16.mxu0 0
      %3278 = vmatpush1.bf16.msra.mxu0 0
      %3279 = vmatprep.subr.bf16.mxu0 0
      %3280 = vmatpush1.bf16.msra.mxu0 0
      %3281 = vmatprep.subr.bf16.mxu0 0
      %3282 = vmatpush1.bf16.msra.mxu0 0
      %3283 = vmatprep.subr.bf16.mxu0 0
      %3284 = vmatpush1.bf16.msra.mxu0 0
      %3285 = vmatprep.subr.bf16.mxu0 0
      %3286 = vmatpush1.bf16.msra.mxu0 0
      %3287 = vmatprep.subr.bf16.mxu0 0
      %3288 = vmatpush1.bf16.msra.mxu0 0
      %3289 = vmatprep.mubr.bf16.mxu0 0
      %3290 = vmatmul.mubr.bf16.gmra.mrb[0].mxu0 %v3201
      %v3291 = vpop.f32.mrb[0].mxu0
      %v3292 = vadd.f32 0.0, %v3291
      %v3293 = vpop.f32.mrb[0].mxu0
      %v3294 = vpop.f32.mrb[0].mxu0
      %v3295 = vadd.f32 0.0, %v3294
      %v3296 = vpop.f32.mrb[0].mxu0
      %3297 = vmatprep.mubr.bf16.mxu0 0
      %3298 = vmatmul.mubr.bf16.gmra.mrb[0].mxu0 %v3204
      %v3299 = vpop.f32.mrb[0].mxu0
      %v3300 = vadd.f32 0.0, %v3299
      %v3301 = vpop.f32.mrb[0].mxu0
      %v3302 = vpop.f32.mrb[0].mxu0
      %v3303 = vadd.f32 0.0, %v3302
      %v3304 = vpop.f32.mrb[0].mxu0
      %3305 = vmatprep.mubr.bf16.mxu0 0
      %3306 = vmatmul.mubr.bf16.gmra.mrb[0].mxu0 %v3207
      %v3307 = vpop.f32.mrb[0].mxu0
      %v3308 = vadd.f32 0.0, %v3307
      %v3309 = vpop.f32.mrb[0].mxu0
      %v3310 = vpop.f32.mrb[0].mxu0
      %v3311 = vadd.f32 0.0, %v3310
      %v3312 = vpop.f32.mrb[0].mxu0
      %3313 = vmatprep.mubr.bf16.mxu0 0
      %3314 = vmatmul.mubr.bf16.gmra.mrb[0].mxu0 %v3210
      %v3315 = vpop.f32.mrb[0].mxu0
      %v3316 = vadd.f32 0.0, %v3315
      %v3317 = vpop.f32.mrb[0].mxu0
      %v3318 = vpop.f32.mrb[0].mxu0
      %v3319 = vadd.f32 0.0, %v3318
      %v3320 = vpop.f32.mrb[0].mxu0
      %3321 = vmatprep.mubr.bf16.mxu0 0
      %3322 = vmatmul.mubr.bf16.gmra.mrb[0].mxu0 %v3213
      %v3323 = vpop.f32.mrb[0].mxu0
      %v3324 = vadd.f32 0.0, %v3323
      %v3325 = vpop.f32.mrb[0].mxu0
      %v3326 = vpop.f32.mrb[0].mxu0
      %v3327 = vadd.f32 0.0, %v3326
      %v3328 = vpop.f32.mrb[0].mxu0
      %3329 = vmatprep.mubr.bf16.mxu0 0
      %3330 = vmatmul.mubr.bf16.gmra.mrb[0].mxu0 %v3216
      %v3331 = vpop.f32.mrb[0].mxu0
      %v3332 = vadd.f32 0.0, %v3331
      %v3333 = vpop.f32.mrb[0].mxu0
      %v3334 = vpop.f32.mrb[0].mxu0
      %v3335 = vadd.f32 0.0, %v3334
      %v3336 = vpop.f32.mrb[0].mxu0
      %3337 = vmatprep.mubr.bf16.mxu0 0
      %3338 = vmatmul.mubr.bf16.gmra.mrb[0].mxu0 %v3219
      %v3339 = vpop.f32.mrb[0].mxu0
      %v3340 = vadd.f32 0.0, %v3339
      %v3341 = vpop.f32.mrb[0].mxu0
      %v3342 = vpop.f32.mrb[0].mxu0
      %v3343 = vadd.f32 0.0, %v3342
      %v3344 = vpop.f32.mrb[0].mxu0
      %3345 = vmatprep.mubr.bf16.mxu0 0
      %3346 = vmatmul.mubr.bf16.gmra.mrb[0].mxu0 %v3222
      %v3347 = vpop.f32.mrb[0].mxu0
      %v3348 = vadd.f32 0.0, %v3347
      %v3349 = vpop.f32.mrb[0].mxu0
      %v3350 = vpop.f32.mrb[0].mxu0
      %v3351 = vadd.f32 0.0, %v3350
      %v3352 = vpop.f32.mrb[0].mxu0
      %3353 = vmatprep.mubr.bf16.mxu0 0
      %3354 = vmatmul.mubr.bf16.gmra.mrb[0].mxu0 %v3225
      %v3355 = vpop.f32.mrb[0].mxu0
      %v3356 = vadd.f32 0.0, %v3355
      %v3357 = vpop.f32.mrb[0].mxu0
      %v3358 = vpop.f32.mrb[0].mxu0
      %v3359 = vadd.f32 0.0, %v3358
      %v3360 = vpop.f32.mrb[0].mxu0
      %3361 = vmatprep.mubr.bf16.mxu0 0
      %3362 = vmatmul.mubr.bf16.gmra.mrb[0].mxu0 %v3228
      %v3363 = vpop.f32.mrb[0].mxu0
      %v3364 = vadd.f32 0.0, %v3363
      %v3365 = vpop.f32.mrb[0].mxu0
      %v3366 = vpop.f32.mrb[0].mxu0
      %v3367 = vadd.f32 0.0, %v3366
      %v3368 = vpop.f32.mrb[0].mxu0
      %3369 = vmatprep.mubr.bf16.mxu0 0
      %3370 = vmatmul.mubr.bf16.gmra.mrb[0].mxu0 %v3231
      %v3371 = vpop.f32.mrb[0].mxu0
      %v3372 = vadd.f32 0.0, %v3371
      %v3373 = vpop.f32.mrb[0].mxu0
      %v3374 = vpop.f32.mrb[0].mxu0
      %v3375 = vadd.f32 0.0, %v3374
      %v3376 = vpop.f32.mrb[0].mxu0
      %3377 = vmatprep.mubr.bf16.mxu0 0
      %3378 = vmatmul.mubr.bf16.gmra.mrb[0].mxu0 %v3234
      %v3379 = vpop.f32.mrb[0].mxu0
      %v3380 = vadd.f32 0.0, %v3379
      %v3381 = vpop.f32.mrb[0].mxu0
      %v3382 = vpop.f32.mrb[0].mxu0
      %v3383 = vadd.f32 0.0, %v3382
      %v3384 = vpop.f32.mrb[0].mxu0
      %3385 = vmatprep.mubr.bf16.mxu0 0
      %3386 = vmatmul.mubr.bf16.gmra.mrb[0].mxu0 %v3237
      %v3387 = vpop.f32.mrb[0].mxu0
      %v3388 = vadd.f32 0.0, %v3387
      %v3389 = vpop.f32.mrb[0].mxu0
      %v3390 = vpop.f32.mrb[0].mxu0
      %v3391 = vadd.f32 0.0, %v3390
      %v3392 = vpop.f32.mrb[0].mxu0
      %3393 = vmatprep.mubr.bf16.mxu0 0
      %3394 = vmatmul.mubr.bf16.gmra.mrb[0].mxu0 %v3240
      %v3395 = vpop.f32.mrb[0].mxu0
      %v3396 = vadd.f32 0.0, %v3395
      %v3397 = vpop.f32.mrb[0].mxu0
      %v3398 = vpop.f32.mrb[0].mxu0
      %v3399 = vadd.f32 0.0, %v3398
      %v3400 = vpop.f32.mrb[0].mxu0
      %3401 = vmatprep.mubr.bf16.mxu0 0
      %3402 = vmatmul.mubr.bf16.gmra.mrb[0].mxu0 %v3243
      %v3403 = vpop.f32.mrb[0].mxu0
      %v3404 = vadd.f32 0.0, %v3403
      %v3405 = vpop.f32.mrb[0].mxu0
      %v3406 = vpop.f32.mrb[0].mxu0
      %v3407 = vadd.f32 0.0, %v3406
      %v3408 = vpop.f32.mrb[0].mxu0
      %3409 = vmatprep.mubr.bf16.mxu0 0
      %3410 = vmatmul.mubr.bf16.gmra.mrb[0].mxu0 %v3246
      %v3411 = vpop.f32.mrb[0].mxu0
      %v3412 = vadd.f32 0.0, %v3411
      %v3413 = vpop.f32.mrb[0].mxu0
      %v3414 = vpop.f32.mrb[0].mxu0
      %v3415 = vadd.f32 0.0, %v3414
      %v3416 = vpop.f32.mrb[0].mxu0
      %3417 = vmatprep.mubr.bf16.mxu0 0
      %3418 = vmatmul.mubr.bf16.gmra.mrb[0].mxu0 %v3249
      %v3419 = vpop.f32.mrb[0].mxu0
      %v3420 = vadd.f32 0.0, %v3419
      %v3421 = vpop.f32.mrb[0].mxu0
      %v3422 = vpop.f32.mrb[0].mxu0
      %v3423 = vadd.f32 0.0, %v3422
      %v3424 = vpop.f32.mrb[0].mxu0
      %3425 = vmatprep.mubr.bf16.mxu0 0
      %3426 = vmatmul.mubr.bf16.gmra.mrb[0].mxu0 %v3252
      %v3427 = vpop.f32.mrb[0].mxu0
      %v3428 = vadd.f32 0.0, %v3427
      %v3429 = vpop.f32.mrb[0].mxu0
      %v3430 = vpop.f32.mrb[0].mxu0
      %v3431 = vadd.f32 0.0, %v3430
      %v3432 = vpop.f32.mrb[0].mxu0
      %3433 = vdwg.mxu0
      %v3434 = vadd.f32 %v3031, %v3292
      %v3435 = vadd.f32 %v3032, %v3295
      %v3436 = vadd.f32 %v3033, %v3300
      %v3437 = vadd.f32 %v3034, %v3303
      %v3438 = vadd.f32 %v3035, %v3308
      %v3439 = vadd.f32 %v3036, %v3311
      %v3440 = vadd.f32 %v3037, %v3316
      %v3441 = vadd.f32 %v3038, %v3319
      %v3442 = vadd.f32 %v3039, %v3324
      %v3443 = vadd.f32 %v3040, %v3327
      %v3444 = vadd.f32 %v3041, %v3332
      %v3445 = vadd.f32 %v3042, %v3335
      %v3446 = vadd.f32 %v3043, %v3340
      %v3447 = vadd.f32 %v3044, %v3343
      %v3448 = vadd.f32 %v3045, %v3348
      %v3449 = vadd.f32 %v3046, %v3351
      %v3450 = vadd.f32 %v3047, %v3356
      %v3451 = vadd.f32 %v3048, %v3359
      %v3452 = vadd.f32 %v3049, %v3364
      %v3453 = vadd.f32 %v3050, %v3367
      %v3454 = vadd.f32 %v3051, %v3372
      %v3455 = vadd.f32 %v3052, %v3375
      %v3456 = vadd.f32 %v3053, %v3380
      %v3457 = vadd.f32 %v3054, %v3383
      %v3458 = vadd.f32 %v3055, %v3388
      %v3459 = vadd.f32 %v3056, %v3391
      %v3460 = vadd.f32 %v3057, %v3396
      %v3461 = vadd.f32 %v3058, %v3399
      %v3462 = vadd.f32 %v3059, %v3404
      %v3463 = vadd.f32 %v3060, %v3407
      %v3464 = vadd.f32 %v3061, %v3412
      %v3465 = vadd.f32 %v3062, %v3415
      %v3466 = vadd.f32 %v3063, %v3420
      %v3467 = vadd.f32 %v3064, %v3423
      %v3468 = vadd.f32 %v3065, %v3428
      %v3469 = vadd.f32 %v3066, %v3431
      %3470 = vst.msk [vmem:[#allocation2] sm:$0xff] %vm195, %v3434
      %3471 = vst.msk [vmem:[#allocation2 + $0x8] sm:$0xff] %vm195, %v3435
      %3472 = vst.msk [vmem:[#allocation2 + $0x10] sm:$0xff] %vm195, %v3436
      %3473 = vst.msk [vmem:[#allocation2 + $0x18] sm:$0xff] %vm195, %v3437
      %3474 = vst.msk [vmem:[#allocation2 + $0x20] sm:$0xff] %vm195, %v3438
      %3475 = vst.msk [vmem:[#allocation2 + $0x28] sm:$0xff] %vm195, %v3439
      %3476 = vst.msk [vmem:[#allocation2 + $0x30] sm:$0xff] %vm195, %v3440
      %3477 = vst.msk [vmem:[#allocation2 + $0x38] sm:$0xff] %vm195, %v3441
      %3478 = vst.msk [vmem:[#allocation2 + $0x40] sm:$0xff] %vm195, %v3442
      %3479 = vst.msk [vmem:[#allocation2 + $0x48] sm:$0xff] %vm195, %v3443
      %3480 = vst.msk [vmem:[#allocation2 + $0x50] sm:$0xff] %vm195, %v3444
      %3481 = vst.msk [vmem:[#allocation2 + $0x58] sm:$0xff] %vm195, %v3445
      %3482 = vst.msk [vmem:[#allocation2 + $0x60] sm:$0xff] %vm195, %v3446
      %3483 = vst.msk [vmem:[#allocation2 + $0x68] sm:$0xff] %vm195, %v3447
      %3484 = vst.msk [vmem:[#allocation2 + $0x70] sm:$0xff] %vm195, %v3448
      %3485 = vst.msk [vmem:[#allocation2 + $0x78] sm:$0xff] %vm195, %v3449
      %3486 = vst.msk [vmem:[#allocation2 + $0x80] sm:$0xff] %vm195, %v3450
      %3487 = vst.msk [vmem:[#allocation2 + $0x88] sm:$0xff] %vm195, %v3451
      %3488 = vst.msk [vmem:[#allocation2 + $0x90] sm:$0xff] %vm195, %v3452
      %3489 = vst.msk [vmem:[#allocation2 + $0x98] sm:$0xff] %vm195, %v3453
      %3490 = vst.msk [vmem:[#allocation2 + $0xa0] sm:$0xff] %vm195, %v3454
      %3491 = vst.msk [vmem:[#allocation2 + $0xa8] sm:$0xff] %vm195, %v3455
      %3492 = vst.msk [vmem:[#allocation2 + $0xb0] sm:$0xff] %vm195, %v3456
      %3493 = vst.msk [vmem:[#allocation2 + $0xb8] sm:$0xff] %vm195, %v3457
      %3494 = vst.msk [vmem:[#allocation2 + $0xc0] sm:$0xff] %vm195, %v3458
      %3495 = vst.msk [vmem:[#allocation2 + $0xc8] sm:$0xff] %vm195, %v3459
      %3496 = vst.msk [vmem:[#allocation2 + $0xd0] sm:$0xff] %vm195, %v3460
      %3497 = vst.msk [vmem:[#allocation2 + $0xd8] sm:$0xff] %vm195, %v3461
      %3498 = vst.msk [vmem:[#allocation2 + $0xe0] sm:$0xff] %vm195, %v3462
      %3499 = vst.msk [vmem:[#allocation2 + $0xe8] sm:$0xff] %vm195, %v3463
      %3500 = vst.msk [vmem:[#allocation2 + $0xf0] sm:$0xff] %vm195, %v3464
      %3501 = vst.msk [vmem:[#allocation2 + $0xf8] sm:$0xff] %vm195, %v3465
      %3502 = vst.msk [vmem:[#allocation2 + $0x100] sm:$0xff] %vm195, %v3466
      %3503 = vst.msk [vmem:[#allocation2 + $0x108] sm:$0xff] %vm195, %v3467
      %3504 = vst.msk [vmem:[#allocation2 + $0x110] sm:$0xff] %vm195, %v3468
      %3505 = vst.msk [vmem:[#allocation2 + $0x118] sm:$0xff] %vm195, %v3469
      %v3506 = vld [vmem:[%s183 + $0x10] sm:$0xc]
      %v3507 = vld [vmem:[%s183 + $0x14] sm:$0xf]
      %v3508 = vld [vmem:[%s183 + $0x18] sm:$0xf]
      %v3509 = vld [vmem:[%s183 + $0x1c] sm:$0xf]
      %v3510 = vld [vmem:[%s183 + $0x20] sm:$0xf]
      %v3511 = vld [vmem:[%s183 + $0x24] sm:$0xf]
      %v3512 = vld [vmem:[%s183 + $0x28] sm:$0xf]
      %v3513 = vld [vmem:[%s183 + $0x2c] sm:$0xf]
      %v3514 = vld [vmem:[%s183 + $0x30] sm:$0xf]
      %v3515 = vld [vmem:[%s183 + $0x34] sm:$0xf]
      %v3516 = vld [vmem:[%s183 + $0x38] sm:$0xf]
      %v3517 = vld [vmem:[%s183 + $0x3c] sm:$0xf]
      %v3518 = vld [vmem:[%s183 + $0x40] sm:$0xf]
      %v3519 = vld [vmem:[%s183 + $0x44] sm:$0xf]
      %v3520 = vld [vmem:[%s183 + $0x48] sm:$0xf]
      %v3521 = vld [vmem:[%s183 + $0x4c] sm:$0xf]
      %v3522 = vld [vmem:[%s183 + $0x50] sm:$0xf]
      %v3523 = vld [vmem:[%s183 + $0x54] sm:$0xf]
      %v3524 = vld [vmem:[%s183 + $0x58] sm:$0xf]
      %v3525 = vld [vmem:[%s183 + $0x5c] sm:$0xf]
      %v3526 = vld [vmem:[%s183 + $0x60] sm:$0xf]
      %v3527 = vld [vmem:[%s183 + $0x64] sm:$0xf]
      %v3528 = vld [vmem:[%s183 + $0x68] sm:$0xf]
      %v3529 = vld [vmem:[%s183 + $0x6c] sm:$0xf]
      %v3530 = vld [vmem:[%s183 + $0x70] sm:$0xf]
      %v3531 = vld [vmem:[%s183 + $0x74] sm:$0xf]
      %v3532 = vld [vmem:[%s183 + $0x78] sm:$0xf]
      %v3533 = vld [vmem:[%s183 + $0x7c] sm:$0xf]
      %v3534 = vld [vmem:[%s183 + $0x80] sm:$0xf]
      %v3535 = vld [vmem:[%s183 + $0x84] sm:$0xf]
      %v3536 = vld [vmem:[%s183 + $0x88] sm:$0xf]
      %v3537 = vld [vmem:[%s183 + $0x8c] sm:$0xf]
      %v3538 = vld [vmem:[%s183 + $0x90] sm:$0xf]
      %v3539 = vld [vmem:[%s183 + $0x94] sm:$0xf]
      %v3540 = vld [vmem:[%s183 + $0x98] sm:$0xf]
      %v3541 = vld [vmem:[%s183 + $0x9c] sm:$0xf]
      %v3542 = vld [vmem:[%s183 + $0xa0] sm:$0x3]
      %v3543 = vld [vmem:[#allocation2] sm:$0xff]
      %v3544 = vld [vmem:[#allocation2 + $0x8] sm:$0xff]
      %v3545 = vld [vmem:[#allocation2 + $0x10] sm:$0xff]
      %v3546 = vld [vmem:[#allocation2 + $0x18] sm:$0xff]
      %v3547 = vld [vmem:[#allocation2 + $0x20] sm:$0xff]
      %v3548 = vld [vmem:[#allocation2 + $0x28] sm:$0xff]
      %v3549 = vld [vmem:[#allocation2 + $0x30] sm:$0xff]
      %v3550 = vld [vmem:[#allocation2 + $0x38] sm:$0xff]
      %v3551 = vld [vmem:[#allocation2 + $0x40] sm:$0xff]
      %v3552 = vld [vmem:[#allocation2 + $0x48] sm:$0xff]
      %v3553 = vld [vmem:[#allocation2 + $0x50] sm:$0xff]
      %v3554 = vld [vmem:[#allocation2 + $0x58] sm:$0xff]
      %v3555 = vld [vmem:[#allocation2 + $0x60] sm:$0xff]
      %v3556 = vld [vmem:[#allocation2 + $0x68] sm:$0xff]
      %v3557 = vld [vmem:[#allocation2 + $0x70] sm:$0xff]
      %v3558 = vld [vmem:[#allocation2 + $0x78] sm:$0xff]
      %v3559 = vld [vmem:[#allocation2 + $0x80] sm:$0xff]
      %v3560 = vld [vmem:[#allocation2 + $0x88] sm:$0xff]
      %v3561 = vld [vmem:[#allocation2 + $0x90] sm:$0xff]
      %v3562 = vld [vmem:[#allocation2 + $0x98] sm:$0xff]
      %v3563 = vld [vmem:[#allocation2 + $0xa0] sm:$0xff]
      %v3564 = vld [vmem:[#allocation2 + $0xa8] sm:$0xff]
      %v3565 = vld [vmem:[#allocation2 + $0xb0] sm:$0xff]
      %v3566 = vld [vmem:[#allocation2 + $0xb8] sm:$0xff]
      %v3567 = vld [vmem:[#allocation2 + $0xc0] sm:$0xff]
      %v3568 = vld [vmem:[#allocation2 + $0xc8] sm:$0xff]
      %v3569 = vld [vmem:[#allocation2 + $0xd0] sm:$0xff]
      %v3570 = vld [vmem:[#allocation2 + $0xd8] sm:$0xff]
      %v3571 = vld [vmem:[#allocation2 + $0xe0] sm:$0xff]
      %v3572 = vld [vmem:[#allocation2 + $0xe8] sm:$0xff]
      %v3573 = vld [vmem:[#allocation2 + $0xf0] sm:$0xff]
      %v3574 = vld [vmem:[#allocation2 + $0xf8] sm:$0xff]
      %v3575 = vld [vmem:[#allocation2 + $0x100] sm:$0xff]
      %v3576 = vld [vmem:[#allocation2 + $0x108] sm:$0xff]
      %v3577 = vld [vmem:[#allocation2 + $0x110] sm:$0xff]
      %v3578 = vld [vmem:[#allocation2 + $0x118] sm:$0xff]
      %s3579 = scalar_lea.vmem %s1, 12
      %v3580 = vld [vmem:[%s3579] sm:$0x3]
      %v3618 = vunpack.c.l.b16 %v3506
      %v3619 = vunpack.c.l.b16 %v3507
      %v3620 = vunpack.c.l.b16 %v3508
      %v3621 = vunpack.c.l.b16 %v3509
      %v3622 = vunpack.c.l.b16 %v3510
      %v3623 = vunpack.c.l.b16 %v3511
      %v3624 = vunpack.c.l.b16 %v3512
      %v3625 = vunpack.c.l.b16 %v3513
      %v3626 = vunpack.c.l.b16 %v3514
      %v3627 = vunpack.c.l.b16 %v3515
      %v3628 = vunpack.c.l.b16 %v3516
      %v3629 = vunpack.c.l.b16 %v3517
      %v3630 = vunpack.c.l.b16 %v3518
      %v3631 = vunpack.c.l.b16 %v3519
      %v3632 = vunpack.c.l.b16 %v3520
      %v3633 = vunpack.c.l.b16 %v3521
      %v3634 = vunpack.c.l.b16 %v3522
      %v3635 = vunpack.c.l.b16 %v3523
      %v3636 = vunpack.c.l.b16 %v3524
      %v3637 = vunpack.c.l.b16 %v3525
      %v3638 = vunpack.c.l.b16 %v3526
      %v3639 = vunpack.c.l.b16 %v3527
      %v3640 = vunpack.c.l.b16 %v3528
      %v3641 = vunpack.c.l.b16 %v3529
      %v3642 = vunpack.c.l.b16 %v3530
      %v3643 = vunpack.c.l.b16 %v3531
      %v3644 = vunpack.c.l.b16 %v3532
      %v3645 = vunpack.c.l.b16 %v3533
      %v3646 = vunpack.c.l.b16 %v3534
      %v3647 = vunpack.c.l.b16 %v3535
      %v3648 = vunpack.c.l.b16 %v3536
      %v3649 = vunpack.c.l.b16 %v3537
      %v3650 = vunpack.c.l.b16 %v3538
      %v3651 = vunpack.c.l.b16 %v3539
      %v3652 = vunpack.c.l.b16 %v3540
      %v3653 = vunpack.c.l.b16 %v3541
      %v3654 = vunpack.c.l.b16 %v3542
      %v3655 = vpack.c.b16 %v3619, %v3618
      %v3656 = vpack.c.b16 %v3621, %v3620
      %v3657 = vpack.c.b16 %v3623, %v3622
      %v3658 = vpack.c.b16 %v3625, %v3624
      %v3659 = vpack.c.b16 %v3627, %v3626
      %v3660 = vpack.c.b16 %v3629, %v3628
      %v3661 = vpack.c.b16 %v3631, %v3630
      %v3662 = vpack.c.b16 %v3633, %v3632
      %v3663 = vpack.c.b16 %v3635, %v3634
      %v3664 = vpack.c.b16 %v3637, %v3636
      %v3665 = vpack.c.b16 %v3639, %v3638
      %v3666 = vpack.c.b16 %v3641, %v3640
      %v3667 = vpack.c.b16 %v3643, %v3642
      %v3668 = vpack.c.b16 %v3645, %v3644
      %v3669 = vpack.c.b16 %v3647, %v3646
      %v3670 = vpack.c.b16 %v3649, %v3648
      %v3671 = vpack.c.b16 %v3651, %v3650
      %v3672 = vpack.c.b16 %v3653, %v3652
      %v3673 = vpack.c.b16 %v3654, %v3654
      %v3674 = vrot.slane %v3655, 2
      %v3675 = vrot.slane %v3656, 2
      %v3676 = vsel %vm3162, %v3674, %v3675
      %v3677 = vrot.slane %v3657, 2
      %v3678 = vsel %vm3162, %v3675, %v3677
      %v3679 = vrot.slane %v3658, 2
      %v3680 = vsel %vm3162, %v3677, %v3679
      %v3681 = vrot.slane %v3659, 2
      %v3682 = vsel %vm3162, %v3679, %v3681
      %v3683 = vrot.slane %v3660, 2
      %v3684 = vsel %vm3162, %v3681, %v3683
      %v3685 = vrot.slane %v3661, 2
      %v3686 = vsel %vm3162, %v3683, %v3685
      %v3687 = vrot.slane %v3662, 2
      %v3688 = vsel %vm3162, %v3685, %v3687
      %v3689 = vrot.slane %v3663, 2
      %v3690 = vsel %vm3162, %v3687, %v3689
      %v3691 = vrot.slane %v3664, 2
      %v3692 = vsel %vm3162, %v3689, %v3691
      %v3693 = vrot.slane %v3665, 2
      %v3694 = vsel %vm3162, %v3691, %v3693
      %v3695 = vrot.slane %v3666, 2
      %v3696 = vsel %vm3162, %v3693, %v3695
      %v3697 = vrot.slane %v3667, 2
      %v3698 = vsel %vm3162, %v3695, %v3697
      %v3699 = vrot.slane %v3668, 2
      %v3700 = vsel %vm3162, %v3697, %v3699
      %v3701 = vrot.slane %v3669, 2
      %v3702 = vsel %vm3162, %v3699, %v3701
      %v3703 = vrot.slane %v3670, 2
      %v3704 = vsel %vm3162, %v3701, %v3703
      %v3705 = vrot.slane %v3671, 2
      %v3706 = vsel %vm3162, %v3703, %v3705
      %v3707 = vrot.slane %v3672, 2
      %v3708 = vsel %vm3162, %v3705, %v3707
      %v3709 = vrot.slane %v3673, 2
      %v3710 = vsel %vm3162, %v3707, %v3709
      %v3712 = vsel %vm395, %v3676, 0
      %v3715 = vsel %vm395, %v3678, 0
      %v3718 = vsel %vm395, %v3680, 0
      %v3721 = vsel %vm395, %v3682, 0
      %v3724 = vsel %vm395, %v3684, 0
      %v3727 = vsel %vm395, %v3686, 0
      %v3730 = vsel %vm395, %v3688, 0
      %v3733 = vsel %vm395, %v3690, 0
      %v3736 = vsel %vm395, %v3692, 0
      %v3739 = vsel %vm395, %v3694, 0
      %v3742 = vsel %vm395, %v3696, 0
      %v3745 = vsel %vm395, %v3698, 0
      %v3748 = vsel %vm395, %v3700, 0
      %v3751 = vsel %vm395, %v3702, 0
      %v3754 = vsel %vm395, %v3704, 0
      %v3757 = vsel %vm395, %v3706, 0
      %v3760 = vsel %vm395, %v3708, 0
      %v3763 = vsel %vm395, %v3710, 0
      %v3766 = vsel %vm450, %v3580, 0
      %3768 = vmatprep.subr.bf16.mxu0 0
      %3769 = vmatpush1.bf16.msra.mxu0 %v3766
      %3770 = vmatprep.subr.bf16.mxu0 0
      %3771 = vmatpush1.bf16.msra.mxu0 0
      %3772 = vmatprep.subr.bf16.mxu0 0
      %3773 = vmatpush1.bf16.msra.mxu0 0
      %3774 = vmatprep.subr.bf16.mxu0 0
      %3775 = vmatpush1.bf16.msra.mxu0 0
      %3776 = vmatprep.subr.bf16.mxu0 0
      %3777 = vmatpush1.bf16.msra.mxu0 0
      %3778 = vmatprep.subr.bf16.mxu0 0
      %3779 = vmatpush1.bf16.msra.mxu0 0
      %3780 = vmatprep.subr.bf16.mxu0 0
      %3781 = vmatpush1.bf16.msra.mxu0 0
      %3782 = vmatprep.subr.bf16.mxu0 0
      %3783 = vmatpush1.bf16.msra.mxu0 0
      %3784 = vmatprep.subr.bf16.mxu0 0
      %3785 = vmatpush1.bf16.msra.mxu0 0
      %3786 = vmatprep.subr.bf16.mxu0 0
      %3787 = vmatpush1.bf16.msra.mxu0 0
      %3788 = vmatprep.subr.bf16.mxu0 0
      %3789 = vmatpush1.bf16.msra.mxu0 0
      %3790 = vmatprep.subr.bf16.mxu0 0
      %3791 = vmatpush1.bf16.msra.mxu0 0
      %3792 = vmatprep.subr.bf16.mxu0 0
      %3793 = vmatpush1.bf16.msra.mxu0 0
      %3794 = vmatprep.subr.bf16.mxu0 0
      %3795 = vmatpush1.bf16.msra.mxu0 0
      %3796 = vmatprep.subr.bf16.mxu0 0
      %3797 = vmatpush1.bf16.msra.mxu0 0
      %3798 = vmatprep.subr.bf16.mxu0 0
      %3799 = vmatpush1.bf16.msra.mxu0 0
      %3800 = vmatprep.mubr.bf16.mxu0 0
      %3801 = vmatmul.mubr.bf16.gmra.mrb[0].mxu0 %v3712
      %v3802 = vpop.f32.mrb[0].mxu0
      %v3803 = vadd.f32 0.0, %v3802
      %v3804 = vpop.f32.mrb[0].mxu0
      %v3805 = vpop.f32.mrb[0].mxu0
      %v3806 = vadd.f32 0.0, %v3805
      %v3807 = vpop.f32.mrb[0].mxu0
      %3808 = vmatprep.mubr.bf16.mxu0 0
      %3809 = vmatmul.mubr.bf16.gmra.mrb[0].mxu0 %v3715
      %v3810 = vpop.f32.mrb[0].mxu0
      %v3811 = vadd.f32 0.0, %v3810
      %v3812 = vpop.f32.mrb[0].mxu0
      %v3813 = vpop.f32.mrb[0].mxu0
      %v3814 = vadd.f32 0.0, %v3813
      %v3815 = vpop.f32.mrb[0].mxu0
      %3816 = vmatprep.mubr.bf16.mxu0 0
      %3817 = vmatmul.mubr.bf16.gmra.mrb[0].mxu0 %v3718
      %v3818 = vpop.f32.mrb[0].mxu0
      %v3819 = vadd.f32 0.0, %v3818
      %v3820 = vpop.f32.mrb[0].mxu0
      %v3821 = vpop.f32.mrb[0].mxu0
      %v3822 = vadd.f32 0.0, %v3821
      %v3823 = vpop.f32.mrb[0].mxu0
      %3824 = vmatprep.mubr.bf16.mxu0 0
      %3825 = vmatmul.mubr.bf16.gmra.mrb[0].mxu0 %v3721
      %v3826 = vpop.f32.mrb[0].mxu0
      %v3827 = vadd.f32 0.0, %v3826
      %v3828 = vpop.f32.mrb[0].mxu0
      %v3829 = vpop.f32.mrb[0].mxu0
      %v3830 = vadd.f32 0.0, %v3829
      %v3831 = vpop.f32.mrb[0].mxu0
      %3832 = vmatprep.mubr.bf16.mxu0 0
      %3833 = vmatmul.mubr.bf16.gmra.mrb[0].mxu0 %v3724
      %v3834 = vpop.f32.mrb[0].mxu0
      %v3835 = vadd.f32 0.0, %v3834
      %v3836 = vpop.f32.mrb[0].mxu0
      %v3837 = vpop.f32.mrb[0].mxu0
      %v3838 = vadd.f32 0.0, %v3837
      %v3839 = vpop.f32.mrb[0].mxu0
      %3840 = vmatprep.mubr.bf16.mxu0 0
      %3841 = vmatmul.mubr.bf16.gmra.mrb[0].mxu0 %v3727
      %v3842 = vpop.f32.mrb[0].mxu0
      %v3843 = vadd.f32 0.0, %v3842
      %v3844 = vpop.f32.mrb[0].mxu0
      %v3845 = vpop.f32.mrb[0].mxu0
      %v3846 = vadd.f32 0.0, %v3845
      %v3847 = vpop.f32.mrb[0].mxu0
      %3848 = vmatprep.mubr.bf16.mxu0 0
      %3849 = vmatmul.mubr.bf16.gmra.mrb[0].mxu0 %v3730
      %v3850 = vpop.f32.mrb[0].mxu0
      %v3851 = vadd.f32 0.0, %v3850
      %v3852 = vpop.f32.mrb[0].mxu0
      %v3853 = vpop.f32.mrb[0].mxu0
      %v3854 = vadd.f32 0.0, %v3853
      %v3855 = vpop.f32.mrb[0].mxu0
      %3856 = vmatprep.mubr.bf16.mxu0 0
      %3857 = vmatmul.mubr.bf16.gmra.mrb[0].mxu0 %v3733
      %v3858 = vpop.f32.mrb[0].mxu0
      %v3859 = vadd.f32 0.0, %v3858
      %v3860 = vpop.f32.mrb[0].mxu0
      %v3861 = vpop.f32.mrb[0].mxu0
      %v3862 = vadd.f32 0.0, %v3861
      %v3863 = vpop.f32.mrb[0].mxu0
      %3864 = vmatprep.mubr.bf16.mxu0 0
      %3865 = vmatmul.mubr.bf16.gmra.mrb[0].mxu0 %v3736
      %v3866 = vpop.f32.mrb[0].mxu0
      %v3867 = vadd.f32 0.0, %v3866
      %v3868 = vpop.f32.mrb[0].mxu0
      %v3869 = vpop.f32.mrb[0].mxu0
      %v3870 = vadd.f32 0.0, %v3869
      %v3871 = vpop.f32.mrb[0].mxu0
      %3872 = vmatprep.mubr.bf16.mxu0 0
      %3873 = vmatmul.mubr.bf16.gmra.mrb[0].mxu0 %v3739
      %v3874 = vpop.f32.mrb[0].mxu0
      %v3875 = vadd.f32 0.0, %v3874
      %v3876 = vpop.f32.mrb[0].mxu0
      %v3877 = vpop.f32.mrb[0].mxu0
      %v3878 = vadd.f32 0.0, %v3877
      %v3879 = vpop.f32.mrb[0].mxu0
      %3880 = vmatprep.mubr.bf16.mxu0 0
      %3881 = vmatmul.mubr.bf16.gmra.mrb[0].mxu0 %v3742
      %v3882 = vpop.f32.mrb[0].mxu0
      %v3883 = vadd.f32 0.0, %v3882
      %v3884 = vpop.f32.mrb[0].mxu0
      %v3885 = vpop.f32.mrb[0].mxu0
      %v3886 = vadd.f32 0.0, %v3885
      %v3887 = vpop.f32.mrb[0].mxu0
      %3888 = vmatprep.mubr.bf16.mxu0 0
      %3889 = vmatmul.mubr.bf16.gmra.mrb[0].mxu0 %v3745
      %v3890 = vpop.f32.mrb[0].mxu0
      %v3891 = vadd.f32 0.0, %v3890
      %v3892 = vpop.f32.mrb[0].mxu0
      %v3893 = vpop.f32.mrb[0].mxu0
      %v3894 = vadd.f32 0.0, %v3893
      %v3895 = vpop.f32.mrb[0].mxu0
      %3896 = vmatprep.mubr.bf16.mxu0 0
      %3897 = vmatmul.mubr.bf16.gmra.mrb[0].mxu0 %v3748
      %v3898 = vpop.f32.mrb[0].mxu0
      %v3899 = vadd.f32 0.0, %v3898
      %v3900 = vpop.f32.mrb[0].mxu0
      %v3901 = vpop.f32.mrb[0].mxu0
      %v3902 = vadd.f32 0.0, %v3901
      %v3903 = vpop.f32.mrb[0].mxu0
      %3904 = vmatprep.mubr.bf16.mxu0 0
      %3905 = vmatmul.mubr.bf16.gmra.mrb[0].mxu0 %v3751
      %v3906 = vpop.f32.mrb[0].mxu0
      %v3907 = vadd.f32 0.0, %v3906
      %v3908 = vpop.f32.mrb[0].mxu0
      %v3909 = vpop.f32.mrb[0].mxu0
      %v3910 = vadd.f32 0.0, %v3909
      %v3911 = vpop.f32.mrb[0].mxu0
      %3912 = vmatprep.mubr.bf16.mxu0 0
      %3913 = vmatmul.mubr.bf16.gmra.mrb[0].mxu0 %v3754
      %v3914 = vpop.f32.mrb[0].mxu0
      %v3915 = vadd.f32 0.0, %v3914
      %v3916 = vpop.f32.mrb[0].mxu0
      %v3917 = vpop.f32.mrb[0].mxu0
      %v3918 = vadd.f32 0.0, %v3917
      %v3919 = vpop.f32.mrb[0].mxu0
      %3920 = vmatprep.mubr.bf16.mxu0 0
      %3921 = vmatmul.mubr.bf16.gmra.mrb[0].mxu0 %v3757
      %v3922 = vpop.f32.mrb[0].mxu0
      %v3923 = vadd.f32 0.0, %v3922
      %v3924 = vpop.f32.mrb[0].mxu0
      %v3925 = vpop.f32.mrb[0].mxu0
      %v3926 = vadd.f32 0.0, %v3925
      %v3927 = vpop.f32.mrb[0].mxu0
      %3928 = vmatprep.mubr.bf16.mxu0 0
      %3929 = vmatmul.mubr.bf16.gmra.mrb[0].mxu0 %v3760
      %v3930 = vpop.f32.mrb[0].mxu0
      %v3931 = vadd.f32 0.0, %v3930
      %v3932 = vpop.f32.mrb[0].mxu0
      %v3933 = vpop.f32.mrb[0].mxu0
      %v3934 = vadd.f32 0.0, %v3933
      %v3935 = vpop.f32.mrb[0].mxu0
      %3936 = vmatprep.mubr.bf16.mxu0 0
      %3937 = vmatmul.mubr.bf16.gmra.mrb[0].mxu0 %v3763
      %v3938 = vpop.f32.mrb[0].mxu0
      %v3939 = vadd.f32 0.0, %v3938
      %v3940 = vpop.f32.mrb[0].mxu0
      %v3941 = vpop.f32.mrb[0].mxu0
      %v3942 = vadd.f32 0.0, %v3941
      %v3943 = vpop.f32.mrb[0].mxu0
      %3944 = vdwg.mxu0
      %v3945 = vadd.f32 %v3543, %v3803
      %v3946 = vadd.f32 %v3544, %v3806
      %v3947 = vadd.f32 %v3545, %v3811
      %v3948 = vadd.f32 %v3546, %v3814
      %v3949 = vadd.f32 %v3547, %v3819
      %v3950 = vadd.f32 %v3548, %v3822
      %v3951 = vadd.f32 %v3549, %v3827
      %v3952 = vadd.f32 %v3550, %v3830
      %v3953 = vadd.f32 %v3551, %v3835
      %v3954 = vadd.f32 %v3552, %v3838
      %v3955 = vadd.f32 %v3553, %v3843
      %v3956 = vadd.f32 %v3554, %v3846
      %v3957 = vadd.f32 %v3555, %v3851
      %v3958 = vadd.f32 %v3556, %v3854
      %v3959 = vadd.f32 %v3557, %v3859
      %v3960 = vadd.f32 %v3558, %v3862
      %v3961 = vadd.f32 %v3559, %v3867
      %v3962 = vadd.f32 %v3560, %v3870
      %v3963 = vadd.f32 %v3561, %v3875
      %v3964 = vadd.f32 %v3562, %v3878
      %v3965 = vadd.f32 %v3563, %v3883
      %v3966 = vadd.f32 %v3564, %v3886
      %v3967 = vadd.f32 %v3565, %v3891
      %v3968 = vadd.f32 %v3566, %v3894
      %v3969 = vadd.f32 %v3567, %v3899
      %v3970 = vadd.f32 %v3568, %v3902
      %v3971 = vadd.f32 %v3569, %v3907
      %v3972 = vadd.f32 %v3570, %v3910
      %v3973 = vadd.f32 %v3571, %v3915
      %v3974 = vadd.f32 %v3572, %v3918
      %v3975 = vadd.f32 %v3573, %v3923
      %v3976 = vadd.f32 %v3574, %v3926
      %v3977 = vadd.f32 %v3575, %v3931
      %v3978 = vadd.f32 %v3576, %v3934
      %v3979 = vadd.f32 %v3577, %v3939
      %v3980 = vadd.f32 %v3578, %v3942
      %3981 = vst.msk [vmem:[#allocation2] sm:$0xff] %vm195, %v3945
      %3982 = vst.msk [vmem:[#allocation2 + $0x8] sm:$0xff] %vm195, %v3946
      %3983 = vst.msk [vmem:[#allocation2 + $0x10] sm:$0xff] %vm195, %v3947
      %3984 = vst.msk [vmem:[#allocation2 + $0x18] sm:$0xff] %vm195, %v3948
      %3985 = vst.msk [vmem:[#allocation2 + $0x20] sm:$0xff] %vm195, %v3949
      %3986 = vst.msk [vmem:[#allocation2 + $0x28] sm:$0xff] %vm195, %v3950
      %3987 = vst.msk [vmem:[#allocation2 + $0x30] sm:$0xff] %vm195, %v3951
      %3988 = vst.msk [vmem:[#allocation2 + $0x38] sm:$0xff] %vm195, %v3952
      %3989 = vst.msk [vmem:[#allocation2 + $0x40] sm:$0xff] %vm195, %v3953
      %3990 = vst.msk [vmem:[#allocation2 + $0x48] sm:$0xff] %vm195, %v3954
      %3991 = vst.msk [vmem:[#allocation2 + $0x50] sm:$0xff] %vm195, %v3955
      %3992 = vst.msk [vmem:[#allocation2 + $0x58] sm:$0xff] %vm195, %v3956
      %3993 = vst.msk [vmem:[#allocation2 + $0x60] sm:$0xff] %vm195, %v3957
      %3994 = vst.msk [vmem:[#allocation2 + $0x68] sm:$0xff] %vm195, %v3958
      %3995 = vst.msk [vmem:[#allocation2 + $0x70] sm:$0xff] %vm195, %v3959
      %3996 = vst.msk [vmem:[#allocation2 + $0x78] sm:$0xff] %vm195, %v3960
      %3997 = vst.msk [vmem:[#allocation2 + $0x80] sm:$0xff] %vm195, %v3961
      %3998 = vst.msk [vmem:[#allocation2 + $0x88] sm:$0xff] %vm195, %v3962
      %3999 = vst.msk [vmem:[#allocation2 + $0x90] sm:$0xff] %vm195, %v3963
      %4000 = vst.msk [vmem:[#allocation2 + $0x98] sm:$0xff] %vm195, %v3964
      %4001 = vst.msk [vmem:[#allocation2 + $0xa0] sm:$0xff] %vm195, %v3965
      %4002 = vst.msk [vmem:[#allocation2 + $0xa8] sm:$0xff] %vm195, %v3966
      %4003 = vst.msk [vmem:[#allocation2 + $0xb0] sm:$0xff] %vm195, %v3967
      %4004 = vst.msk [vmem:[#allocation2 + $0xb8] sm:$0xff] %vm195, %v3968
      %4005 = vst.msk [vmem:[#allocation2 + $0xc0] sm:$0xff] %vm195, %v3969
      %4006 = vst.msk [vmem:[#allocation2 + $0xc8] sm:$0xff] %vm195, %v3970
      %4007 = vst.msk [vmem:[#allocation2 + $0xd0] sm:$0xff] %vm195, %v3971
      %4008 = vst.msk [vmem:[#allocation2 + $0xd8] sm:$0xff] %vm195, %v3972
      %4009 = vst.msk [vmem:[#allocation2 + $0xe0] sm:$0xff] %vm195, %v3973
      %4010 = vst.msk [vmem:[#allocation2 + $0xe8] sm:$0xff] %vm195, %v3974
      %4011 = vst.msk [vmem:[#allocation2 + $0xf0] sm:$0xff] %vm195, %v3975
      %4012 = vst.msk [vmem:[#allocation2 + $0xf8] sm:$0xff] %vm195, %v3976
      %4013 = vst.msk [vmem:[#allocation2 + $0x100] sm:$0xff] %vm195, %v3977
      %4014 = vst.msk [vmem:[#allocation2 + $0x108] sm:$0xff] %vm195, %v3978
      %4015 = vst.msk [vmem:[#allocation2 + $0x110] sm:$0xff] %vm195, %v3979
      %4016 = vst.msk [vmem:[#allocation2 + $0x118] sm:$0xff] %vm195, %v3980
      %v4017 = vld [vmem:[%s183 + $0x10] sm:$0xc]
      %v4018 = vld [vmem:[%s183 + $0x14] sm:$0xf]
      %v4019 = vld [vmem:[%s183 + $0x18] sm:$0xf]
      %v4020 = vld [vmem:[%s183 + $0x1c] sm:$0xf]
      %v4021 = vld [vmem:[%s183 + $0x20] sm:$0xf]
      %v4022 = vld [vmem:[%s183 + $0x24] sm:$0xf]
      %v4023 = vld [vmem:[%s183 + $0x28] sm:$0xf]
      %v4024 = vld [vmem:[%s183 + $0x2c] sm:$0xf]
      %v4025 = vld [vmem:[%s183 + $0x30] sm:$0xf]
      %v4026 = vld [vmem:[%s183 + $0x34] sm:$0xf]
      %v4027 = vld [vmem:[%s183 + $0x38] sm:$0xf]
      %v4028 = vld [vmem:[%s183 + $0x3c] sm:$0xf]
      %v4029 = vld [vmem:[%s183 + $0x40] sm:$0xf]
      %v4030 = vld [vmem:[%s183 + $0x44] sm:$0xf]
      %v4031 = vld [vmem:[%s183 + $0x48] sm:$0xf]
      %v4032 = vld [vmem:[%s183 + $0x4c] sm:$0xf]
      %v4033 = vld [vmem:[%s183 + $0x50] sm:$0xf]
      %v4034 = vld [vmem:[%s183 + $0x54] sm:$0xf]
      %v4035 = vld [vmem:[%s183 + $0x58] sm:$0xf]
      %v4036 = vld [vmem:[%s183 + $0x5c] sm:$0xf]
      %v4037 = vld [vmem:[%s183 + $0x60] sm:$0xf]
      %v4038 = vld [vmem:[%s183 + $0x64] sm:$0xf]
      %v4039 = vld [vmem:[%s183 + $0x68] sm:$0xf]
      %v4040 = vld [vmem:[%s183 + $0x6c] sm:$0xf]
      %v4041 = vld [vmem:[%s183 + $0x70] sm:$0xf]
      %v4042 = vld [vmem:[%s183 + $0x74] sm:$0xf]
      %v4043 = vld [vmem:[%s183 + $0x78] sm:$0xf]
      %v4044 = vld [vmem:[%s183 + $0x7c] sm:$0xf]
      %v4045 = vld [vmem:[%s183 + $0x80] sm:$0xf]
      %v4046 = vld [vmem:[%s183 + $0x84] sm:$0xf]
      %v4047 = vld [vmem:[%s183 + $0x88] sm:$0xf]
      %v4048 = vld [vmem:[%s183 + $0x8c] sm:$0xf]
      %v4049 = vld [vmem:[%s183 + $0x90] sm:$0xf]
      %v4050 = vld [vmem:[%s183 + $0x94] sm:$0xf]
      %v4051 = vld [vmem:[%s183 + $0x98] sm:$0xf]
      %v4052 = vld [vmem:[%s183 + $0x9c] sm:$0xf]
      %v4053 = vld [vmem:[%s183 + $0xa0] sm:$0x7]
      %v4054 = vld [vmem:[#allocation2] sm:$0xff]
      %v4055 = vld [vmem:[#allocation2 + $0x8] sm:$0xff]
      %v4056 = vld [vmem:[#allocation2 + $0x10] sm:$0xff]
      %v4057 = vld [vmem:[#allocation2 + $0x18] sm:$0xff]
      %v4058 = vld [vmem:[#allocation2 + $0x20] sm:$0xff]
      %v4059 = vld [vmem:[#allocation2 + $0x28] sm:$0xff]
      %v4060 = vld [vmem:[#allocation2 + $0x30] sm:$0xff]
      %v4061 = vld [vmem:[#allocation2 + $0x38] sm:$0xff]
      %v4062 = vld [vmem:[#allocation2 + $0x40] sm:$0xff]
      %v4063 = vld [vmem:[#allocation2 + $0x48] sm:$0xff]
      %v4064 = vld [vmem:[#allocation2 + $0x50] sm:$0xff]
      %v4065 = vld [vmem:[#allocation2 + $0x58] sm:$0xff]
      %v4066 = vld [vmem:[#allocation2 + $0x60] sm:$0xff]
      %v4067 = vld [vmem:[#allocation2 + $0x68] sm:$0xff]
      %v4068 = vld [vmem:[#allocation2 + $0x70] sm:$0xff]
      %v4069 = vld [vmem:[#allocation2 + $0x78] sm:$0xff]
      %v4070 = vld [vmem:[#allocation2 + $0x80] sm:$0xff]
      %v4071 = vld [vmem:[#allocation2 + $0x88] sm:$0xff]
      %v4072 = vld [vmem:[#allocation2 + $0x90] sm:$0xff]
      %v4073 = vld [vmem:[#allocation2 + $0x98] sm:$0xff]
      %v4074 = vld [vmem:[#allocation2 + $0xa0] sm:$0xff]
      %v4075 = vld [vmem:[#allocation2 + $0xa8] sm:$0xff]
      %v4076 = vld [vmem:[#allocation2 + $0xb0] sm:$0xff]
      %v4077 = vld [vmem:[#allocation2 + $0xb8] sm:$0xff]
      %v4078 = vld [vmem:[#allocation2 + $0xc0] sm:$0xff]
      %v4079 = vld [vmem:[#allocation2 + $0xc8] sm:$0xff]
      %v4080 = vld [vmem:[#allocation2 + $0xd0] sm:$0xff]
      %v4081 = vld [vmem:[#allocation2 + $0xd8] sm:$0xff]
      %v4082 = vld [vmem:[#allocation2 + $0xe0] sm:$0xff]
      %v4083 = vld [vmem:[#allocation2 + $0xe8] sm:$0xff]
      %v4084 = vld [vmem:[#allocation2 + $0xf0] sm:$0xff]
      %v4085 = vld [vmem:[#allocation2 + $0xf8] sm:$0xff]
      %v4086 = vld [vmem:[#allocation2 + $0x100] sm:$0xff]
      %v4087 = vld [vmem:[#allocation2 + $0x108] sm:$0xff]
      %v4088 = vld [vmem:[#allocation2 + $0x110] sm:$0xff]
      %v4089 = vld [vmem:[#allocation2 + $0x118] sm:$0xff]
      %s4090 = scalar_lea.vmem %s1, 14
      %v4091 = vld [vmem:[%s4090] sm:$0x3]
      %v4129 = vunpack.c.l.b16 %v4017
      %v4130 = vunpack.c.l.b16 %v4018
      %v4131 = vunpack.c.l.b16 %v4019
      %v4132 = vunpack.c.l.b16 %v4020
      %v4133 = vunpack.c.l.b16 %v4021
      %v4134 = vunpack.c.l.b16 %v4022
      %v4135 = vunpack.c.l.b16 %v4023
      %v4136 = vunpack.c.l.b16 %v4024
      %v4137 = vunpack.c.l.b16 %v4025
      %v4138 = vunpack.c.l.b16 %v4026
      %v4139 = vunpack.c.l.b16 %v4027
      %v4140 = vunpack.c.l.b16 %v4028
      %v4141 = vunpack.c.l.b16 %v4029
      %v4142 = vunpack.c.l.b16 %v4030
      %v4143 = vunpack.c.l.b16 %v4031
      %v4144 = vunpack.c.l.b16 %v4032
      %v4145 = vunpack.c.l.b16 %v4033
      %v4146 = vunpack.c.l.b16 %v4034
      %v4147 = vunpack.c.l.b16 %v4035
      %v4148 = vunpack.c.l.b16 %v4036
      %v4149 = vunpack.c.l.b16 %v4037
      %v4150 = vunpack.c.l.b16 %v4038
      %v4151 = vunpack.c.l.b16 %v4039
      %v4152 = vunpack.c.l.b16 %v4040
      %v4153 = vunpack.c.l.b16 %v4041
      %v4154 = vunpack.c.l.b16 %v4042
      %v4155 = vunpack.c.l.b16 %v4043
      %v4156 = vunpack.c.l.b16 %v4044
      %v4157 = vunpack.c.l.b16 %v4045
      %v4158 = vunpack.c.l.b16 %v4046
      %v4159 = vunpack.c.l.b16 %v4047
      %v4160 = vunpack.c.l.b16 %v4048
      %v4161 = vunpack.c.l.b16 %v4049
      %v4162 = vunpack.c.l.b16 %v4050
      %v4163 = vunpack.c.l.b16 %v4051
      %v4164 = vunpack.c.l.b16 %v4052
      %v4165 = vunpack.c.l.b16 %v4053
      %v4166 = vpack.c.b16 %v4130, %v4129
      %v4167 = vpack.c.b16 %v4132, %v4131
      %v4168 = vpack.c.b16 %v4134, %v4133
      %v4169 = vpack.c.b16 %v4136, %v4135
      %v4170 = vpack.c.b16 %v4138, %v4137
      %v4171 = vpack.c.b16 %v4140, %v4139
      %v4172 = vpack.c.b16 %v4142, %v4141
      %v4173 = vpack.c.b16 %v4144, %v4143
      %v4174 = vpack.c.b16 %v4146, %v4145
      %v4175 = vpack.c.b16 %v4148, %v4147
      %v4176 = vpack.c.b16 %v4150, %v4149
      %v4177 = vpack.c.b16 %v4152, %v4151
      %v4178 = vpack.c.b16 %v4154, %v4153
      %v4179 = vpack.c.b16 %v4156, %v4155
      %v4180 = vpack.c.b16 %v4158, %v4157
      %v4181 = vpack.c.b16 %v4160, %v4159
      %v4182 = vpack.c.b16 %v4162, %v4161
      %v4183 = vpack.c.b16 %v4164, %v4163
      %v4184 = vpack.c.b16 %v4165, %v4165
      %vm4185 = vsmask.f32 5376
      %v4187 = vshrl.u32 %v4166, 16
      %v4189 = vrot.slane %v4187, 2
      %v4190 = vshll.u32 %v4166, 16
      %v4192 = vrot.slane %v4190, 3
      %v4193 = vor.u32 %v4189, %v4192
      %v4195 = vshrl.u32 %v4167, 16
      %v4197 = vrot.slane %v4195, 2
      %v4198 = vshll.u32 %v4167, 16
      %v4200 = vrot.slane %v4198, 3
      %v4201 = vor.u32 %v4197, %v4200
      %v4202 = vsel %vm4185, %v4193, %v4201
      %v4204 = vshrl.u32 %v4168, 16
      %v4206 = vrot.slane %v4204, 2
      %v4207 = vshll.u32 %v4168, 16
      %v4209 = vrot.slane %v4207, 3
      %v4210 = vor.u32 %v4206, %v4209
      %v4211 = vsel %vm4185, %v4201, %v4210
      %v4213 = vshrl.u32 %v4169, 16
      %v4215 = vrot.slane %v4213, 2
      %v4216 = vshll.u32 %v4169, 16
      %v4218 = vrot.slane %v4216, 3
      %v4219 = vor.u32 %v4215, %v4218
      %v4220 = vsel %vm4185, %v4210, %v4219
      %v4222 = vshrl.u32 %v4170, 16
      %v4224 = vrot.slane %v4222, 2
      %v4225 = vshll.u32 %v4170, 16
      %v4227 = vrot.slane %v4225, 3
      %v4228 = vor.u32 %v4224, %v4227
      %v4229 = vsel %vm4185, %v4219, %v4228
      %v4231 = vshrl.u32 %v4171, 16
      %v4233 = vrot.slane %v4231, 2
      %v4234 = vshll.u32 %v4171, 16
      %v4236 = vrot.slane %v4234, 3
      %v4237 = vor.u32 %v4233, %v4236
      %v4238 = vsel %vm4185, %v4228, %v4237
      %v4240 = vshrl.u32 %v4172, 16
      %v4242 = vrot.slane %v4240, 2
      %v4243 = vshll.u32 %v4172, 16
      %v4245 = vrot.slane %v4243, 3
      %v4246 = vor.u32 %v4242, %v4245
      %v4247 = vsel %vm4185, %v4237, %v4246
      %v4249 = vshrl.u32 %v4173, 16
      %v4251 = vrot.slane %v4249, 2
      %v4252 = vshll.u32 %v4173, 16
      %v4254 = vrot.slane %v4252, 3
      %v4255 = vor.u32 %v4251, %v4254
      %v4256 = vsel %vm4185, %v4246, %v4255
      %v4258 = vshrl.u32 %v4174, 16
      %v4260 = vrot.slane %v4258, 2
      %v4261 = vshll.u32 %v4174, 16
      %v4263 = vrot.slane %v4261, 3
      %v4264 = vor.u32 %v4260, %v4263
      %v4265 = vsel %vm4185, %v4255, %v4264
      %v4267 = vshrl.u32 %v4175, 16
      %v4269 = vrot.slane %v4267, 2
      %v4270 = vshll.u32 %v4175, 16
      %v4272 = vrot.slane %v4270, 3
      %v4273 = vor.u32 %v4269, %v4272
      %v4274 = vsel %vm4185, %v4264, %v4273
      %v4276 = vshrl.u32 %v4176, 16
      %v4278 = vrot.slane %v4276, 2
      %v4279 = vshll.u32 %v4176, 16
      %v4281 = vrot.slane %v4279, 3
      %v4282 = vor.u32 %v4278, %v4281
      %v4283 = vsel %vm4185, %v4273, %v4282
      %v4285 = vshrl.u32 %v4177, 16
      %v4287 = vrot.slane %v4285, 2
      %v4288 = vshll.u32 %v4177, 16
      %v4290 = vrot.slane %v4288, 3
      %v4291 = vor.u32 %v4287, %v4290
      %v4292 = vsel %vm4185, %v4282, %v4291
      %v4294 = vshrl.u32 %v4178, 16
      %v4296 = vrot.slane %v4294, 2
      %v4297 = vshll.u32 %v4178, 16
      %v4299 = vrot.slane %v4297, 3
      %v4300 = vor.u32 %v4296, %v4299
      %v4301 = vsel %vm4185, %v4291, %v4300
      %v4303 = vshrl.u32 %v4179, 16
      %v4305 = vrot.slane %v4303, 2
      %v4306 = vshll.u32 %v4179, 16
      %v4308 = vrot.slane %v4306, 3
      %v4309 = vor.u32 %v4305, %v4308
      %v4310 = vsel %vm4185, %v4300, %v4309
      %v4312 = vshrl.u32 %v4180, 16
      %v4314 = vrot.slane %v4312, 2
      %v4315 = vshll.u32 %v4180, 16
      %v4317 = vrot.slane %v4315, 3
      %v4318 = vor.u32 %v4314, %v4317
      %v4319 = vsel %vm4185, %v4309, %v4318
      %v4321 = vshrl.u32 %v4181, 16
      %v4323 = vrot.slane %v4321, 2
      %v4324 = vshll.u32 %v4181, 16
      %v4326 = vrot.slane %v4324, 3
      %v4327 = vor.u32 %v4323, %v4326
      %v4328 = vsel %vm4185, %v4318, %v4327
      %v4330 = vshrl.u32 %v4182, 16
      %v4332 = vrot.slane %v4330, 2
      %v4333 = vshll.u32 %v4182, 16
      %v4335 = vrot.slane %v4333, 3
      %v4336 = vor.u32 %v4332, %v4335
      %v4337 = vsel %vm4185, %v4327, %v4336
      %v4339 = vshrl.u32 %v4183, 16
      %v4341 = vrot.slane %v4339, 2
      %v4342 = vshll.u32 %v4183, 16
      %v4344 = vrot.slane %v4342, 3
      %v4345 = vor.u32 %v4341, %v4344
      %v4346 = vsel %vm4185, %v4336, %v4345
      %v4348 = vshrl.u32 %v4184, 16
      %v4350 = vrot.slane %v4348, 2
      %v4351 = vshll.u32 %v4184, 16
      %v4353 = vrot.slane %v4351, 3
      %v4354 = vor.u32 %v4350, %v4353
      %v4355 = vsel %vm4185, %v4345, %v4354
      %v4357 = vsel %vm395, %v4202, 0
      %v4360 = vsel %vm395, %v4211, 0
      %v4363 = vsel %vm395, %v4220, 0
      %v4366 = vsel %vm395, %v4229, 0
      %v4369 = vsel %vm395, %v4238, 0
      %v4372 = vsel %vm395, %v4247, 0
      %v4375 = vsel %vm395, %v4256, 0
      %v4378 = vsel %vm395, %v4265, 0
      %v4381 = vsel %vm395, %v4274, 0
      %v4384 = vsel %vm395, %v4283, 0
      %v4387 = vsel %vm395, %v4292, 0
      %v4390 = vsel %vm395, %v4301, 0
      %v4393 = vsel %vm395, %v4310, 0
      %v4396 = vsel %vm395, %v4319, 0
      %v4399 = vsel %vm395, %v4328, 0
      %v4402 = vsel %vm395, %v4337, 0
      %v4405 = vsel %vm395, %v4346, 0
      %v4408 = vsel %vm395, %v4355, 0
      %v4411 = vsel %vm450, %v4091, 0
      %4413 = vmatprep.subr.bf16.mxu0 0
      %4414 = vmatpush1.bf16.msra.mxu0 %v4411
      %4415 = vmatprep.subr.bf16.mxu0 0
      %4416 = vmatpush1.bf16.msra.mxu0 0
      %4417 = vmatprep.subr.bf16.mxu0 0
      %4418 = vmatpush1.bf16.msra.mxu0 0
      %4419 = vmatprep.subr.bf16.mxu0 0
      %4420 = vmatpush1.bf16.msra.mxu0 0
      %4421 = vmatprep.subr.bf16.mxu0 0
      %4422 = vmatpush1.bf16.msra.mxu0 0
      %4423 = vmatprep.subr.bf16.mxu0 0
      %4424 = vmatpush1.bf16.msra.mxu0 0
      %4425 = vmatprep.subr.bf16.mxu0 0
      %4426 = vmatpush1.bf16.msra.mxu0 0
      %4427 = vmatprep.subr.bf16.mxu0 0
      %4428 = vmatpush1.bf16.msra.mxu0 0
      %4429 = vmatprep.subr.bf16.mxu0 0
      %4430 = vmatpush1.bf16.msra.mxu0 0
      %4431 = vmatprep.subr.bf16.mxu0 0
      %4432 = vmatpush1.bf16.msra.mxu0 0
      %4433 = vmatprep.subr.bf16.mxu0 0
      %4434 = vmatpush1.bf16.msra.mxu0 0
      %4435 = vmatprep.subr.bf16.mxu0 0
      %4436 = vmatpush1.bf16.msra.mxu0 0
      %4437 = vmatprep.subr.bf16.mxu0 0
      %4438 = vmatpush1.bf16.msra.mxu0 0
      %4439 = vmatprep.subr.bf16.mxu0 0
      %4440 = vmatpush1.bf16.msra.mxu0 0
      %4441 = vmatprep.subr.bf16.mxu0 0
      %4442 = vmatpush1.bf16.msra.mxu0 0
      %4443 = vmatprep.subr.bf16.mxu0 0
      %4444 = vmatpush1.bf16.msra.mxu0 0
      %4445 = vmatprep.mubr.bf16.mxu0 0
      %4446 = vmatmul.mubr.bf16.gmra.mrb[0].mxu0 %v4357
      %v4447 = vpop.f32.mrb[0].mxu0
      %v4448 = vadd.f32 0.0, %v4447
      %v4449 = vpop.f32.mrb[0].mxu0
      %v4450 = vpop.f32.mrb[0].mxu0
      %v4451 = vadd.f32 0.0, %v4450
      %v4452 = vpop.f32.mrb[0].mxu0
      %4453 = vmatprep.mubr.bf16.mxu0 0
      %4454 = vmatmul.mubr.bf16.gmra.mrb[0].mxu0 %v4360
      %v4455 = vpop.f32.mrb[0].mxu0
      %v4456 = vadd.f32 0.0, %v4455
      %v4457 = vpop.f32.mrb[0].mxu0
      %v4458 = vpop.f32.mrb[0].mxu0
      %v4459 = vadd.f32 0.0, %v4458
      %v4460 = vpop.f32.mrb[0].mxu0
      %4461 = vmatprep.mubr.bf16.mxu0 0
      %4462 = vmatmul.mubr.bf16.gmra.mrb[0].mxu0 %v4363
      %v4463 = vpop.f32.mrb[0].mxu0
      %v4464 = vadd.f32 0.0, %v4463
      %v4465 = vpop.f32.mrb[0].mxu0
      %v4466 = vpop.f32.mrb[0].mxu0
      %v4467 = vadd.f32 0.0, %v4466
      %v4468 = vpop.f32.mrb[0].mxu0
      %4469 = vmatprep.mubr.bf16.mxu0 0
      %4470 = vmatmul.mubr.bf16.gmra.mrb[0].mxu0 %v4366
      %v4471 = vpop.f32.mrb[0].mxu0
      %v4472 = vadd.f32 0.0, %v4471
      %v4473 = vpop.f32.mrb[0].mxu0
      %v4474 = vpop.f32.mrb[0].mxu0
      %v4475 = vadd.f32 0.0, %v4474
      %v4476 = vpop.f32.mrb[0].mxu0
      %4477 = vmatprep.mubr.bf16.mxu0 0
      %4478 = vmatmul.mubr.bf16.gmra.mrb[0].mxu0 %v4369
      %v4479 = vpop.f32.mrb[0].mxu0
      %v4480 = vadd.f32 0.0, %v4479
      %v4481 = vpop.f32.mrb[0].mxu0
      %v4482 = vpop.f32.mrb[0].mxu0
      %v4483 = vadd.f32 0.0, %v4482
      %v4484 = vpop.f32.mrb[0].mxu0
      %4485 = vmatprep.mubr.bf16.mxu0 0
      %4486 = vmatmul.mubr.bf16.gmra.mrb[0].mxu0 %v4372
      %v4487 = vpop.f32.mrb[0].mxu0
      %v4488 = vadd.f32 0.0, %v4487
      %v4489 = vpop.f32.mrb[0].mxu0
      %v4490 = vpop.f32.mrb[0].mxu0
      %v4491 = vadd.f32 0.0, %v4490
      %v4492 = vpop.f32.mrb[0].mxu0
      %4493 = vmatprep.mubr.bf16.mxu0 0
      %4494 = vmatmul.mubr.bf16.gmra.mrb[0].mxu0 %v4375
      %v4495 = vpop.f32.mrb[0].mxu0
      %v4496 = vadd.f32 0.0, %v4495
      %v4497 = vpop.f32.mrb[0].mxu0
      %v4498 = vpop.f32.mrb[0].mxu0
      %v4499 = vadd.f32 0.0, %v4498
      %v4500 = vpop.f32.mrb[0].mxu0
      %4501 = vmatprep.mubr.bf16.mxu0 0
      %4502 = vmatmul.mubr.bf16.gmra.mrb[0].mxu0 %v4378
      %v4503 = vpop.f32.mrb[0].mxu0
      %v4504 = vadd.f32 0.0, %v4503
      %v4505 = vpop.f32.mrb[0].mxu0
      %v4506 = vpop.f32.mrb[0].mxu0
      %v4507 = vadd.f32 0.0, %v4506
      %v4508 = vpop.f32.mrb[0].mxu0
      %4509 = vmatprep.mubr.bf16.mxu0 0
      %4510 = vmatmul.mubr.bf16.gmra.mrb[0].mxu0 %v4381
      %v4511 = vpop.f32.mrb[0].mxu0
      %v4512 = vadd.f32 0.0, %v4511
      %v4513 = vpop.f32.mrb[0].mxu0
      %v4514 = vpop.f32.mrb[0].mxu0
      %v4515 = vadd.f32 0.0, %v4514
      %v4516 = vpop.f32.mrb[0].mxu0
      %4517 = vmatprep.mubr.bf16.mxu0 0
      %4518 = vmatmul.mubr.bf16.gmra.mrb[0].mxu0 %v4384
      %v4519 = vpop.f32.mrb[0].mxu0
      %v4520 = vadd.f32 0.0, %v4519
      %v4521 = vpop.f32.mrb[0].mxu0
      %v4522 = vpop.f32.mrb[0].mxu0
      %v4523 = vadd.f32 0.0, %v4522
      %v4524 = vpop.f32.mrb[0].mxu0
      %4525 = vmatprep.mubr.bf16.mxu0 0
      %4526 = vmatmul.mubr.bf16.gmra.mrb[0].mxu0 %v4387
      %v4527 = vpop.f32.mrb[0].mxu0
      %v4528 = vadd.f32 0.0, %v4527
      %v4529 = vpop.f32.mrb[0].mxu0
      %v4530 = vpop.f32.mrb[0].mxu0
      %v4531 = vadd.f32 0.0, %v4530
      %v4532 = vpop.f32.mrb[0].mxu0
      %4533 = vmatprep.mubr.bf16.mxu0 0
      %4534 = vmatmul.mubr.bf16.gmra.mrb[0].mxu0 %v4390
      %v4535 = vpop.f32.mrb[0].mxu0
      %v4536 = vadd.f32 0.0, %v4535
      %v4537 = vpop.f32.mrb[0].mxu0
      %v4538 = vpop.f32.mrb[0].mxu0
      %v4539 = vadd.f32 0.0, %v4538
      %v4540 = vpop.f32.mrb[0].mxu0
      %4541 = vmatprep.mubr.bf16.mxu0 0
      %4542 = vmatmul.mubr.bf16.gmra.mrb[0].mxu0 %v4393
      %v4543 = vpop.f32.mrb[0].mxu0
      %v4544 = vadd.f32 0.0, %v4543
      %v4545 = vpop.f32.mrb[0].mxu0
      %v4546 = vpop.f32.mrb[0].mxu0
      %v4547 = vadd.f32 0.0, %v4546
      %v4548 = vpop.f32.mrb[0].mxu0
      %4549 = vmatprep.mubr.bf16.mxu0 0
      %4550 = vmatmul.mubr.bf16.gmra.mrb[0].mxu0 %v4396
      %v4551 = vpop.f32.mrb[0].mxu0
      %v4552 = vadd.f32 0.0, %v4551
      %v4553 = vpop.f32.mrb[0].mxu0
      %v4554 = vpop.f32.mrb[0].mxu0
      %v4555 = vadd.f32 0.0, %v4554
      %v4556 = vpop.f32.mrb[0].mxu0
      %4557 = vmatprep.mubr.bf16.mxu0 0
      %4558 = vmatmul.mubr.bf16.gmra.mrb[0].mxu0 %v4399
      %v4559 = vpop.f32.mrb[0].mxu0
      %v4560 = vadd.f32 0.0, %v4559
      %v4561 = vpop.f32.mrb[0].mxu0
      %v4562 = vpop.f32.mrb[0].mxu0
      %v4563 = vadd.f32 0.0, %v4562
      %v4564 = vpop.f32.mrb[0].mxu0
      %4565 = vmatprep.mubr.bf16.mxu0 0
      %4566 = vmatmul.mubr.bf16.gmra.mrb[0].mxu0 %v4402
      %v4567 = vpop.f32.mrb[0].mxu0
      %v4568 = vadd.f32 0.0, %v4567
      %v4569 = vpop.f32.mrb[0].mxu0
      %v4570 = vpop.f32.mrb[0].mxu0
      %v4571 = vadd.f32 0.0, %v4570
      %v4572 = vpop.f32.mrb[0].mxu0
      %4573 = vmatprep.mubr.bf16.mxu0 0
      %4574 = vmatmul.mubr.bf16.gmra.mrb[0].mxu0 %v4405
      %v4575 = vpop.f32.mrb[0].mxu0
      %v4576 = vadd.f32 0.0, %v4575
      %v4577 = vpop.f32.mrb[0].mxu0
      %v4578 = vpop.f32.mrb[0].mxu0
      %v4579 = vadd.f32 0.0, %v4578
      %v4580 = vpop.f32.mrb[0].mxu0
      %4581 = vmatprep.mubr.bf16.mxu0 0
      %4582 = vmatmul.mubr.bf16.gmra.mrb[0].mxu0 %v4408
      %v4583 = vpop.f32.mrb[0].mxu0
      %v4584 = vadd.f32 0.0, %v4583
      %v4585 = vpop.f32.mrb[0].mxu0
      %v4586 = vpop.f32.mrb[0].mxu0
      %v4587 = vadd.f32 0.0, %v4586
      %v4588 = vpop.f32.mrb[0].mxu0
      %4589 = vdwg.mxu0
      %v4590 = vadd.f32 %v4054, %v4448
      %v4591 = vadd.f32 %v4055, %v4451
      %v4592 = vadd.f32 %v4056, %v4456
      %v4593 = vadd.f32 %v4057, %v4459
      %v4594 = vadd.f32 %v4058, %v4464
      %v4595 = vadd.f32 %v4059, %v4467
      %v4596 = vadd.f32 %v4060, %v4472
      %v4597 = vadd.f32 %v4061, %v4475
      %v4598 = vadd.f32 %v4062, %v4480
      %v4599 = vadd.f32 %v4063, %v4483
      %v4600 = vadd.f32 %v4064, %v4488
      %v4601 = vadd.f32 %v4065, %v4491
      %v4602 = vadd.f32 %v4066, %v4496
      %v4603 = vadd.f32 %v4067, %v4499
      %v4604 = vadd.f32 %v4068, %v4504
      %v4605 = vadd.f32 %v4069, %v4507
      %v4606 = vadd.f32 %v4070, %v4512
      %v4607 = vadd.f32 %v4071, %v4515
      %v4608 = vadd.f32 %v4072, %v4520
      %v4609 = vadd.f32 %v4073, %v4523
      %v4610 = vadd.f32 %v4074, %v4528
      %v4611 = vadd.f32 %v4075, %v4531
      %v4612 = vadd.f32 %v4076, %v4536
      %v4613 = vadd.f32 %v4077, %v4539
      %v4614 = vadd.f32 %v4078, %v4544
      %v4615 = vadd.f32 %v4079, %v4547
      %v4616 = vadd.f32 %v4080, %v4552
      %v4617 = vadd.f32 %v4081, %v4555
      %v4618 = vadd.f32 %v4082, %v4560
      %v4619 = vadd.f32 %v4083, %v4563
      %v4620 = vadd.f32 %v4084, %v4568
      %v4621 = vadd.f32 %v4085, %v4571
      %v4622 = vadd.f32 %v4086, %v4576
      %v4623 = vadd.f32 %v4087, %v4579
      %v4624 = vadd.f32 %v4088, %v4584
      %v4625 = vadd.f32 %v4089, %v4587
      %4626 = vst.msk [vmem:[#allocation2] sm:$0xff] %vm195, %v4590
      %4627 = vst.msk [vmem:[#allocation2 + $0x8] sm:$0xff] %vm195, %v4591
      %4628 = vst.msk [vmem:[#allocation2 + $0x10] sm:$0xff] %vm195, %v4592
      %4629 = vst.msk [vmem:[#allocation2 + $0x18] sm:$0xff] %vm195, %v4593
      %4630 = vst.msk [vmem:[#allocation2 + $0x20] sm:$0xff] %vm195, %v4594
      %4631 = vst.msk [vmem:[#allocation2 + $0x28] sm:$0xff] %vm195, %v4595
      %4632 = vst.msk [vmem:[#allocation2 + $0x30] sm:$0xff] %vm195, %v4596
      %4633 = vst.msk [vmem:[#allocation2 + $0x38] sm:$0xff] %vm195, %v4597
      %4634 = vst.msk [vmem:[#allocation2 + $0x40] sm:$0xff] %vm195, %v4598
      %4635 = vst.msk [vmem:[#allocation2 + $0x48] sm:$0xff] %vm195, %v4599
      %4636 = vst.msk [vmem:[#allocation2 + $0x50] sm:$0xff] %vm195, %v4600
      %4637 = vst.msk [vmem:[#allocation2 + $0x58] sm:$0xff] %vm195, %v4601
      %4638 = vst.msk [vmem:[#allocation2 + $0x60] sm:$0xff] %vm195, %v4602
      %4639 = vst.msk [vmem:[#allocation2 + $0x68] sm:$0xff] %vm195, %v4603
      %4640 = vst.msk [vmem:[#allocation2 + $0x70] sm:$0xff] %vm195, %v4604
      %4641 = vst.msk [vmem:[#allocation2 + $0x78] sm:$0xff] %vm195, %v4605
      %4642 = vst.msk [vmem:[#allocation2 + $0x80] sm:$0xff] %vm195, %v4606
      %4643 = vst.msk [vmem:[#allocation2 + $0x88] sm:$0xff] %vm195, %v4607
      %4644 = vst.msk [vmem:[#allocation2 + $0x90] sm:$0xff] %vm195, %v4608
      %4645 = vst.msk [vmem:[#allocation2 + $0x98] sm:$0xff] %vm195, %v4609
      %4646 = vst.msk [vmem:[#allocation2 + $0xa0] sm:$0xff] %vm195, %v4610
      %4647 = vst.msk [vmem:[#allocation2 + $0xa8] sm:$0xff] %vm195, %v4611
      %4648 = vst.msk [vmem:[#allocation2 + $0xb0] sm:$0xff] %vm195, %v4612
      %4649 = vst.msk [vmem:[#allocation2 + $0xb8] sm:$0xff] %vm195, %v4613
      %4650 = vst.msk [vmem:[#allocation2 + $0xc0] sm:$0xff] %vm195, %v4614
      %4651 = vst.msk [vmem:[#allocation2 + $0xc8] sm:$0xff] %vm195, %v4615
      %4652 = vst.msk [vmem:[#allocation2 + $0xd0] sm:$0xff] %vm195, %v4616
      %4653 = vst.msk [vmem:[#allocation2 + $0xd8] sm:$0xff] %vm195, %v4617
      %4654 = vst.msk [vmem:[#allocation2 + $0xe0] sm:$0xff] %vm195, %v4618
      %4655 = vst.msk [vmem:[#allocation2 + $0xe8] sm:$0xff] %vm195, %v4619
      %4656 = vst.msk [vmem:[#allocation2 + $0xf0] sm:$0xff] %vm195, %v4620
      %4657 = vst.msk [vmem:[#allocation2 + $0xf8] sm:$0xff] %vm195, %v4621
      %4658 = vst.msk [vmem:[#allocation2 + $0x100] sm:$0xff] %vm195, %v4622
      %4659 = vst.msk [vmem:[#allocation2 + $0x108] sm:$0xff] %vm195, %v4623
      %4660 = vst.msk [vmem:[#allocation2 + $0x110] sm:$0xff] %vm195, %v4624
      %4661 = vst.msk [vmem:[#allocation2 + $0x118] sm:$0xff] %vm195, %v4625
      %v4662 = vld [vmem:[%s183 + $0x10] sm:$0x8]
      %v4663 = vld [vmem:[%s183 + $0x14] sm:$0xf]
      %v4664 = vld [vmem:[%s183 + $0x18] sm:$0xf]
      %v4665 = vld [vmem:[%s183 + $0x1c] sm:$0xf]
      %v4666 = vld [vmem:[%s183 + $0x20] sm:$0xf]
      %v4667 = vld [vmem:[%s183 + $0x24] sm:$0xf]
      %v4668 = vld [vmem:[%s183 + $0x28] sm:$0xf]
      %v4669 = vld [vmem:[%s183 + $0x2c] sm:$0xf]
      %v4670 = vld [vmem:[%s183 + $0x30] sm:$0xf]
      %v4671 = vld [vmem:[%s183 + $0x34] sm:$0xf]
      %v4672 = vld [vmem:[%s183 + $0x38] sm:$0xf]
      %v4673 = vld [vmem:[%s183 + $0x3c] sm:$0xf]
      %v4674 = vld [vmem:[%s183 + $0x40] sm:$0xf]
      %v4675 = vld [vmem:[%s183 + $0x44] sm:$0xf]
      %v4676 = vld [vmem:[%s183 + $0x48] sm:$0xf]
      %v4677 = vld [vmem:[%s183 + $0x4c] sm:$0xf]
      %v4678 = vld [vmem:[%s183 + $0x50] sm:$0xf]
      %v4679 = vld [vmem:[%s183 + $0x54] sm:$0xf]
      %v4680 = vld [vmem:[%s183 + $0x58] sm:$0xf]
      %v4681 = vld [vmem:[%s183 + $0x5c] sm:$0xf]
      %v4682 = vld [vmem:[%s183 + $0x60] sm:$0xf]
      %v4683 = vld [vmem:[%s183 + $0x64] sm:$0xf]
      %v4684 = vld [vmem:[%s183 + $0x68] sm:$0xf]
      %v4685 = vld [vmem:[%s183 + $0x6c] sm:$0xf]
      %v4686 = vld [vmem:[%s183 + $0x70] sm:$0xf]
      %v4687 = vld [vmem:[%s183 + $0x74] sm:$0xf]
      %v4688 = vld [vmem:[%s183 + $0x78] sm:$0xf]
      %v4689 = vld [vmem:[%s183 + $0x7c] sm:$0xf]
      %v4690 = vld [vmem:[%s183 + $0x80] sm:$0xf]
      %v4691 = vld [vmem:[%s183 + $0x84] sm:$0xf]
      %v4692 = vld [vmem:[%s183 + $0x88] sm:$0xf]
      %v4693 = vld [vmem:[%s183 + $0x8c] sm:$0xf]
      %v4694 = vld [vmem:[%s183 + $0x90] sm:$0xf]
      %v4695 = vld [vmem:[%s183 + $0x94] sm:$0xf]
      %v4696 = vld [vmem:[%s183 + $0x98] sm:$0xf]
      %v4697 = vld [vmem:[%s183 + $0x9c] sm:$0xf]
      %v4698 = vld [vmem:[%s183 + $0xa0] sm:$0x7]
      %v4699 = vld [vmem:[#allocation2] sm:$0xff]
      %v4700 = vld [vmem:[#allocation2 + $0x8] sm:$0xff]
      %v4701 = vld [vmem:[#allocation2 + $0x10] sm:$0xff]
      %v4702 = vld [vmem:[#allocation2 + $0x18] sm:$0xff]
      %v4703 = vld [vmem:[#allocation2 + $0x20] sm:$0xff]
      %v4704 = vld [vmem:[#allocation2 + $0x28] sm:$0xff]
      %v4705 = vld [vmem:[#allocation2 + $0x30] sm:$0xff]
      %v4706 = vld [vmem:[#allocation2 + $0x38] sm:$0xff]
      %v4707 = vld [vmem:[#allocation2 + $0x40] sm:$0xff]
      %v4708 = vld [vmem:[#allocation2 + $0x48] sm:$0xff]
      %v4709 = vld [vmem:[#allocation2 + $0x50] sm:$0xff]
      %v4710 = vld [vmem:[#allocation2 + $0x58] sm:$0xff]
      %v4711 = vld [vmem:[#allocation2 + $0x60] sm:$0xff]
      %v4712 = vld [vmem:[#allocation2 + $0x68] sm:$0xff]
      %v4713 = vld [vmem:[#allocation2 + $0x70] sm:$0xff]
      %v4714 = vld [vmem:[#allocation2 + $0x78] sm:$0xff]
      %v4715 = vld [vmem:[#allocation2 + $0x80] sm:$0xff]
      %v4716 = vld [vmem:[#allocation2 + $0x88] sm:$0xff]
      %v4717 = vld [vmem:[#allocation2 + $0x90] sm:$0xff]
      %v4718 = vld [vmem:[#allocation2 + $0x98] sm:$0xff]
      %v4719 = vld [vmem:[#allocation2 + $0xa0] sm:$0xff]
      %v4720 = vld [vmem:[#allocation2 + $0xa8] sm:$0xff]
      %v4721 = vld [vmem:[#allocation2 + $0xb0] sm:$0xff]
      %v4722 = vld [vmem:[#allocation2 + $0xb8] sm:$0xff]
      %v4723 = vld [vmem:[#allocation2 + $0xc0] sm:$0xff]
      %v4724 = vld [vmem:[#allocation2 + $0xc8] sm:$0xff]
      %v4725 = vld [vmem:[#allocation2 + $0xd0] sm:$0xff]
      %v4726 = vld [vmem:[#allocation2 + $0xd8] sm:$0xff]
      %v4727 = vld [vmem:[#allocation2 + $0xe0] sm:$0xff]
      %v4728 = vld [vmem:[#allocation2 + $0xe8] sm:$0xff]
      %v4729 = vld [vmem:[#allocation2 + $0xf0] sm:$0xff]
      %v4730 = vld [vmem:[#allocation2 + $0xf8] sm:$0xff]
      %v4731 = vld [vmem:[#allocation2 + $0x100] sm:$0xff]
      %v4732 = vld [vmem:[#allocation2 + $0x108] sm:$0xff]
      %v4733 = vld [vmem:[#allocation2 + $0x110] sm:$0xff]
      %v4734 = vld [vmem:[#allocation2 + $0x118] sm:$0xff]
      %s4735 = scalar_lea.vmem %s1, 16
      %v4736 = vld [vmem:[%s4735] sm:$0x3]
      %v4774 = vunpack.c.l.b16 %v4662
      %v4775 = vunpack.c.l.b16 %v4663
      %v4776 = vunpack.c.l.b16 %v4664
      %v4777 = vunpack.c.l.b16 %v4665
      %v4778 = vunpack.c.l.b16 %v4666
      %v4779 = vunpack.c.l.b16 %v4667
      %v4780 = vunpack.c.l.b16 %v4668
      %v4781 = vunpack.c.l.b16 %v4669
      %v4782 = vunpack.c.l.b16 %v4670
      %v4783 = vunpack.c.l.b16 %v4671
      %v4784 = vunpack.c.l.b16 %v4672
      %v4785 = vunpack.c.l.b16 %v4673
      %v4786 = vunpack.c.l.b16 %v4674
      %v4787 = vunpack.c.l.b16 %v4675
      %v4788 = vunpack.c.l.b16 %v4676
      %v4789 = vunpack.c.l.b16 %v4677
      %v4790 = vunpack.c.l.b16 %v4678
      %v4791 = vunpack.c.l.b16 %v4679
      %v4792 = vunpack.c.l.b16 %v4680
      %v4793 = vunpack.c.l.b16 %v4681
      %v4794 = vunpack.c.l.b16 %v4682
      %v4795 = vunpack.c.l.b16 %v4683
      %v4796 = vunpack.c.l.b16 %v4684
      %v4797 = vunpack.c.l.b16 %v4685
      %v4798 = vunpack.c.l.b16 %v4686
      %v4799 = vunpack.c.l.b16 %v4687
      %v4800 = vunpack.c.l.b16 %v4688
      %v4801 = vunpack.c.l.b16 %v4689
      %v4802 = vunpack.c.l.b16 %v4690
      %v4803 = vunpack.c.l.b16 %v4691
      %v4804 = vunpack.c.l.b16 %v4692
      %v4805 = vunpack.c.l.b16 %v4693
      %v4806 = vunpack.c.l.b16 %v4694
      %v4807 = vunpack.c.l.b16 %v4695
      %v4808 = vunpack.c.l.b16 %v4696
      %v4809 = vunpack.c.l.b16 %v4697
      %v4810 = vunpack.c.l.b16 %v4698
      %v4811 = vpack.c.b16 %v4775, %v4774
      %v4812 = vpack.c.b16 %v4777, %v4776
      %v4813 = vpack.c.b16 %v4779, %v4778
      %v4814 = vpack.c.b16 %v4781, %v4780
      %v4815 = vpack.c.b16 %v4783, %v4782
      %v4816 = vpack.c.b16 %v4785, %v4784
      %v4817 = vpack.c.b16 %v4787, %v4786
      %v4818 = vpack.c.b16 %v4789, %v4788
      %v4819 = vpack.c.b16 %v4791, %v4790
      %v4820 = vpack.c.b16 %v4793, %v4792
      %v4821 = vpack.c.b16 %v4795, %v4794
      %v4822 = vpack.c.b16 %v4797, %v4796
      %v4823 = vpack.c.b16 %v4799, %v4798
      %v4824 = vpack.c.b16 %v4801, %v4800
      %v4825 = vpack.c.b16 %v4803, %v4802
      %v4826 = vpack.c.b16 %v4805, %v4804
      %v4827 = vpack.c.b16 %v4807, %v4806
      %v4828 = vpack.c.b16 %v4809, %v4808
      %v4829 = vpack.c.b16 %v4810, %v4810
      %vm4830 = vcmask 1044480
      %v4831 = vrot.slane %v4811, 3
      %v4832 = vrot.slane %v4812, 3
      %v4833 = vsel %vm4830, %v4831, %v4832
      %v4834 = vrot.slane %v4813, 3
      %v4835 = vsel %vm4830, %v4832, %v4834
      %v4836 = vrot.slane %v4814, 3
      %v4837 = vsel %vm4830, %v4834, %v4836
      %v4838 = vrot.slane %v4815, 3
      %v4839 = vsel %vm4830, %v4836, %v4838
      %v4840 = vrot.slane %v4816, 3
      %v4841 = vsel %vm4830, %v4838, %v4840
      %v4842 = vrot.slane %v4817, 3
      %v4843 = vsel %vm4830, %v4840, %v4842
      %v4844 = vrot.slane %v4818, 3
      %v4845 = vsel %vm4830, %v4842, %v4844
      %v4846 = vrot.slane %v4819, 3
      %v4847 = vsel %vm4830, %v4844, %v4846
      %v4848 = vrot.slane %v4820, 3
      %v4849 = vsel %vm4830, %v4846, %v4848
      %v4850 = vrot.slane %v4821, 3
      %v4851 = vsel %vm4830, %v4848, %v4850
      %v4852 = vrot.slane %v4822, 3
      %v4853 = vsel %vm4830, %v4850, %v4852
      %v4854 = vrot.slane %v4823, 3
      %v4855 = vsel %vm4830, %v4852, %v4854
      %v4856 = vrot.slane %v4824, 3
      %v4857 = vsel %vm4830, %v4854, %v4856
      %v4858 = vrot.slane %v4825, 3
      %v4859 = vsel %vm4830, %v4856, %v4858
      %v4860 = vrot.slane %v4826, 3
      %v4861 = vsel %vm4830, %v4858, %v4860
      %v4862 = vrot.slane %v4827, 3
      %v4863 = vsel %vm4830, %v4860, %v4862
      %v4864 = vrot.slane %v4828, 3
      %v4865 = vsel %vm4830, %v4862, %v4864
      %v4866 = vrot.slane %v4829, 3
      %v4867 = vsel %vm4830, %v4864, %v4866
      %v4869 = vsel %vm395, %v4833, 0
      %v4872 = vsel %vm395, %v4835, 0
      %v4875 = vsel %vm395, %v4837, 0
      %v4878 = vsel %vm395, %v4839, 0
      %v4881 = vsel %vm395, %v4841, 0
      %v4884 = vsel %vm395, %v4843, 0
      %v4887 = vsel %vm395, %v4845, 0
      %v4890 = vsel %vm395, %v4847, 0
      %v4893 = vsel %vm395, %v4849, 0
      %v4896 = vsel %vm395, %v4851, 0
      %v4899 = vsel %vm395, %v4853, 0
      %v4902 = vsel %vm395, %v4855, 0
      %v4905 = vsel %vm395, %v4857, 0
      %v4908 = vsel %vm395, %v4859, 0
      %v4911 = vsel %vm395, %v4861, 0
      %v4914 = vsel %vm395, %v4863, 0
      %v4917 = vsel %vm395, %v4865, 0
      %v4920 = vsel %vm395, %v4867, 0
      %v4923 = vsel %vm450, %v4736, 0
      %4925 = vmatprep.subr.bf16.mxu0 0
      %4926 = vmatpush1.bf16.msra.mxu0 %v4923
      %4927 = vmatprep.subr.bf16.mxu0 0
      %4928 = vmatpush1.bf16.msra.mxu0 0
      %4929 = vmatprep.subr.bf16.mxu0 0
      %4930 = vmatpush1.bf16.msra.mxu0 0
      %4931 = vmatprep.subr.bf16.mxu0 0
      %4932 = vmatpush1.bf16.msra.mxu0 0
      %4933 = vmatprep.subr.bf16.mxu0 0
      %4934 = vmatpush1.bf16.msra.mxu0 0
      %4935 = vmatprep.subr.bf16.mxu0 0
      %4936 = vmatpush1.bf16.msra.mxu0 0
      %4937 = vmatprep.subr.bf16.mxu0 0
      %4938 = vmatpush1.bf16.msra.mxu0 0
      %4939 = vmatprep.subr.bf16.mxu0 0
      %4940 = vmatpush1.bf16.msra.mxu0 0
      %4941 = vmatprep.subr.bf16.mxu0 0
      %4942 = vmatpush1.bf16.msra.mxu0 0
      %4943 = vmatprep.subr.bf16.mxu0 0
      %4944 = vmatpush1.bf16.msra.mxu0 0
      %4945 = vmatprep.subr.bf16.mxu0 0
      %4946 = vmatpush1.bf16.msra.mxu0 0
      %4947 = vmatprep.subr.bf16.mxu0 0
      %4948 = vmatpush1.bf16.msra.mxu0 0
      %4949 = vmatprep.subr.bf16.mxu0 0
      %4950 = vmatpush1.bf16.msra.mxu0 0
      %4951 = vmatprep.subr.bf16.mxu0 0
      %4952 = vmatpush1.bf16.msra.mxu0 0
      %4953 = vmatprep.subr.bf16.mxu0 0
      %4954 = vmatpush1.bf16.msra.mxu0 0
      %4955 = vmatprep.subr.bf16.mxu0 0
      %4956 = vmatpush1.bf16.msra.mxu0 0
      %4957 = vmatprep.mubr.bf16.mxu0 0
      %4958 = vmatmul.mubr.bf16.gmra.mrb[0].mxu0 %v4869
      %v4959 = vpop.f32.mrb[0].mxu0
      %v4960 = vadd.f32 0.0, %v4959
      %v4961 = vpop.f32.mrb[0].mxu0
      %v4962 = vpop.f32.mrb[0].mxu0
      %v4963 = vadd.f32 0.0, %v4962
      %v4964 = vpop.f32.mrb[0].mxu0
      %4965 = vmatprep.mubr.bf16.mxu0 0
      %4966 = vmatmul.mubr.bf16.gmra.mrb[0].mxu0 %v4872
      %v4967 = vpop.f32.mrb[0].mxu0
      %v4968 = vadd.f32 0.0, %v4967
      %v4969 = vpop.f32.mrb[0].mxu0
      %v4970 = vpop.f32.mrb[0].mxu0
      %v4971 = vadd.f32 0.0, %v4970
      %v4972 = vpop.f32.mrb[0].mxu0
      %4973 = vmatprep.mubr.bf16.mxu0 0
      %4974 = vmatmul.mubr.bf16.gmra.mrb[0].mxu0 %v4875
      %v4975 = vpop.f32.mrb[0].mxu0
      %v4976 = vadd.f32 0.0, %v4975
      %v4977 = vpop.f32.mrb[0].mxu0
      %v4978 = vpop.f32.mrb[0].mxu0
      %v4979 = vadd.f32 0.0, %v4978
      %v4980 = vpop.f32.mrb[0].mxu0
      %4981 = vmatprep.mubr.bf16.mxu0 0
      %4982 = vmatmul.mubr.bf16.gmra.mrb[0].mxu0 %v4878
      %v4983 = vpop.f32.mrb[0].mxu0
      %v4984 = vadd.f32 0.0, %v4983
      %v4985 = vpop.f32.mrb[0].mxu0
      %v4986 = vpop.f32.mrb[0].mxu0
      %v4987 = vadd.f32 0.0, %v4986
      %v4988 = vpop.f32.mrb[0].mxu0
      %4989 = vmatprep.mubr.bf16.mxu0 0
      %4990 = vmatmul.mubr.bf16.gmra.mrb[0].mxu0 %v4881
      %v4991 = vpop.f32.mrb[0].mxu0
      %v4992 = vadd.f32 0.0, %v4991
      %v4993 = vpop.f32.mrb[0].mxu0
      %v4994 = vpop.f32.mrb[0].mxu0
      %v4995 = vadd.f32 0.0, %v4994
      %v4996 = vpop.f32.mrb[0].mxu0
      %4997 = vmatprep.mubr.bf16.mxu0 0
      %4998 = vmatmul.mubr.bf16.gmra.mrb[0].mxu0 %v4884
      %v4999 = vpop.f32.mrb[0].mxu0
      %v5000 = vadd.f32 0.0, %v4999
      %v5001 = vpop.f32.mrb[0].mxu0
      %v5002 = vpop.f32.mrb[0].mxu0
      %v5003 = vadd.f32 0.0, %v5002
      %v5004 = vpop.f32.mrb[0].mxu0
      %5005 = vmatprep.mubr.bf16.mxu0 0
      %5006 = vmatmul.mubr.bf16.gmra.mrb[0].mxu0 %v4887
      %v5007 = vpop.f32.mrb[0].mxu0
      %v5008 = vadd.f32 0.0, %v5007
      %v5009 = vpop.f32.mrb[0].mxu0
      %v5010 = vpop.f32.mrb[0].mxu0
      %v5011 = vadd.f32 0.0, %v5010
      %v5012 = vpop.f32.mrb[0].mxu0
      %5013 = vmatprep.mubr.bf16.mxu0 0
      %5014 = vmatmul.mubr.bf16.gmra.mrb[0].mxu0 %v4890
      %v5015 = vpop.f32.mrb[0].mxu0
      %v5016 = vadd.f32 0.0, %v5015
      %v5017 = vpop.f32.mrb[0].mxu0
      %v5018 = vpop.f32.mrb[0].mxu0
      %v5019 = vadd.f32 0.0, %v5018
      %v5020 = vpop.f32.mrb[0].mxu0
      %5021 = vmatprep.mubr.bf16.mxu0 0
      %5022 = vmatmul.mubr.bf16.gmra.mrb[0].mxu0 %v4893
      %v5023 = vpop.f32.mrb[0].mxu0
      %v5024 = vadd.f32 0.0, %v5023
      %v5025 = vpop.f32.mrb[0].mxu0
      %v5026 = vpop.f32.mrb[0].mxu0
      %v5027 = vadd.f32 0.0, %v5026
      %v5028 = vpop.f32.mrb[0].mxu0
      %5029 = vmatprep.mubr.bf16.mxu0 0
      %5030 = vmatmul.mubr.bf16.gmra.mrb[0].mxu0 %v4896
      %v5031 = vpop.f32.mrb[0].mxu0
      %v5032 = vadd.f32 0.0, %v5031
      %v5033 = vpop.f32.mrb[0].mxu0
      %v5034 = vpop.f32.mrb[0].mxu0
      %v5035 = vadd.f32 0.0, %v5034
      %v5036 = vpop.f32.mrb[0].mxu0
      %5037 = vmatprep.mubr.bf16.mxu0 0
      %5038 = vmatmul.mubr.bf16.gmra.mrb[0].mxu0 %v4899
      %v5039 = vpop.f32.mrb[0].mxu0
      %v5040 = vadd.f32 0.0, %v5039
      %v5041 = vpop.f32.mrb[0].mxu0
      %v5042 = vpop.f32.mrb[0].mxu0
      %v5043 = vadd.f32 0.0, %v5042
      %v5044 = vpop.f32.mrb[0].mxu0
      %5045 = vmatprep.mubr.bf16.mxu0 0
      %5046 = vmatmul.mubr.bf16.gmra.mrb[0].mxu0 %v4902
      %v5047 = vpop.f32.mrb[0].mxu0
      %v5048 = vadd.f32 0.0, %v5047
      %v5049 = vpop.f32.mrb[0].mxu0
      %v5050 = vpop.f32.mrb[0].mxu0
      %v5051 = vadd.f32 0.0, %v5050
      %v5052 = vpop.f32.mrb[0].mxu0
      %5053 = vmatprep.mubr.bf16.mxu0 0
      %5054 = vmatmul.mubr.bf16.gmra.mrb[0].mxu0 %v4905
      %v5055 = vpop.f32.mrb[0].mxu0
      %v5056 = vadd.f32 0.0, %v5055
      %v5057 = vpop.f32.mrb[0].mxu0
      %v5058 = vpop.f32.mrb[0].mxu0
      %v5059 = vadd.f32 0.0, %v5058
      %v5060 = vpop.f32.mrb[0].mxu0
      %5061 = vmatprep.mubr.bf16.mxu0 0
      %5062 = vmatmul.mubr.bf16.gmra.mrb[0].mxu0 %v4908
      %v5063 = vpop.f32.mrb[0].mxu0
      %v5064 = vadd.f32 0.0, %v5063
      %v5065 = vpop.f32.mrb[0].mxu0
      %v5066 = vpop.f32.mrb[0].mxu0
      %v5067 = vadd.f32 0.0, %v5066
      %v5068 = vpop.f32.mrb[0].mxu0
      %5069 = vmatprep.mubr.bf16.mxu0 0
      %5070 = vmatmul.mubr.bf16.gmra.mrb[0].mxu0 %v4911
      %v5071 = vpop.f32.mrb[0].mxu0
      %v5072 = vadd.f32 0.0, %v5071
      %v5073 = vpop.f32.mrb[0].mxu0
      %v5074 = vpop.f32.mrb[0].mxu0
      %v5075 = vadd.f32 0.0, %v5074
      %v5076 = vpop.f32.mrb[0].mxu0
      %5077 = vmatprep.mubr.bf16.mxu0 0
      %5078 = vmatmul.mubr.bf16.gmra.mrb[0].mxu0 %v4914
      %v5079 = vpop.f32.mrb[0].mxu0
      %v5080 = vadd.f32 0.0, %v5079
      %v5081 = vpop.f32.mrb[0].mxu0
      %v5082 = vpop.f32.mrb[0].mxu0
      %v5083 = vadd.f32 0.0, %v5082
      %v5084 = vpop.f32.mrb[0].mxu0
      %5085 = vmatprep.mubr.bf16.mxu0 0
      %5086 = vmatmul.mubr.bf16.gmra.mrb[0].mxu0 %v4917
      %v5087 = vpop.f32.mrb[0].mxu0
      %v5088 = vadd.f32 0.0, %v5087
      %v5089 = vpop.f32.mrb[0].mxu0
      %v5090 = vpop.f32.mrb[0].mxu0
      %v5091 = vadd.f32 0.0, %v5090
      %v5092 = vpop.f32.mrb[0].mxu0
      %5093 = vmatprep.mubr.bf16.mxu0 0
      %5094 = vmatmul.mubr.bf16.gmra.mrb[0].mxu0 %v4920
      %v5095 = vpop.f32.mrb[0].mxu0
      %v5096 = vadd.f32 0.0, %v5095
      %v5097 = vpop.f32.mrb[0].mxu0
      %v5098 = vpop.f32.mrb[0].mxu0
      %v5099 = vadd.f32 0.0, %v5098
      %v5100 = vpop.f32.mrb[0].mxu0
      %5101 = vdwg.mxu0
      %v5102 = vadd.f32 %v4699, %v4960
      %v5103 = vadd.f32 %v4700, %v4963
      %v5104 = vadd.f32 %v4701, %v4968
      %v5105 = vadd.f32 %v4702, %v4971
      %v5106 = vadd.f32 %v4703, %v4976
      %v5107 = vadd.f32 %v4704, %v4979
      %v5108 = vadd.f32 %v4705, %v4984
      %v5109 = vadd.f32 %v4706, %v4987
      %v5110 = vadd.f32 %v4707, %v4992
      %v5111 = vadd.f32 %v4708, %v4995
      %v5112 = vadd.f32 %v4709, %v5000
      %v5113 = vadd.f32 %v4710, %v5003
      %v5114 = vadd.f32 %v4711, %v5008
      %v5115 = vadd.f32 %v4712, %v5011
      %v5116 = vadd.f32 %v4713, %v5016
      %v5117 = vadd.f32 %v4714, %v5019
      %v5118 = vadd.f32 %v4715, %v5024
      %v5119 = vadd.f32 %v4716, %v5027
      %v5120 = vadd.f32 %v4717, %v5032
      %v5121 = vadd.f32 %v4718, %v5035
      %v5122 = vadd.f32 %v4719, %v5040
      %v5123 = vadd.f32 %v4720, %v5043
      %v5124 = vadd.f32 %v4721, %v5048
      %v5125 = vadd.f32 %v4722, %v5051
      %v5126 = vadd.f32 %v4723, %v5056
      %v5127 = vadd.f32 %v4724, %v5059
      %v5128 = vadd.f32 %v4725, %v5064
      %v5129 = vadd.f32 %v4726, %v5067
      %v5130 = vadd.f32 %v4727, %v5072
      %v5131 = vadd.f32 %v4728, %v5075
      %v5132 = vadd.f32 %v4729, %v5080
      %v5133 = vadd.f32 %v4730, %v5083
      %v5134 = vadd.f32 %v4731, %v5088
      %v5135 = vadd.f32 %v4732, %v5091
      %v5136 = vadd.f32 %v4733, %v5096
      %v5137 = vadd.f32 %v4734, %v5099
      %5138 = vst.msk [vmem:[#allocation2] sm:$0xff] %vm195, %v5102
      %5139 = vst.msk [vmem:[#allocation2 + $0x8] sm:$0xff] %vm195, %v5103
      %5140 = vst.msk [vmem:[#allocation2 + $0x10] sm:$0xff] %vm195, %v5104
      %5141 = vst.msk [vmem:[#allocation2 + $0x18] sm:$0xff] %vm195, %v5105
      %5142 = vst.msk [vmem:[#allocation2 + $0x20] sm:$0xff] %vm195, %v5106
      %5143 = vst.msk [vmem:[#allocation2 + $0x28] sm:$0xff] %vm195, %v5107
      %5144 = vst.msk [vmem:[#allocation2 + $0x30] sm:$0xff] %vm195, %v5108
      %5145 = vst.msk [vmem:[#allocation2 + $0x38] sm:$0xff] %vm195, %v5109
      %5146 = vst.msk [vmem:[#allocation2 + $0x40] sm:$0xff] %vm195, %v5110
      %5147 = vst.msk [vmem:[#allocation2 + $0x48] sm:$0xff] %vm195, %v5111
      %5148 = vst.msk [vmem:[#allocation2 + $0x50] sm:$0xff] %vm195, %v5112
      %5149 = vst.msk [vmem:[#allocation2 + $0x58] sm:$0xff] %vm195, %v5113
      %5150 = vst.msk [vmem:[#allocation2 + $0x60] sm:$0xff] %vm195, %v5114
      %5151 = vst.msk [vmem:[#allocation2 + $0x68] sm:$0xff] %vm195, %v5115
      %5152 = vst.msk [vmem:[#allocation2 + $0x70] sm:$0xff] %vm195, %v5116
      %5153 = vst.msk [vmem:[#allocation2 + $0x78] sm:$0xff] %vm195, %v5117
      %5154 = vst.msk [vmem:[#allocation2 + $0x80] sm:$0xff] %vm195, %v5118
      %5155 = vst.msk [vmem:[#allocation2 + $0x88] sm:$0xff] %vm195, %v5119
      %5156 = vst.msk [vmem:[#allocation2 + $0x90] sm:$0xff] %vm195, %v5120
      %5157 = vst.msk [vmem:[#allocation2 + $0x98] sm:$0xff] %vm195, %v5121
      %5158 = vst.msk [vmem:[#allocation2 + $0xa0] sm:$0xff] %vm195, %v5122
      %5159 = vst.msk [vmem:[#allocation2 + $0xa8] sm:$0xff] %vm195, %v5123
      %5160 = vst.msk [vmem:[#allocation2 + $0xb0] sm:$0xff] %vm195, %v5124
      %5161 = vst.msk [vmem:[#allocation2 + $0xb8] sm:$0xff] %vm195, %v5125
      %5162 = vst.msk [vmem:[#allocation2 + $0xc0] sm:$0xff] %vm195, %v5126
      %5163 = vst.msk [vmem:[#allocation2 + $0xc8] sm:$0xff] %vm195, %v5127
      %5164 = vst.msk [vmem:[#allocation2 + $0xd0] sm:$0xff] %vm195, %v5128
      %5165 = vst.msk [vmem:[#allocation2 + $0xd8] sm:$0xff] %vm195, %v5129
      %5166 = vst.msk [vmem:[#allocation2 + $0xe0] sm:$0xff] %vm195, %v5130
      %5167 = vst.msk [vmem:[#allocation2 + $0xe8] sm:$0xff] %vm195, %v5131
      %5168 = vst.msk [vmem:[#allocation2 + $0xf0] sm:$0xff] %vm195, %v5132
      %5169 = vst.msk [vmem:[#allocation2 + $0xf8] sm:$0xff] %vm195, %v5133
      %5170 = vst.msk [vmem:[#allocation2 + $0x100] sm:$0xff] %vm195, %v5134
      %5171 = vst.msk [vmem:[#allocation2 + $0x108] sm:$0xff] %vm195, %v5135
      %5172 = vst.msk [vmem:[#allocation2 + $0x110] sm:$0xff] %vm195, %v5136
      %5173 = vst.msk [vmem:[#allocation2 + $0x118] sm:$0xff] %vm195, %v5137
      %v5174 = vld [vmem:[#allocation2] sm:$0xff]
      %v5175 = vld [vmem:[#allocation2 + $0x8] sm:$0xff]
      %v5176 = vld [vmem:[#allocation2 + $0x10] sm:$0xff]
      %v5177 = vld [vmem:[#allocation2 + $0x18] sm:$0xff]
      %v5178 = vld [vmem:[#allocation2 + $0x20] sm:$0xff]
      %v5179 = vld [vmem:[#allocation2 + $0x28] sm:$0xff]
      %v5180 = vld [vmem:[#allocation2 + $0x30] sm:$0xff]
      %v5181 = vld [vmem:[#allocation2 + $0x38] sm:$0xff]
      %v5182 = vld [vmem:[#allocation2 + $0x40] sm:$0xff]
      %v5183 = vld [vmem:[#allocation2 + $0x48] sm:$0xff]
      %v5184 = vld [vmem:[#allocation2 + $0x50] sm:$0xff]
      %v5185 = vld [vmem:[#allocation2 + $0x58] sm:$0xff]
      %v5186 = vld [vmem:[#allocation2 + $0x60] sm:$0xff]
      %v5187 = vld [vmem:[#allocation2 + $0x68] sm:$0xff]
      %v5188 = vld [vmem:[#allocation2 + $0x70] sm:$0xff]
      %v5189 = vld [vmem:[#allocation2 + $0x78] sm:$0xff]
      %v5190 = vld [vmem:[#allocation2 + $0x80] sm:$0xff]
      %v5191 = vld [vmem:[#allocation2 + $0x88] sm:$0xff]
      %v5192 = vld [vmem:[#allocation2 + $0x90] sm:$0xff]
      %v5193 = vld [vmem:[#allocation2 + $0x98] sm:$0xff]
      %v5194 = vld [vmem:[#allocation2 + $0xa0] sm:$0xff]
      %v5195 = vld [vmem:[#allocation2 + $0xa8] sm:$0xff]
      %v5196 = vld [vmem:[#allocation2 + $0xb0] sm:$0xff]
      %v5197 = vld [vmem:[#allocation2 + $0xb8] sm:$0xff]
      %v5198 = vld [vmem:[#allocation2 + $0xc0] sm:$0xff]
      %v5199 = vld [vmem:[#allocation2 + $0xc8] sm:$0xff]
      %v5200 = vld [vmem:[#allocation2 + $0xd0] sm:$0xff]
      %v5201 = vld [vmem:[#allocation2 + $0xd8] sm:$0xff]
      %v5202 = vld [vmem:[#allocation2 + $0xe0] sm:$0xff]
      %v5203 = vld [vmem:[#allocation2 + $0xe8] sm:$0xff]
      %v5204 = vld [vmem:[#allocation2 + $0xf0] sm:$0xff]
      %v5205 = vld [vmem:[#allocation2 + $0xf8] sm:$0xff]
      %v5206 = vld [vmem:[#allocation2 + $0x100] sm:$0xff]
      %v5207 = vld [vmem:[#allocation2 + $0x108] sm:$0xff]
      %v5208 = vld [vmem:[#allocation2 + $0x110] sm:$0xff]
      %v5209 = vld [vmem:[#allocation2 + $0x118] sm:$0xff]
      %v5210 = vld [vmem:[%s2] sm:$0x1]
      %v5212 = vlaneseq
      %v5213 = vshrl.u32 %v5212, 7
      %v5214 = vsub.s32 0, %v5213
      %v5215 = vrot.slane %v5210, %v5214
      %v5217 = vadd.f32 %v5174, %v5215
      %v5218 = vadd.f32 %v5175, %v5215
      %v5219 = vadd.f32 %v5176, %v5215
      %v5220 = vadd.f32 %v5177, %v5215
      %v5221 = vadd.f32 %v5178, %v5215
      %v5222 = vadd.f32 %v5179, %v5215
      %v5223 = vadd.f32 %v5180, %v5215
      %v5224 = vadd.f32 %v5181, %v5215
      %v5225 = vadd.f32 %v5182, %v5215
      %v5226 = vadd.f32 %v5183, %v5215
      %v5227 = vadd.f32 %v5184, %v5215
      %v5228 = vadd.f32 %v5185, %v5215
      %v5229 = vadd.f32 %v5186, %v5215
      %v5230 = vadd.f32 %v5187, %v5215
      %v5231 = vadd.f32 %v5188, %v5215
      %v5232 = vadd.f32 %v5189, %v5215
      %v5233 = vadd.f32 %v5190, %v5215
      %v5234 = vadd.f32 %v5191, %v5215
      %v5235 = vadd.f32 %v5192, %v5215
      %v5236 = vadd.f32 %v5193, %v5215
      %v5237 = vadd.f32 %v5194, %v5215
      %v5238 = vadd.f32 %v5195, %v5215
      %v5239 = vadd.f32 %v5196, %v5215
      %v5240 = vadd.f32 %v5197, %v5215
      %v5241 = vadd.f32 %v5198, %v5215
      %v5242 = vadd.f32 %v5199, %v5215
      %v5243 = vadd.f32 %v5200, %v5215
      %v5244 = vadd.f32 %v5201, %v5215
      %v5245 = vadd.f32 %v5202, %v5215
      %v5246 = vadd.f32 %v5203, %v5215
      %v5247 = vadd.f32 %v5204, %v5215
      %v5248 = vadd.f32 %v5205, %v5215
      %v5249 = vadd.f32 %v5206, %v5215
      %v5250 = vadd.f32 %v5207, %v5215
      %v5251 = vadd.f32 %v5208, %v5215
      %v5252 = vadd.f32 %v5209, %v5215
      %vm5253 = vcmp.ge.f32.partialorder %v5217, 0.0
      %vm5254 = vcmp.ge.f32.partialorder %v5218, 0.0
      %vm5255 = vcmp.ge.f32.partialorder %v5219, 0.0
      %vm5256 = vcmp.ge.f32.partialorder %v5220, 0.0
      %vm5257 = vcmp.ge.f32.partialorder %v5221, 0.0
      %vm5258 = vcmp.ge.f32.partialorder %v5222, 0.0
      %vm5259 = vcmp.ge.f32.partialorder %v5223, 0.0
      %vm5260 = vcmp.ge.f32.partialorder %v5224, 0.0
      %vm5261 = vcmp.ge.f32.partialorder %v5225, 0.0
      %vm5262 = vcmp.ge.f32.partialorder %v5226, 0.0
      %vm5263 = vcmp.ge.f32.partialorder %v5227, 0.0
      %vm5264 = vcmp.ge.f32.partialorder %v5228, 0.0
      %vm5265 = vcmp.ge.f32.partialorder %v5229, 0.0
      %vm5266 = vcmp.ge.f32.partialorder %v5230, 0.0
      %vm5267 = vcmp.ge.f32.partialorder %v5231, 0.0
      %vm5268 = vcmp.ge.f32.partialorder %v5232, 0.0
      %vm5269 = vcmp.ge.f32.partialorder %v5233, 0.0
      %vm5270 = vcmp.ge.f32.partialorder %v5234, 0.0
      %vm5271 = vcmp.ge.f32.partialorder %v5235, 0.0
      %vm5272 = vcmp.ge.f32.partialorder %v5236, 0.0
      %vm5273 = vcmp.ge.f32.partialorder %v5237, 0.0
      %vm5274 = vcmp.ge.f32.partialorder %v5238, 0.0
      %vm5275 = vcmp.ge.f32.partialorder %v5239, 0.0
      %vm5276 = vcmp.ge.f32.partialorder %v5240, 0.0
      %vm5277 = vcmp.ge.f32.partialorder %v5241, 0.0
      %vm5278 = vcmp.ge.f32.partialorder %v5242, 0.0
      %vm5279 = vcmp.ge.f32.partialorder %v5243, 0.0
      %vm5280 = vcmp.ge.f32.partialorder %v5244, 0.0
      %vm5281 = vcmp.ge.f32.partialorder %v5245, 0.0
      %vm5282 = vcmp.ge.f32.partialorder %v5246, 0.0
      %vm5283 = vcmp.ge.f32.partialorder %v5247, 0.0
      %vm5284 = vcmp.ge.f32.partialorder %v5248, 0.0
      %vm5285 = vcmp.ge.f32.partialorder %v5249, 0.0
      %vm5286 = vcmp.ge.f32.partialorder %v5250, 0.0
      %vm5287 = vcmp.ge.f32.partialorder %v5251, 0.0
      %vm5288 = vcmp.ge.f32.partialorder %v5252, 0.0
      %v5289 = vmul.f32 %v5217, 0.1
      %v5290 = vmul.f32 %v5218, 0.1
      %v5291 = vmul.f32 %v5219, 0.1
      %v5292 = vmul.f32 %v5220, 0.1
      %v5293 = vmul.f32 %v5221, 0.1
      %v5294 = vmul.f32 %v5222, 0.1
      %v5295 = vmul.f32 %v5223, 0.1
      %v5296 = vmul.f32 %v5224, 0.1
      %v5297 = vmul.f32 %v5225, 0.1
      %v5298 = vmul.f32 %v5226, 0.1
      %v5299 = vmul.f32 %v5227, 0.1
      %v5300 = vmul.f32 %v5228, 0.1
      %v5301 = vmul.f32 %v5229, 0.1
      %v5302 = vmul.f32 %v5230, 0.1
      %v5303 = vmul.f32 %v5231, 0.1
      %v5304 = vmul.f32 %v5232, 0.1
      %v5305 = vmul.f32 %v5233, 0.1
      %v5306 = vmul.f32 %v5234, 0.1
      %v5307 = vmul.f32 %v5235, 0.1
      %v5308 = vmul.f32 %v5236, 0.1
      %v5309 = vmul.f32 %v5237, 0.1
      %v5310 = vmul.f32 %v5238, 0.1
      %v5311 = vmul.f32 %v5239, 0.1
      %v5312 = vmul.f32 %v5240, 0.1
      %v5313 = vmul.f32 %v5241, 0.1
      %v5314 = vmul.f32 %v5242, 0.1
      %v5315 = vmul.f32 %v5243, 0.1
      %v5316 = vmul.f32 %v5244, 0.1
      %v5317 = vmul.f32 %v5245, 0.1
      %v5318 = vmul.f32 %v5246, 0.1
      %v5319 = vmul.f32 %v5247, 0.1
      %v5320 = vmul.f32 %v5248, 0.1
      %v5321 = vmul.f32 %v5249, 0.1
      %v5322 = vmul.f32 %v5250, 0.1
      %v5323 = vmul.f32 %v5251, 0.1
      %v5324 = vmul.f32 %v5252, 0.1
      %v5325 = vsel %vm5253, %v5217, %v5289
      %v5326 = vsel %vm5254, %v5218, %v5290
      %v5327 = vsel %vm5255, %v5219, %v5291
      %v5328 = vsel %vm5256, %v5220, %v5292
      %v5329 = vsel %vm5257, %v5221, %v5293
      %v5330 = vsel %vm5258, %v5222, %v5294
      %v5331 = vsel %vm5259, %v5223, %v5295
      %v5332 = vsel %vm5260, %v5224, %v5296
      %v5333 = vsel %vm5261, %v5225, %v5297
      %v5334 = vsel %vm5262, %v5226, %v5298
      %v5335 = vsel %vm5263, %v5227, %v5299
      %v5336 = vsel %vm5264, %v5228, %v5300
      %v5337 = vsel %vm5265, %v5229, %v5301
      %v5338 = vsel %vm5266, %v5230, %v5302
      %v5339 = vsel %vm5267, %v5231, %v5303
      %v5340 = vsel %vm5268, %v5232, %v5304
      %v5341 = vsel %vm5269, %v5233, %v5305
      %v5342 = vsel %vm5270, %v5234, %v5306
      %v5343 = vsel %vm5271, %v5235, %v5307
      %v5344 = vsel %vm5272, %v5236, %v5308
      %v5345 = vsel %vm5273, %v5237, %v5309
      %v5346 = vsel %vm5274, %v5238, %v5310
      %v5347 = vsel %vm5275, %v5239, %v5311
      %v5348 = vsel %vm5276, %v5240, %v5312
      %v5349 = vsel %vm5277, %v5241, %v5313
      %v5350 = vsel %vm5278, %v5242, %v5314
      %v5351 = vsel %vm5279, %v5243, %v5315
      %v5352 = vsel %vm5280, %v5244, %v5316
      %v5353 = vsel %vm5281, %v5245, %v5317
      %v5354 = vsel %vm5282, %v5246, %v5318
      %v5355 = vsel %vm5283, %v5247, %v5319
      %v5356 = vsel %vm5284, %v5248, %v5320
      %v5357 = vsel %vm5285, %v5249, %v5321
      %v5358 = vsel %vm5286, %v5250, %v5322
      %v5359 = vsel %vm5287, %v5251, %v5323
      %v5360 = vsel %vm5288, %v5252, %v5324
      %v5361 = vpack.c.bf16 %v5326, %v5325
      %v5362 = vpack.c.bf16 %v5328, %v5327
      %v5363 = vpack.c.bf16 %v5330, %v5329
      %v5364 = vpack.c.bf16 %v5332, %v5331
      %v5365 = vpack.c.bf16 %v5334, %v5333
      %v5366 = vpack.c.bf16 %v5336, %v5335
      %v5367 = vpack.c.bf16 %v5338, %v5337
      %v5368 = vpack.c.bf16 %v5340, %v5339
      %v5369 = vpack.c.bf16 %v5342, %v5341
      %v5370 = vpack.c.bf16 %v5344, %v5343
      %v5371 = vpack.c.bf16 %v5346, %v5345
      %v5372 = vpack.c.bf16 %v5348, %v5347
      %v5373 = vpack.c.bf16 %v5350, %v5349
      %v5374 = vpack.c.bf16 %v5352, %v5351
      %v5375 = vpack.c.bf16 %v5354, %v5353
      %v5376 = vpack.c.bf16 %v5356, %v5355
      %v5377 = vpack.c.bf16 %v5358, %v5357
      %v5378 = vpack.c.bf16 %v5360, %v5359
      %v5397 = vunpack.c.l.b16 %v5361
      %v5398 = vunpack.c.h.b16 %v5361
      %v5399 = vunpack.c.l.b16 %v5362
      %v5400 = vunpack.c.h.b16 %v5362
      %v5401 = vunpack.c.l.b16 %v5363
      %v5402 = vunpack.c.h.b16 %v5363
      %v5403 = vunpack.c.l.b16 %v5364
      %v5404 = vunpack.c.h.b16 %v5364
      %v5405 = vunpack.c.l.b16 %v5365
      %v5406 = vunpack.c.h.b16 %v5365
      %v5407 = vunpack.c.l.b16 %v5366
      %v5408 = vunpack.c.h.b16 %v5366
      %v5409 = vunpack.c.l.b16 %v5367
      %v5410 = vunpack.c.h.b16 %v5367
      %v5411 = vunpack.c.l.b16 %v5368
      %v5412 = vunpack.c.h.b16 %v5368
      %v5413 = vunpack.c.l.b16 %v5369
      %v5414 = vunpack.c.h.b16 %v5369
      %v5415 = vunpack.c.l.b16 %v5370
      %v5416 = vunpack.c.h.b16 %v5370
      %v5417 = vunpack.c.l.b16 %v5371
      %v5418 = vunpack.c.h.b16 %v5371
      %v5419 = vunpack.c.l.b16 %v5372
      %v5420 = vunpack.c.h.b16 %v5372
      %v5421 = vunpack.c.l.b16 %v5373
      %v5422 = vunpack.c.h.b16 %v5373
      %v5423 = vunpack.c.l.b16 %v5374
      %v5424 = vunpack.c.h.b16 %v5374
      %v5425 = vunpack.c.l.b16 %v5375
      %v5426 = vunpack.c.h.b16 %v5375
      %v5427 = vunpack.c.l.b16 %v5376
      %v5428 = vunpack.c.h.b16 %v5376
      %v5429 = vunpack.c.l.b16 %v5377
      %v5430 = vunpack.c.h.b16 %v5377
      %v5431 = vunpack.c.l.b16 %v5378
      %v5432 = vunpack.c.h.b16 %v5378
      %v5433 = vpack.c.b16 %v5397, %v5397
      %v5434 = vpack.c.b16 %v5398, %v5398
      %v5435 = vpack.c.b16 %v5399, %v5399
      %v5436 = vpack.c.b16 %v5400, %v5400
      %v5437 = vpack.c.b16 %v5401, %v5401
      %v5438 = vpack.c.b16 %v5402, %v5402
      %v5439 = vpack.c.b16 %v5403, %v5403
      %v5440 = vpack.c.b16 %v5404, %v5404
      %v5441 = vpack.c.b16 %v5405, %v5405
      %v5442 = vpack.c.b16 %v5406, %v5406
      %v5443 = vpack.c.b16 %v5407, %v5407
      %v5444 = vpack.c.b16 %v5408, %v5408
      %v5445 = vpack.c.b16 %v5409, %v5409
      %v5446 = vpack.c.b16 %v5410, %v5410
      %v5447 = vpack.c.b16 %v5411, %v5411
      %v5448 = vpack.c.b16 %v5412, %v5412
      %v5449 = vpack.c.b16 %v5413, %v5413
      %v5450 = vpack.c.b16 %v5414, %v5414
      %v5451 = vpack.c.b16 %v5415, %v5415
      %v5452 = vpack.c.b16 %v5416, %v5416
      %v5453 = vpack.c.b16 %v5417, %v5417
      %v5454 = vpack.c.b16 %v5418, %v5418
      %v5455 = vpack.c.b16 %v5419, %v5419
      %v5456 = vpack.c.b16 %v5420, %v5420
      %v5457 = vpack.c.b16 %v5421, %v5421
      %v5458 = vpack.c.b16 %v5422, %v5422
      %v5459 = vpack.c.b16 %v5423, %v5423
      %v5460 = vpack.c.b16 %v5424, %v5424
      %v5461 = vpack.c.b16 %v5425, %v5425
      %v5462 = vpack.c.b16 %v5426, %v5426
      %v5463 = vpack.c.b16 %v5427, %v5427
      %v5464 = vpack.c.b16 %v5428, %v5428
      %v5465 = vpack.c.b16 %v5429, %v5429
      %v5466 = vpack.c.b16 %v5430, %v5430
      %v5467 = vpack.c.b16 %v5431, %v5431
      %v5468 = vpack.c.b16 %v5432, %v5432
      %vm5505 = vcmask 257024
      %5506 = vst.msk [vmem:[%s192] sm:$0xf] %vm5505, %v5433
      %5507 = vst.msk [vmem:[%s192 + $0x4] sm:$0xf] %vm5505, %v5434
      %5508 = vst.msk [vmem:[%s192 + $0x8] sm:$0xf] %vm5505, %v5435
      %5509 = vst.msk [vmem:[%s192 + $0xc] sm:$0xf] %vm5505, %v5436
      %5510 = vst.msk [vmem:[%s192 + $0x10] sm:$0xf] %vm5505, %v5437
      %5511 = vst.msk [vmem:[%s192 + $0x14] sm:$0xf] %vm5505, %v5438
      %5512 = vst.msk [vmem:[%s192 + $0x18] sm:$0xf] %vm5505, %v5439
      %5513 = vst.msk [vmem:[%s192 + $0x1c] sm:$0xf] %vm5505, %v5440
      %5514 = vst.msk [vmem:[%s192 + $0x20] sm:$0xf] %vm5505, %v5441
      %5515 = vst.msk [vmem:[%s192 + $0x24] sm:$0xf] %vm5505, %v5442
      %5516 = vst.msk [vmem:[%s192 + $0x28] sm:$0xf] %vm5505, %v5443
      %5517 = vst.msk [vmem:[%s192 + $0x2c] sm:$0xf] %vm5505, %v5444
      %5518 = vst.msk [vmem:[%s192 + $0x30] sm:$0xf] %vm5505, %v5445
      %5519 = vst.msk [vmem:[%s192 + $0x34] sm:$0xf] %vm5505, %v5446
      %5520 = vst.msk [vmem:[%s192 + $0x38] sm:$0xf] %vm5505, %v5447
      %5521 = vst.msk [vmem:[%s192 + $0x3c] sm:$0xf] %vm5505, %v5448
      %5522 = vst.msk [vmem:[%s192 + $0x40] sm:$0xf] %vm5505, %v5449
      %5523 = vst.msk [vmem:[%s192 + $0x44] sm:$0xf] %vm5505, %v5450
      %5524 = vst.msk [vmem:[%s192 + $0x48] sm:$0xf] %vm5505, %v5451
      %5525 = vst.msk [vmem:[%s192 + $0x4c] sm:$0xf] %vm5505, %v5452
      %5526 = vst.msk [vmem:[%s192 + $0x50] sm:$0xf] %vm5505, %v5453
      %5527 = vst.msk [vmem:[%s192 + $0x54] sm:$0xf] %vm5505, %v5454
      %5528 = vst.msk [vmem:[%s192 + $0x58] sm:$0xf] %vm5505, %v5455
      %5529 = vst.msk [vmem:[%s192 + $0x5c] sm:$0xf] %vm5505, %v5456
      %5530 = vst.msk [vmem:[%s192 + $0x60] sm:$0xf] %vm5505, %v5457
      %5531 = vst.msk [vmem:[%s192 + $0x64] sm:$0xf] %vm5505, %v5458
      %5532 = vst.msk [vmem:[%s192 + $0x68] sm:$0xf] %vm5505, %v5459
      %5533 = vst.msk [vmem:[%s192 + $0x6c] sm:$0xf] %vm5505, %v5460
      %5534 = vst.msk [vmem:[%s192 + $0x70] sm:$0xf] %vm5505, %v5461
      %5535 = vst.msk [vmem:[%s192 + $0x74] sm:$0xf] %vm5505, %v5462
      %5536 = vst.msk [vmem:[%s192 + $0x78] sm:$0xf] %vm5505, %v5463
      %5537 = vst.msk [vmem:[%s192 + $0x7c] sm:$0xf] %vm5505, %v5464
      %5538 = vst.msk [vmem:[%s192 + $0x80] sm:$0xf] %vm5505, %v5465
      %5539 = vst.msk [vmem:[%s192 + $0x84] sm:$0xf] %vm5505, %v5466
      %5540 = vst.msk [vmem:[%s192 + $0x88] sm:$0xf] %vm5505, %v5467
      %5541 = vst.msk [vmem:[%s192 + $0x8c] sm:$0xf] %vm5505, %v5468
      %s5542 = smul.u32 36, %s19
      %p5543 = scmp.lt.s32.totalorder %s18, 1
      %s5544 = scalar_select %p5543, %s18, 1
      %p5545 = scmp.lt.s32.totalorder %s5542, 35
      %s5546 = scalar_select %p5545, %s5542, 35
      %s5547 = smul.addr %s5544, 36
      %s5548 = sadd.s32 %s5546, %s5547
      %s5549 = smul.addr %s5548, 4
      %s5550 = scalar_lea.vmem %s3, %s5549
      // Predicated region
      $region33: #{cnn_block_forward.1} parent=31 // pred_check
        %p5551 = pneg %p114
      $region34: #{cnn_block_forward.1} parent=31 // pred_check_branch
        %5553 = sbr.rel (%p5551) target = $region36
      $region35: #{cnn_block_forward.1} parent=31 // pred_region
        %s5554 = smul.u32 36, %s19
      $region36: #{cnn_block_forward.1} parent=31 // pred_fallthru
        _
    $region32: #{cnn_block_forward.1} parent=5 // pred_fallthru
      _
    %p5555 = scmp.le.s32.totalorder 2, %s9
    // Predicated region
    $region37: #{cnn_block_forward.1} parent=5 // pred_check
      %p5556 = pneg %p5555
    $region38: #{cnn_block_forward.1} parent=5 // pred_check_branch
      %5558 = sbr.rel (%p5556) target = $region40
    $region39: #{cnn_block_forward.1} parent=5 // pred_region
      %s5559 = ssub.s32 %s9, 2
      // Predicated region
      $region41: #{cnn_block_forward.1} parent=39 // pred_check
        %p5560 = pneg %p120
      $region42: #{cnn_block_forward.1} parent=39 // pred_check_branch
        %5562 = sbr.rel (%p5560) target = $region44
      $region43: #{cnn_block_forward.1} parent=39 // pred_region
        %s5563 = smul.u32 36, %s21
        %p5564 = scmp.lt.s32.totalorder %s20, 1
        %s5565 = scalar_select %p5564, %s20, 1
        %p5566 = scmp.lt.s32.totalorder %s5563, 35
        %s5567 = scalar_select %p5566, %s5563, 35
        %s5568 = smul.addr %s5565, 36
        %s5569 = sadd.s32 %s5567, %s5568
        %s5570 = smul.addr %s5569, 4
        %s5571 = scalar_lea.vmem %s3, %s5570
      $region44: #{cnn_block_forward.1} parent=39 // pred_fallthru
        _
    $region40: #{cnn_block_forward.1} parent=5 // pred_fallthru
      _
  $region6: #{cnn_block_forward.1} parent=0 // loop_footer
    %s13 = sadd.s32 1, %s9
  $region7: #{cnn_block_forward.1} parent=0 // loop_footer_branch
    %8 = sbr.rel target = $region3
  $region8: #{cnn_block_forward.1} parent=0 // loop_exit
    _

</llo_original>
